<compile_context>
chip_gen: v5e
topology: v5e:2x2
jax: 0.10.0
libtpu: 0.0.40
codegen_flags: <defaults>
</compile_context>

<pallas_src>
import math
from functools import partial

import jax
import jax.numpy as jnp
import numpy as np
from jax.experimental import pallas as pl
from jax.experimental.pallas import tpu as pltpu


_COMPUTE_DTYPE = jnp.bfloat16   # MXU operand dtype; accumulation stays f32

# Rows of the packed global small-vector table (7, H)
(_GV_CONV_B, _GV_MLP1_LB, _GV_MLP1_GW, _GV_MLP1_GB,
 _GV_MLP2_LB, _GV_MLP2_GW, _GV_MLP2_GB) = range(7)

# Rows of the packed per-layer small-vector table (L, 10, H)
(_LV_QB, _LV_KB, _LV_VB, _LV_OUTB, _LV_FF1B, _LV_FF2B,
 _LV_LN1W, _LV_LN1B, _LV_LN2W, _LV_LN2B) = range(10)


# -----------------------------------------------------------------------------
# In-kernel helpers (traced inside the Pallas kernel body)
# -----------------------------------------------------------------------------
def _layernorm(y, gamma, beta, eps=1e-5):
    u = jnp.mean(y, axis=-1, keepdims=True)
    s = jnp.mean((y - u) ** 2, axis=-1, keepdims=True)
    return gamma * ((y - u) * jax.lax.rsqrt(s + eps)) + beta


def _bdot(a, b):
    # bf16 operands (weights are pre-cast in the wrapper), f32 accumulation.
    return jnp.dot(a.astype(_COMPUTE_DTYPE), b, preferred_element_type=jnp.float32)


def _mlp(y, lw, lb, gw, gb):
    h = _bdot(y, lw) + lb
    h = _layernorm(h, gw, gb)
    return jnp.maximum(h, 0.0)


# -----------------------------------------------------------------------------
# Fused Pallas kernel: b_tile batch elements per grid step, batch-major rows
# -----------------------------------------------------------------------------
def temperal_encoder_kernel(
    xcol_ref, conv_w_ref, mlp1_lw_ref, qkv_w_ref, out_w_ref,
    ff1_w_ref, ff2_w_ref, lvec_ref, gvec_ref,
    wih_ref, whh_ref, lstm_b_ref, mlp2_lw_ref,
    out_ref,
    *, num_heads, num_layers, seq_len, hidden, b_tile,
):
    H = hidden
    T = seq_len
    B = b_tile
    M = B * T                         # rows per grid step, batch-major: r = b*T + t
    hd = H // num_heads

    gv = gvec_ref[...]                                                  # (7, H) f32

    # ---- Conv1d(2 -> H, k=3, stride=1, pad=1) as one (M, 8) @ (8, H) matmul ----
    x_dense = _bdot(xcol_ref[0], conv_w_ref[...]) + gv[_GV_CONV_B:_GV_CONV_B + 1]

    # ---- mlp1 + residual ----
    x_dense = _mlp(x_dense, mlp1_lw_ref[...],
                   gv[_GV_MLP1_LB:_GV_MLP1_LB + 1],
                   gv[_GV_MLP1_GW:_GV_MLP1_GW + 1],
                   gv[_GV_MLP1_GB:_GV_MLP1_GB + 1]) + x_dense           # (M, H)

    # ---- TransformerEncoder (post-norm, relu FF), residual around the stack ----
    # Attention is batched per batch element on (B, T, T) -- no mask, no redundant
    # exp work over padded/off-diagonal entries.  The 1/sqrt(hd) scale is already
    # folded into the Q projection (wrapper-side).
    x_base = x_dense
    x_cur = x_base
    for l in range(num_layers):
        lv = lvec_ref[l]                                                # (10, H) f32
        xc = x_cur.astype(_COMPUTE_DTYPE)                               # (M, H)
        attn = jnp.zeros((M, H), jnp.float32)
        for h in range(num_heads):
            sl = slice(h * hd, (h + 1) * hd)
            q = jnp.dot(xc, qkv_w_ref[l, 0, h],
                        preferred_element_type=jnp.float32) + lv[_LV_QB:_LV_QB + 1, sl]
            k = jnp.dot(xc, qkv_w_ref[l, 1, h],
                        preferred_element_type=jnp.float32) + lv[_LV_KB:_LV_KB + 1, sl]
            v = jnp.dot(xc, qkv_w_ref[l, 2, h],
                        preferred_element_type=jnp.float32) + lv[_LV_VB:_LV_VB + 1, sl]
            q3 = q.astype(_COMPUTE_DTYPE).reshape(B, T, hd)
            k3 = k.astype(_COMPUTE_DTYPE).reshape(B, T, hd)
            v3 = v.astype(_COMPUTE_DTYPE).reshape(B, T, hd)
            sc = jnp.einsum('bqd,bkd->bqk', q3, k3,
                            preferred_element_type=jnp.float32)          # (B, T, T)
            sc = sc - jnp.max(sc, axis=-1, keepdims=True)
            p = jnp.exp(sc)
            p = p * pl.reciprocal(jnp.sum(p, axis=-1, keepdims=True), approx=True)
            o3 = jnp.einsum('bqk,bkd->bqd', p.astype(_COMPUTE_DTYPE), v3,
                            preferred_element_type=jnp.float32)          # (B, T, hd)
            # accumulate through per-head rows of out_w (no lane concat)
            attn = attn + jnp.dot(o3.reshape(M, hd).astype(_COMPUTE_DTYPE),
                                  out_w_ref[l, h],
                                  preferred_element_type=jnp.float32)    # (M, H)
        attn = attn + lv[_LV_OUTB:_LV_OUTB + 1]
        x1 = _layernorm(x_cur + attn,
                        lv[_LV_LN1W:_LV_LN1W + 1], lv[_LV_LN1B:_LV_LN1B + 1])
        ff = jnp.maximum(_bdot(x1, ff1_w_ref[l]) + lv[_LV_FF1B:_LV_FF1B + 1], 0.0)
        ff = _bdot(ff, ff2_w_ref[l]) + lv[_LV_FF2B:_LV_FF2B + 1]
        x_cur = _layernorm(x1 + ff,
                           lv[_LV_LN2W:_LV_LN2W + 1], lv[_LV_LN2B:_LV_LN2B + 1])
    x_in = x_cur + x_base                                               # (M, H)

    # ---- single-layer LSTM (gate order i, f, o, g after wrapper reorder) ----
    # One transpose to time-major (outside the serial chain), then the hoisted
    # input projection as one big matmul; the recurrence is batched over B.
    x_tm = jnp.swapaxes(x_in.reshape(B, T, H), 0, 1).reshape(M, H)      # r = t*B + b
    x_gates = _bdot(x_tm, wih_ref[...]) + lstm_b_ref[...]               # (M, 4H)
    whh = whh_ref[...]                                                  # bf16 (H, 4H)
    h_t = jnp.zeros((B, H), jnp.float32)
    c_t = jnp.zeros((B, H), jnp.float32)
    for t in range(T):
        g = x_gates[t * B:(t + 1) * B, :] + jnp.dot(
            h_t.astype(_COMPUTE_DTYPE), whh, preferred_element_type=jnp.float32)
        sig = jax.nn.sigmoid(g[:, 0:3 * H])         # i | f | o in one contiguous slab
        i_g = sig[:, 0:H]
        f_g = sig[:, H:2 * H]
        o_g = sig[:, 2 * H:3 * H]
        g_g = jnp.tanh(g[:, 3 * H:4 * H])
        c_t = f_g * c_t + i_g * g_g
        h_t = o_g * jnp.tanh(c_t)

    x_state = h_t                                                       # (B, H)
    x_enc = _mlp(x_state, mlp2_lw_ref[...],
                 gv[_GV_MLP2_LB:_GV_MLP2_LB + 1],
                 gv[_GV_MLP2_GW:_GV_MLP2_GW + 1],
                 gv[_GV_MLP2_GB:_GV_MLP2_GB + 1]) + x_state

    # Lane-dense fused store: [x_enc | x_state | cn | zero-pad] -> (B, out_pad)
    pad = out_ref.shape[-1] - 3 * H
    parts = [x_enc, x_state, c_t]
    if pad > 0:
        parts.append(jnp.zeros((B, pad), jnp.float32))
    out_ref[0] = jnp.concatenate(parts, axis=-1)


# -----------------------------------------------------------------------------
# Wrapper: layout glue (im2col, batch tiling, weight repack/cast) in plain JAX
# -----------------------------------------------------------------------------
def temperal_encoder(x, params, *, num_heads, num_layers, b_tile=None):
    # x: (N, 2, T) — PyTorch Conv1d NCL layout
    N, _, T = x.shape
    H = params["conv_w"].shape[-1]
    hd = H // num_heads
    L = num_layers

    if b_tile is None:
        b_tile = max(1, min(128 // T, N))      # fill MXU sublanes (b_tile*T ~ 128)
        if N >= 2 and pl.cdiv(N, b_tile) < 2:
            b_tile = (N + 1) // 2              # >= 2 grid steps so both v7x TCs work
    M = b_tile * T

    # im2col for kernel-size-3, pad-1 conv: (N, T, 6), columns ordered (k, c);
    # pad the feature dim 6 -> 8 (matching zero rows are appended to conv_w).
    xt = jnp.transpose(x, (0, 2, 1))                                # (N, T, 2)
    xp = jnp.pad(xt, ((0, 0), (1, 1), (0, 0)))
    xcol = jnp.concatenate([xp[:, 0:T], xp[:, 1:T + 1], xp[:, 2:T + 2]], axis=-1)
    f_in = xcol.shape[-1]                                           # 6
    f_pad = 8
    xcol = jnp.pad(xcol, ((0, 0), (0, 0), (0, f_pad - f_in)))

    # Pad batch to a multiple of b_tile; rows within a block are batch-major
    # (row r = b*T + t) so the batched attention reshape is free.
    n_pad = pl.cdiv(N, b_tile) * b_tile
    nb = n_pad // b_tile
    xcol = jnp.pad(xcol, ((0, n_pad - N), (0, 0), (0, 0)))
    xcol = xcol.reshape(nb, M, f_pad).astype(_COMPUTE_DTYPE)

    bf = lambda w: w.astype(_COMPUTE_DTYPE)
    scale = 1.0 / math.sqrt(hd)

    conv_w = bf(jnp.pad(params["conv_w"], ((0, f_pad - f_in), (0, 0))))

    # Fold the attention scale into the Q projection (weight AND bias), then split
    # Q/K/V weights per head -> (L, 3, heads, H, hd); out_w per head -> (L, heads, hd, H).
    qkv_w = params["qkv_w"].at[:, 0].multiply(scale)
    qkv_w = bf(qkv_w.reshape(L, 3, H, num_heads, hd).transpose(0, 1, 3, 2, 4))
    out_w = bf(params["out_w"].reshape(L, num_heads, hd, H))

    ffn = params["ff1_w"].shape[-1]
    assert ffn == H, "packed per-layer bias table assumes dim_feedforward == hidden"

    # Packed per-layer small-vector table (L, 10, H) and global table (7, H).
    lvec = jnp.concatenate([
        params["qkv_b"][:, 0] * scale,      # q bias (scaled with the weight)
        params["qkv_b"][:, 1],
        params["qkv_b"][:, 2],
        params["out_b"],
        params["ff1_b"],
        params["ff2_b"],
        params["ln1_w"], params["ln1_b"],
        params["ln2_w"], params["ln2_b"],
    ], axis=1).astype(jnp.float32)
    gvec = jnp.concatenate([
        params["conv_b"], params["mlp1_lb"], params["mlp1_gw"], params["mlp1_gb"],
        params["mlp2_lb"], params["mlp2_gw"], params["mlp2_gb"],
    ], axis=0).astype(jnp.float32)

    # LSTM gates reordered (i,f,g,o) -> (i,f,o,g): the three sigmoid gates become one
    # contiguous 0:3H lane slab inside the serial recurrence.
    def reorder_gates(w):
        return jnp.concatenate(
            [w[..., :2 * H], w[..., 3 * H:4 * H], w[..., 2 * H:3 * H]], axis=-1)
    wih = bf(reorder_gates(params["wih"]))
    whh = bf(reorder_gates(params["whh"]))
    lstm_b = reorder_gates(params["lstm_b"]).astype(jnp.float32)

    weight_args = [conv_w, bf(params["mlp1_lw"]), qkv_w, out_w,
                   bf(params["ff1_w"]), bf(params["ff2_w"]), lvec, gvec,
                   wih, whh, lstm_b, bf(params["mlp2_lw"])]

    in_specs = [pl.BlockSpec((1, M, f_pad), lambda i: (i, 0, 0))]
    for w in weight_args:
        nd = w.ndim
        in_specs.append(pl.BlockSpec(w.shape, lambda i, nd=nd: (0,) * nd))
    # TODO(synk): the constant weight blocks still use default double-buffering;
    # switch them to pipeline_mode=pl.Buffered(1) if H scales up (v7x 64 MiB VMEM).

    out_pad = ((3 * H + 127) // 128) * 128      # lane-dense (unmasked) store width
    out_shape = jax.ShapeDtypeStruct((nb, b_tile, out_pad), jnp.float32)
    out_specs = pl.BlockSpec((1, b_tile, out_pad), lambda i: (i, 0, 0))

    # Rough cost estimate so XLA can schedule the surrounding glue ops.
    flops = 2 * M * f_pad * H + 2 * M * H * H
    flops += num_layers * (3 * 2 * M * H * H + 2 * 2 * M * T * H
                           + 2 * M * H * H + 2 * 2 * M * H * ffn)
    flops += 2 * 2 * M * H * 4 * H + 2 * b_tile * H * H
    transc = num_layers * num_heads * M * T + T * b_tile * 7 * H
    bytes_acc = int(xcol.nbytes) + sum(int(w.nbytes) for w in weight_args) \
        + nb * b_tile * out_pad * 4
    cost = pl.CostEstimate(flops=int(nb * flops),
                           transcendentals=int(nb * transc),
                           bytes_accessed=int(bytes_acc))

    kern = partial(temperal_encoder_kernel, num_heads=num_heads,
                   num_layers=num_layers, seq_len=T, hidden=H, b_tile=b_tile)

    fused = pl.pallas_call(
        kern,
        out_shape=out_shape,
        grid_spec=pltpu.PrefetchScalarGridSpec(
            num_scalar_prefetch=0,
            grid=(nb,),
            in_specs=in_specs,
            out_specs=out_specs,
        ),
        compiler_params=pltpu.CompilerParams(
            dimension_semantics=("parallel",)),
        cost_estimate=cost,
    )(xcol, *weight_args)

    fused = fused.reshape(n_pad, out_pad)[:N]
    return fused[:, 0:H], fused[:, H:2 * H], fused[:, 2 * H:3 * H]


# -----------------------------------------------------------------------------
# Deterministic parameter initialization (matmul-layout weights: y = x @ W + b)
# -----------------------------------------------------------------------------
def init_params(key, H, num_layers, ffn):
    ks = jax.random.split(key, 20)

    def nrm(k, shape, s=0.1):
        return (s * jax.random.normal(k, shape)).astype(jnp.float32)

    p = {
        "conv_w": nrm(ks[0], (6, H)),                 # (K*C_in, H)
        "conv_b": jnp.zeros((1, H), jnp.float32),
        "mlp1_lw": nrm(ks[1], (H, H), 0.05),
        "mlp1_lb": nrm(ks[2], (1, H), 0.01),
        "mlp1_gw": jnp.ones((1, H), jnp.float32),
        "mlp1_gb": jnp.zeros((1, H), jnp.float32),
        "qkv_w": nrm(ks[3], (num_layers, 3, H, H)),   # separate Q/K/V projections
        "qkv_b": nrm(ks[4], (num_layers, 3, 1, H), 0.01),
        "out_w": nrm(ks[5], (num_layers, H, H)),
        "out_b": nrm(ks[6], (num_layers, 1, H), 0.01),
        "ff1_w": nrm(ks[7], (num_layers, H, ffn)),
        "ff1_b": nrm(ks[8], (num_layers, 1, ffn), 0.01),
        "ff2_w": nrm(ks[9], (num_layers, ffn, H)),
        "ff2_b": nrm(ks[10], (num_layers, 1, H), 0.01),
        "ln1_w": jnp.ones((num_layers, 1, H), jnp.float32),
        "ln1_b": jnp.zeros((num_layers, 1, H), jnp.float32),
        "ln2_w": jnp.ones((num_layers, 1, H), jnp.float32),
        "ln2_b": jnp.zeros((num_layers, 1, H), jnp.float32),
        "wih": nrm(ks[11], (H, 4 * H)),               # W_ih^T, PyTorch (i,f,g,o) order
        "whh": nrm(ks[12], (H, 4 * H)),               # W_hh^T
        "lstm_b": jnp.zeros((1, 4 * H), jnp.float32), # b_ih + b_hh
        "mlp2_lw": nrm(ks[13], (H, H), 0.05),
        "mlp2_lb": nrm(ks[14], (1, H), 0.01),
        "mlp2_gw": jnp.ones((1, H), jnp.float32),
        "mlp2_gb": jnp.zeros((1, H), jnp.float32),
    }
    return p


# -----------------------------------------------------------------------------
# Pure-JAX f32 reference (same math, used only to sanity-check the kernel)
# -----------------------------------------------------------------------------
def reference(x, params, *, num_heads, num_layers):
    N, _, T = x.shape
    H = params["conv_w"].shape[-1]
    hd = H // num_heads
    xt = jnp.transpose(x, (0, 2, 1))
    xp = jnp.pad(xt, ((0, 0), (1, 1), (0, 0)))
    xcol = jnp.concatenate([xp[:, 0:T], xp[:, 1:T + 1], xp[:, 2:T + 2]], axis=-1)

    def ln(y, g, b, eps=1e-5):
        u = y.mean(-1, keepdims=True)
        s = ((y - u) ** 2).mean(-1, keepdims=True)
        return g * ((y - u) / jnp.sqrt(s + eps)) + b

    def mlp(y, lw, lb, gw, gb):
        return jax.nn.relu(ln(y @ lw + lb, gw, gb))

    xd = xcol @ params["conv_w"] + params["conv_b"]
    xd = mlp(xd, params["mlp1_lw"], params["mlp1_lb"],
             params["mlp1_gw"], params["mlp1_gb"]) + xd
    xb = xd
    xc = xb
    for l in range(num_layers):
        q = xc @ params["qkv_w"][l, 0] + params["qkv_b"][l, 0]
        k = xc @ params["qkv_w"][l, 1] + params["qkv_b"][l, 1]
        v = xc @ params["qkv_w"][l, 2] + params["qkv_b"][l, 2]
        outs = []
        for h in range(num_heads):
            qs = q[..., h * hd:(h + 1) * hd]
            ks = k[..., h * hd:(h + 1) * hd]
            vs = v[..., h * hd:(h + 1) * hd]
            sc = jnp.einsum('ntd,nsd->nts', qs, ks) / math.sqrt(hd)
            outs.append(jnp.einsum('nts,nsd->ntd',
                                   jax.nn.softmax(sc, axis=-1), vs))
        attn = jnp.concatenate(outs, -1) @ params["out_w"][l] + params["out_b"][l]
        x1 = ln(xc + attn, params["ln1_w"][l], params["ln1_b"][l])
        ff = (jax.nn.relu(x1 @ params["ff1_w"][l] + params["ff1_b"][l])
              @ params["ff2_w"][l] + params["ff2_b"][l])
        xc = ln(x1 + ff, params["ln2_w"][l], params["ln2_b"][l])
    x_in = xc + xb
    h_t = jnp.zeros((N, H))
    c_t = jnp.zeros((N, H))
    for t in range(T):
        g = x_in[:, t, :] @ params["wih"] + h_t @ params["whh"] + params["lstm_b"]
        i_g = jax.nn.sigmoid(g[:, :H])
        f_g = jax.nn.sigmoid(g[:, H:2 * H])
        g_g = jnp.tanh(g[:, 2 * H:3 * H])
        o_g = jax.nn.sigmoid(g[:, 3 * H:])
        c_t = f_g * c_t + i_g * g_g
        h_t = o_g * jnp.tanh(c_t)
    x_state = h_t
    x_enc = mlp(x_state, params["mlp2_lw"], params["mlp2_lb"],
                params["mlp2_gw"], params["mlp2_gb"]) + x_state
    return x_enc, x_state, c_t


if __name__ == "__main__":
    N, C_IN, T = 2, 2, 8
    H, HEADS, LAYERS = 32, 2, 2
    FFN = H  # dim_feedforward == hidden_size in the module

    key = jax.random.PRNGKey(0)
    kx, kp = jax.random.split(key)
    x = jax.random.normal(kx, (N, C_IN, T), dtype=jnp.float32)
    params = init_params(kp, H, LAYERS, FFN)

    x_enc, x_state, cn = temperal_encoder(x, params,
                                          num_heads=HEADS, num_layers=LAYERS)
    jax.block_until_ready((x_enc, x_state, cn))

    r_enc, r_state, r_cn = reference(x, params,
                                     num_heads=HEADS, num_layers=LAYERS)
    # Tolerance covers bf16 MXU operands (f32 accumulation) and the approximate
    # EUP reciprocal in the softmax, vs the pure-f32 reference.
    np.testing.assert_allclose(np.asarray(x_enc), np.asarray(r_enc),
                               rtol=5e-2, atol=5e-2)
    np.testing.assert_allclose(np.asarray(x_state), np.asarray(r_state),
                               rtol=5e-2, atol=5e-2)
    np.testing.assert_allclose(np.asarray(cn), np.asarray(r_cn),
                               rtol=5e-2, atol=5e-2)

    assert x_enc.shape == (N, H) and x_state.shape == (N, H) and cn.shape == (N, H)
    print("KERNEL_OK")
</pallas_src>

<mosaic_0001>
module attributes {stable_mosaic.version = 11 : i64} {
  func.func @temperal_encoder_kernel(%arg0: i32, %arg1: memref<1x8x8xbf16, #tpu.memory_space<vmem>>, %arg2: memref<8x32xbf16, #tpu.memory_space<vmem>>, %arg3: memref<32x32xbf16, #tpu.memory_space<vmem>>, %arg4: memref<2x3x2x32x16xbf16, #tpu.memory_space<vmem>>, %arg5: memref<2x2x16x32xbf16, #tpu.memory_space<vmem>>, %arg6: memref<2x32x32xbf16, #tpu.memory_space<vmem>>, %arg7: memref<2x32x32xbf16, #tpu.memory_space<vmem>>, %arg8: memref<2x10x32xf32, #tpu.memory_space<vmem>>, %arg9: memref<7x32xf32, #tpu.memory_space<vmem>>, %arg10: memref<32x128xbf16, #tpu.memory_space<vmem>>, %arg11: memref<32x128xbf16, #tpu.memory_space<vmem>>, %arg12: memref<1x128xf32, #tpu.memory_space<vmem>>, %arg13: memref<32x32xbf16, #tpu.memory_space<vmem>>, %arg14: memref<1x1x128xf32, #tpu.memory_space<vmem>>) attributes {dimension_semantics = [#tpu.dimension_semantics<parallel>], iteration_bounds = array<i64: 2>, scalar_prefetch = 0 : i64, scratch_operands = 0 : i64, tpu.core_type = #tpu.core_type<tc>, window_params = [{transform_indices = @transform_0, window_bounds = array<i64: 1, 8, 8>}, {pipeline_mode = #tpu.pipeline_mode<synchronous>, transform_indices = @transform_1, window_bounds = array<i64: 8, 32>}, {pipeline_mode = #tpu.pipeline_mode<synchronous>, transform_indices = @transform_2, window_bounds = array<i64: 32, 32>}, {pipeline_mode = #tpu.pipeline_mode<synchronous>, transform_indices = @transform_3, window_bounds = array<i64: 2, 3, 2, 32, 16>}, {pipeline_mode = #tpu.pipeline_mode<synchronous>, transform_indices = @transform_4, window_bounds = array<i64: 2, 2, 16, 32>}, {pipeline_mode = #tpu.pipeline_mode<synchronous>, transform_indices = @transform_5, window_bounds = array<i64: 2, 32, 32>}, {pipeline_mode = #tpu.pipeline_mode<synchronous>, transform_indices = @transform_6, window_bounds = array<i64: 2, 32, 32>}, {pipeline_mode = #tpu.pipeline_mode<synchronous>, transform_indices = @transform_7, window_bounds = array<i64: 2, 10, 32>}, {pipeline_mode = #tpu.pipeline_mode<synchronous>, transform_indices = @transform_8, window_bounds = array<i64: 7, 32>}, {pipeline_mode = #tpu.pipeline_mode<synchronous>, transform_indices = @transform_9, window_bounds = array<i64: 32, 128>}, {pipeline_mode = #tpu.pipeline_mode<synchronous>, transform_indices = @transform_10, window_bounds = array<i64: 32, 128>}, {pipeline_mode = #tpu.pipeline_mode<synchronous>, transform_indices = @transform_11, window_bounds = array<i64: 1, 128>}, {pipeline_mode = #tpu.pipeline_mode<synchronous>, transform_indices = @transform_12, window_bounds = array<i64: 32, 32>}, {transform_indices = @transform_13, window_bounds = array<i64: 1, 1, 128>}]} {
    %c0 = arith.constant 0 : index
    %c0_0 = arith.constant 0 : index
    %0 = vector.load %arg9[%c0, %c0_0] : memref<7x32xf32, #tpu.memory_space<vmem>>, vector<7x32xf32>
    %c0_1 = arith.constant 0 : index
    %c0_2 = arith.constant 0 : index
    %c0_3 = arith.constant 0 : index
    %1 = vector.load %arg1[%c0_1, %c0_2, %c0_3] : memref<1x8x8xbf16, #tpu.memory_space<vmem>>, vector<1x8x8xbf16>
    %2 = vector.shape_cast %1 : vector<1x8x8xbf16> to vector<8x8xbf16>
    %c0_4 = arith.constant 0 : index
    %c0_5 = arith.constant 0 : index
    %3 = vector.load %arg2[%c0_4, %c0_5] : memref<8x32xbf16, #tpu.memory_space<vmem>>, vector<8x32xbf16>
    %cst = arith.constant dense<0.000000e+00> : vector<8x32xf32>
    %4 = tpu.matmul %2, %3, %cst {dimension_numbers = #tpu.dot_dimension_numbers<[1], [0], [0], [1], [0, 0, 1, 1], [], []>} : vector<8x8xbf16>, vector<8x32xbf16>, vector<8x32xf32> -> vector<8x32xf32>
    %5 = vector.extract_strided_slice %0 {offsets = [0, 0], sizes = [1, 32], strides = [1, 1]} : vector<7x32xf32> to vector<1x32xf32>
    %6 = vector.broadcast %5 : vector<1x32xf32> to vector<8x32xf32>
    %7 = arith.addf %4, %6 : vector<8x32xf32>
    %c0_6 = arith.constant 0 : index
    %c0_7 = arith.constant 0 : index
    %8 = vector.load %arg3[%c0_6, %c0_7] : memref<32x32xbf16, #tpu.memory_space<vmem>>, vector<32x32xbf16>
    %9 = vector.extract_strided_slice %0 {offsets = [1, 0], sizes = [1, 32], strides = [1, 1]} : vector<7x32xf32> to vector<1x32xf32>
    %10 = vector.extract_strided_slice %0 {offsets = [2, 0], sizes = [1, 32], strides = [1, 1]} : vector<7x32xf32> to vector<1x32xf32>
    %11 = vector.extract_strided_slice %0 {offsets = [3, 0], sizes = [1, 32], strides = [1, 1]} : vector<7x32xf32> to vector<1x32xf32>
    %12 = arith.truncf %7 : vector<8x32xf32> to vector<8x32xbf16>
    %cst_8 = arith.constant dense<0.000000e+00> : vector<8x32xf32>
    %13 = tpu.matmul %12, %8, %cst_8 {dimension_numbers = #tpu.dot_dimension_numbers<[1], [0], [0], [1], [0, 0, 1, 1], [], []>} : vector<8x32xbf16>, vector<32x32xbf16>, vector<8x32xf32> -> vector<8x32xf32>
    %14 = vector.broadcast %9 : vector<1x32xf32> to vector<8x32xf32>
    %15 = arith.addf %13, %14 : vector<8x32xf32>
    %cst_9 = arith.constant dense<0.000000e+00> : vector<8xf32>
    %16 = vector.multi_reduction <add>, %15, %cst_9 [1] : vector<8x32xf32> to vector<8xf32>
    %17 = vector.shape_cast %16 : vector<8xf32> to vector<8x1xf32>
    %cst_10 = arith.constant 3.200000e+01 : f32
    %18 = vector.broadcast %cst_10 : f32 to vector<8x1xf32>
    %19 = arith.divf %17, %18 : vector<8x1xf32>
    %20 = vector.broadcast %19 : vector<8x1xf32> to vector<8x32xf32>
    %21 = arith.subf %15, %20 : vector<8x32xf32>
    %22 = arith.mulf %21, %21 : vector<8x32xf32>
    %cst_11 = arith.constant dense<0.000000e+00> : vector<8xf32>
    %23 = vector.multi_reduction <add>, %22, %cst_11 [1] : vector<8x32xf32> to vector<8xf32>
    %24 = vector.shape_cast %23 : vector<8xf32> to vector<8x1xf32>
    %cst_12 = arith.constant 3.200000e+01 : f32
    %25 = vector.broadcast %cst_12 : f32 to vector<8x1xf32>
    %26 = arith.divf %24, %25 : vector<8x1xf32>
    %27 = vector.broadcast %19 : vector<8x1xf32> to vector<8x32xf32>
    %28 = arith.subf %15, %27 : vector<8x32xf32>
    %cst_13 = arith.constant 9.99999974E-6 : f32
    %29 = vector.broadcast %cst_13 : f32 to vector<8x1xf32>
    %30 = arith.addf %26, %29 : vector<8x1xf32>
    %31 = math.rsqrt %30 : vector<8x1xf32>
    %32 = vector.broadcast %31 : vector<8x1xf32> to vector<8x32xf32>
    %33 = arith.mulf %28, %32 : vector<8x32xf32>
    %34 = vector.broadcast %10 : vector<1x32xf32> to vector<8x32xf32>
    %35 = arith.mulf %34, %33 : vector<8x32xf32>
    %36 = vector.broadcast %11 : vector<1x32xf32> to vector<8x32xf32>
    %37 = arith.addf %35, %36 : vector<8x32xf32>
    %cst_14 = arith.constant 0.000000e+00 : f32
    %38 = vector.broadcast %cst_14 : f32 to vector<8x32xf32>
    %39 = arith.maximumf %37, %38 : vector<8x32xf32>
    %40 = arith.addf %39, %7 : vector<8x32xf32>
    %c0_15 = arith.constant 0 : index
    %c0_16 = arith.constant 0 : index
    %c0_17 = arith.constant 0 : index
    %41 = vector.load %arg8[%c0_15, %c0_16, %c0_17] : memref<2x10x32xf32, #tpu.memory_space<vmem>>, vector<1x10x32xf32>
    %42 = vector.shape_cast %41 : vector<1x10x32xf32> to vector<10x32xf32>
    %43 = arith.truncf %40 : vector<8x32xf32> to vector<8x32xbf16>
    %cst_18 = arith.constant 0.000000e+00 : f32
    %44 = vector.broadcast %cst_18 : f32 to vector<8x32xf32>
    %c0_19 = arith.constant 0 : index
    %c0_20 = arith.constant 0 : index
    %c0_21 = arith.constant 0 : index
    %c0_22 = arith.constant 0 : index
    %c0_23 = arith.constant 0 : index
    %45 = vector.load %arg4[%c0_19, %c0_20, %c0_21, %c0_22, %c0_23] : memref<2x3x2x32x16xbf16, #tpu.memory_space<vmem>>, vector<1x1x1x32x16xbf16>
    %46 = vector.shape_cast %45 : vector<1x1x1x32x16xbf16> to vector<32x16xbf16>
    %cst_24 = arith.constant dense<0.000000e+00> : vector<8x16xf32>
    %47 = tpu.matmul %43, %46, %cst_24 {dimension_numbers = #tpu.dot_dimension_numbers<[1], [0], [0], [1], [0, 0, 1, 1], [], []>} : vector<8x32xbf16>, vector<32x16xbf16>, vector<8x16xf32> -> vector<8x16xf32>
    %48 = vector.extract_strided_slice %42 {offsets = [0, 0], sizes = [1, 16], strides = [1, 1]} : vector<10x32xf32> to vector<1x16xf32>
    %49 = vector.broadcast %48 : vector<1x16xf32> to vector<8x16xf32>
    %50 = arith.addf %47, %49 : vector<8x16xf32>
    %c0_25 = arith.constant 0 : index
    %c1 = arith.constant 1 : index
    %c0_26 = arith.constant 0 : index
    %c0_27 = arith.constant 0 : index
    %c0_28 = arith.constant 0 : index
    %51 = vector.load %arg4[%c0_25, %c1, %c0_26, %c0_27, %c0_28] : memref<2x3x2x32x16xbf16, #tpu.memory_space<vmem>>, vector<1x1x1x32x16xbf16>
    %52 = vector.shape_cast %51 : vector<1x1x1x32x16xbf16> to vector<32x16xbf16>
    %cst_29 = arith.constant dense<0.000000e+00> : vector<8x16xf32>
    %53 = tpu.matmul %43, %52, %cst_29 {dimension_numbers = #tpu.dot_dimension_numbers<[1], [0], [0], [1], [0, 0, 1, 1], [], []>} : vector<8x32xbf16>, vector<32x16xbf16>, vector<8x16xf32> -> vector<8x16xf32>
    %54 = vector.extract_strided_slice %42 {offsets = [1, 0], sizes = [1, 16], strides = [1, 1]} : vector<10x32xf32> to vector<1x16xf32>
    %55 = vector.broadcast %54 : vector<1x16xf32> to vector<8x16xf32>
    %56 = arith.addf %53, %55 : vector<8x16xf32>
    %c0_30 = arith.constant 0 : index
    %c2 = arith.constant 2 : index
    %c0_31 = arith.constant 0 : index
    %c0_32 = arith.constant 0 : index
    %c0_33 = arith.constant 0 : index
    %57 = vector.load %arg4[%c0_30, %c2, %c0_31, %c0_32, %c0_33] : memref<2x3x2x32x16xbf16, #tpu.memory_space<vmem>>, vector<1x1x1x32x16xbf16>
    %58 = vector.shape_cast %57 : vector<1x1x1x32x16xbf16> to vector<32x16xbf16>
    %cst_34 = arith.constant dense<0.000000e+00> : vector<8x16xf32>
    %59 = tpu.matmul %43, %58, %cst_34 {dimension_numbers = #tpu.dot_dimension_numbers<[1], [0], [0], [1], [0, 0, 1, 1], [], []>} : vector<8x32xbf16>, vector<32x16xbf16>, vector<8x16xf32> -> vector<8x16xf32>
    %60 = vector.extract_strided_slice %42 {offsets = [2, 0], sizes = [1, 16], strides = [1, 1]} : vector<10x32xf32> to vector<1x16xf32>
    %61 = vector.broadcast %60 : vector<1x16xf32> to vector<8x16xf32>
    %62 = arith.addf %59, %61 : vector<8x16xf32>
    %63 = arith.truncf %50 : vector<8x16xf32> to vector<8x16xbf16>
    %64 = vector.shape_cast %63 : vector<8x16xbf16> to vector<1x8x16xbf16>
    %65 = arith.truncf %56 : vector<8x16xf32> to vector<8x16xbf16>
    %66 = vector.shape_cast %65 : vector<8x16xbf16> to vector<1x8x16xbf16>
    %67 = arith.truncf %62 : vector<8x16xf32> to vector<8x16xbf16>
    %68 = vector.shape_cast %67 : vector<8x16xbf16> to vector<1x8x16xbf16>
    "tpu.trace_start"() <{level = 10 : i32, message = "bqd,bkd->bqk"}> : () -> ()
    %cst_35 = arith.constant dense<0.000000e+00> : vector<1x8x8xf32>
    %69 = tpu.matmul %64, %66, %cst_35 {dimension_numbers = #tpu.dot_dimension_numbers<[2], [2], [1], [1], [0, 0, 0, 1, 1, 1], [0], [0]>} : vector<1x8x16xbf16>, vector<1x8x16xbf16>, vector<1x8x8xf32> -> vector<1x8x8xf32>
    "tpu.trace_stop"() : () -> ()
    %cst_36 = arith.constant dense<0xFF800000> : vector<1x8xf32>
    %70 = vector.multi_reduction <maximumf>, %69, %cst_36 [2] : vector<1x8x8xf32> to vector<1x8xf32>
    %71 = vector.shape_cast %70 : vector<1x8xf32> to vector<1x8x1xf32>
    %72 = vector.broadcast %71 : vector<1x8x1xf32> to vector<1x8x8xf32>
    %73 = arith.subf %69, %72 : vector<1x8x8xf32>
    %74 = math.exp %73 : vector<1x8x8xf32>
    %cst_37 = arith.constant dense<0.000000e+00> : vector<1x8xf32>
    %75 = vector.multi_reduction <add>, %74, %cst_37 [2] : vector<1x8x8xf32> to vector<1x8xf32>
    %76 = vector.shape_cast %75 : vector<1x8xf32> to vector<1x8x1xf32>
    %77 = tpu.reciprocal %76 {approx = true} : vector<1x8x1xf32> -> vector<1x8x1xf32>
    %78 = vector.broadcast %77 : vector<1x8x1xf32> to vector<1x8x8xf32>
    %79 = arith.mulf %74, %78 : vector<1x8x8xf32>
    %80 = arith.truncf %79 : vector<1x8x8xf32> to vector<1x8x8xbf16>
    "tpu.trace_start"() <{level = 10 : i32, message = "bqk,bkd->bqd"}> : () -> ()
    %cst_38 = arith.constant dense<0.000000e+00> : vector<1x8x16xf32>
    %81 = tpu.matmul %80, %68, %cst_38 {dimension_numbers = #tpu.dot_dimension_numbers<[2], [1], [1], [2], [0, 0, 0, 1, 1, 2], [0], [0]>} : vector<1x8x8xbf16>, vector<1x8x16xbf16>, vector<1x8x16xf32> -> vector<1x8x16xf32>
    "tpu.trace_stop"() : () -> ()
    %82 = vector.shape_cast %81 : vector<1x8x16xf32> to vector<8x16xf32>
    %83 = arith.truncf %82 : vector<8x16xf32> to vector<8x16xbf16>
    %c0_39 = arith.constant 0 : index
    %c0_40 = arith.constant 0 : index
    %c0_41 = arith.constant 0 : index
    %c0_42 = arith.constant 0 : index
    %84 = vector.load %arg5[%c0_39, %c0_40, %c0_41, %c0_42] : memref<2x2x16x32xbf16, #tpu.memory_space<vmem>>, vector<1x1x16x32xbf16>
    %85 = vector.shape_cast %84 : vector<1x1x16x32xbf16> to vector<16x32xbf16>
    %cst_43 = arith.constant dense<0.000000e+00> : vector<8x32xf32>
    %86 = tpu.matmul %83, %85, %cst_43 {dimension_numbers = #tpu.dot_dimension_numbers<[1], [0], [0], [1], [0, 0, 1, 1], [], []>} : vector<8x16xbf16>, vector<16x32xbf16>, vector<8x32xf32> -> vector<8x32xf32>
    %87 = arith.addf %44, %86 : vector<8x32xf32>
    %c0_44 = arith.constant 0 : index
    %c0_45 = arith.constant 0 : index
    %c1_46 = arith.constant 1 : index
    %c0_47 = arith.constant 0 : index
    %c0_48 = arith.constant 0 : index
    %88 = vector.load %arg4[%c0_44, %c0_45, %c1_46, %c0_47, %c0_48] : memref<2x3x2x32x16xbf16, #tpu.memory_space<vmem>>, vector<1x1x1x32x16xbf16>
    %89 = vector.shape_cast %88 : vector<1x1x1x32x16xbf16> to vector<32x16xbf16>
    %cst_49 = arith.constant dense<0.000000e+00> : vector<8x16xf32>
    %90 = tpu.matmul %43, %89, %cst_49 {dimension_numbers = #tpu.dot_dimension_numbers<[1], [0], [0], [1], [0, 0, 1, 1], [], []>} : vector<8x32xbf16>, vector<32x16xbf16>, vector<8x16xf32> -> vector<8x16xf32>
    %91 = vector.extract_strided_slice %42 {offsets = [0, 16], sizes = [1, 16], strides = [1, 1]} : vector<10x32xf32> to vector<1x16xf32>
    %92 = vector.broadcast %91 : vector<1x16xf32> to vector<8x16xf32>
    %93 = arith.addf %90, %92 : vector<8x16xf32>
    %c0_50 = arith.constant 0 : index
    %c1_51 = arith.constant 1 : index
    %c1_52 = arith.constant 1 : index
    %c0_53 = arith.constant 0 : index
    %c0_54 = arith.constant 0 : index
    %94 = vector.load %arg4[%c0_50, %c1_51, %c1_52, %c0_53, %c0_54] : memref<2x3x2x32x16xbf16, #tpu.memory_space<vmem>>, vector<1x1x1x32x16xbf16>
    %95 = vector.shape_cast %94 : vector<1x1x1x32x16xbf16> to vector<32x16xbf16>
    %cst_55 = arith.constant dense<0.000000e+00> : vector<8x16xf32>
    %96 = tpu.matmul %43, %95, %cst_55 {dimension_numbers = #tpu.dot_dimension_numbers<[1], [0], [0], [1], [0, 0, 1, 1], [], []>} : vector<8x32xbf16>, vector<32x16xbf16>, vector<8x16xf32> -> vector<8x16xf32>
    %97 = vector.extract_strided_slice %42 {offsets = [1, 16], sizes = [1, 16], strides = [1, 1]} : vector<10x32xf32> to vector<1x16xf32>
    %98 = vector.broadcast %97 : vector<1x16xf32> to vector<8x16xf32>
    %99 = arith.addf %96, %98 : vector<8x16xf32>
    %c0_56 = arith.constant 0 : index
    %c2_57 = arith.constant 2 : index
    %c1_58 = arith.constant 1 : index
    %c0_59 = arith.constant 0 : index
    %c0_60 = arith.constant 0 : index
    %100 = vector.load %arg4[%c0_56, %c2_57, %c1_58, %c0_59, %c0_60] : memref<2x3x2x32x16xbf16, #tpu.memory_space<vmem>>, vector<1x1x1x32x16xbf16>
    %101 = vector.shape_cast %100 : vector<1x1x1x32x16xbf16> to vector<32x16xbf16>
    %cst_61 = arith.constant dense<0.000000e+00> : vector<8x16xf32>
    %102 = tpu.matmul %43, %101, %cst_61 {dimension_numbers = #tpu.dot_dimension_numbers<[1], [0], [0], [1], [0, 0, 1, 1], [], []>} : vector<8x32xbf16>, vector<32x16xbf16>, vector<8x16xf32> -> vector<8x16xf32>
    %103 = vector.extract_strided_slice %42 {offsets = [2, 16], sizes = [1, 16], strides = [1, 1]} : vector<10x32xf32> to vector<1x16xf32>
    %104 = vector.broadcast %103 : vector<1x16xf32> to vector<8x16xf32>
    %105 = arith.addf %102, %104 : vector<8x16xf32>
    %106 = arith.truncf %93 : vector<8x16xf32> to vector<8x16xbf16>
    %107 = vector.shape_cast %106 : vector<8x16xbf16> to vector<1x8x16xbf16>
    %108 = arith.truncf %99 : vector<8x16xf32> to vector<8x16xbf16>
    %109 = vector.shape_cast %108 : vector<8x16xbf16> to vector<1x8x16xbf16>
    %110 = arith.truncf %105 : vector<8x16xf32> to vector<8x16xbf16>
    %111 = vector.shape_cast %110 : vector<8x16xbf16> to vector<1x8x16xbf16>
    "tpu.trace_start"() <{level = 10 : i32, message = "bqd,bkd->bqk"}> : () -> ()
    %cst_62 = arith.constant dense<0.000000e+00> : vector<1x8x8xf32>
    %112 = tpu.matmul %107, %109, %cst_62 {dimension_numbers = #tpu.dot_dimension_numbers<[2], [2], [1], [1], [0, 0, 0, 1, 1, 1], [0], [0]>} : vector<1x8x16xbf16>, vector<1x8x16xbf16>, vector<1x8x8xf32> -> vector<1x8x8xf32>
    "tpu.trace_stop"() : () -> ()
    %cst_63 = arith.constant dense<0xFF800000> : vector<1x8xf32>
    %113 = vector.multi_reduction <maximumf>, %112, %cst_63 [2] : vector<1x8x8xf32> to vector<1x8xf32>
    %114 = vector.shape_cast %113 : vector<1x8xf32> to vector<1x8x1xf32>
    %115 = vector.broadcast %114 : vector<1x8x1xf32> to vector<1x8x8xf32>
    %116 = arith.subf %112, %115 : vector<1x8x8xf32>
    %117 = math.exp %116 : vector<1x8x8xf32>
    %cst_64 = arith.constant dense<0.000000e+00> : vector<1x8xf32>
    %118 = vector.multi_reduction <add>, %117, %cst_64 [2] : vector<1x8x8xf32> to vector<1x8xf32>
    %119 = vector.shape_cast %118 : vector<1x8xf32> to vector<1x8x1xf32>
    %120 = tpu.reciprocal %119 {approx = true} : vector<1x8x1xf32> -> vector<1x8x1xf32>
    %121 = vector.broadcast %120 : vector<1x8x1xf32> to vector<1x8x8xf32>
    %122 = arith.mulf %117, %121 : vector<1x8x8xf32>
    %123 = arith.truncf %122 : vector<1x8x8xf32> to vector<1x8x8xbf16>
    "tpu.trace_start"() <{level = 10 : i32, message = "bqk,bkd->bqd"}> : () -> ()
    %cst_65 = arith.constant dense<0.000000e+00> : vector<1x8x16xf32>
    %124 = tpu.matmul %123, %111, %cst_65 {dimension_numbers = #tpu.dot_dimension_numbers<[2], [1], [1], [2], [0, 0, 0, 1, 1, 2], [0], [0]>} : vector<1x8x8xbf16>, vector<1x8x16xbf16>, vector<1x8x16xf32> -> vector<1x8x16xf32>
    "tpu.trace_stop"() : () -> ()
    %125 = vector.shape_cast %124 : vector<1x8x16xf32> to vector<8x16xf32>
    %126 = arith.truncf %125 : vector<8x16xf32> to vector<8x16xbf16>
    %c0_66 = arith.constant 0 : index
    %c1_67 = arith.constant 1 : index
    %c0_68 = arith.constant 0 : index
    %c0_69 = arith.constant 0 : index
    %127 = vector.load %arg5[%c0_66, %c1_67, %c0_68, %c0_69] : memref<2x2x16x32xbf16, #tpu.memory_space<vmem>>, vector<1x1x16x32xbf16>
    %128 = vector.shape_cast %127 : vector<1x1x16x32xbf16> to vector<16x32xbf16>
    %cst_70 = arith.constant dense<0.000000e+00> : vector<8x32xf32>
    %129 = tpu.matmul %126, %128, %cst_70 {dimension_numbers = #tpu.dot_dimension_numbers<[1], [0], [0], [1], [0, 0, 1, 1], [], []>} : vector<8x16xbf16>, vector<16x32xbf16>, vector<8x32xf32> -> vector<8x32xf32>
    %130 = arith.addf %87, %129 : vector<8x32xf32>
    %131 = vector.extract_strided_slice %42 {offsets = [3, 0], sizes = [1, 32], strides = [1, 1]} : vector<10x32xf32> to vector<1x32xf32>
    %132 = vector.broadcast %131 : vector<1x32xf32> to vector<8x32xf32>
    %133 = arith.addf %130, %132 : vector<8x32xf32>
    %134 = arith.addf %40, %133 : vector<8x32xf32>
    %135 = vector.extract_strided_slice %42 {offsets = [6, 0], sizes = [1, 32], strides = [1, 1]} : vector<10x32xf32> to vector<1x32xf32>
    %136 = vector.extract_strided_slice %42 {offsets = [7, 0], sizes = [1, 32], strides = [1, 1]} : vector<10x32xf32> to vector<1x32xf32>
    %cst_71 = arith.constant dense<0.000000e+00> : vector<8xf32>
    %137 = vector.multi_reduction <add>, %134, %cst_71 [1] : vector<8x32xf32> to vector<8xf32>
    %138 = vector.shape_cast %137 : vector<8xf32> to vector<8x1xf32>
    %cst_72 = arith.constant 3.200000e+01 : f32
    %139 = vector.broadcast %cst_72 : f32 to vector<8x1xf32>
    %140 = arith.divf %138, %139 : vector<8x1xf32>
    %141 = vector.broadcast %140 : vector<8x1xf32> to vector<8x32xf32>
    %142 = arith.subf %134, %141 : vector<8x32xf32>
    %143 = arith.mulf %142, %142 : vector<8x32xf32>
    %cst_73 = arith.constant dense<0.000000e+00> : vector<8xf32>
    %144 = vector.multi_reduction <add>, %143, %cst_73 [1] : vector<8x32xf32> to vector<8xf32>
    %145 = vector.shape_cast %144 : vector<8xf32> to vector<8x1xf32>
    %cst_74 = arith.constant 3.200000e+01 : f32
    %146 = vector.broadcast %cst_74 : f32 to vector<8x1xf32>
    %147 = arith.divf %145, %146 : vector<8x1xf32>
    %148 = vector.broadcast %140 : vector<8x1xf32> to vector<8x32xf32>
    %149 = arith.subf %134, %148 : vector<8x32xf32>
    %cst_75 = arith.constant 9.99999974E-6 : f32
    %150 = vector.broadcast %cst_75 : f32 to vector<8x1xf32>
    %151 = arith.addf %147, %150 : vector<8x1xf32>
    %152 = math.rsqrt %151 : vector<8x1xf32>
    %153 = vector.broadcast %152 : vector<8x1xf32> to vector<8x32xf32>
    %154 = arith.mulf %149, %153 : vector<8x32xf32>
    %155 = vector.broadcast %135 : vector<1x32xf32> to vector<8x32xf32>
    %156 = arith.mulf %155, %154 : vector<8x32xf32>
    %157 = vector.broadcast %136 : vector<1x32xf32> to vector<8x32xf32>
    %158 = arith.addf %156, %157 : vector<8x32xf32>
    %c0_76 = arith.constant 0 : index
    %c0_77 = arith.constant 0 : index
    %c0_78 = arith.constant 0 : index
    %159 = vector.load %arg6[%c0_76, %c0_77, %c0_78] : memref<2x32x32xbf16, #tpu.memory_space<vmem>>, vector<1x32x32xbf16>
    %160 = vector.shape_cast %159 : vector<1x32x32xbf16> to vector<32x32xbf16>
    %161 = arith.truncf %158 : vector<8x32xf32> to vector<8x32xbf16>
    %cst_79 = arith.constant dense<0.000000e+00> : vector<8x32xf32>
    %162 = tpu.matmul %161, %160, %cst_79 {dimension_numbers = #tpu.dot_dimension_numbers<[1], [0], [0], [1], [0, 0, 1, 1], [], []>} : vector<8x32xbf16>, vector<32x32xbf16>, vector<8x32xf32> -> vector<8x32xf32>
    %163 = vector.extract_strided_slice %42 {offsets = [4, 0], sizes = [1, 32], strides = [1, 1]} : vector<10x32xf32> to vector<1x32xf32>
    %164 = vector.broadcast %163 : vector<1x32xf32> to vector<8x32xf32>
    %165 = arith.addf %162, %164 : vector<8x32xf32>
    %cst_80 = arith.constant 0.000000e+00 : f32
    %166 = vector.broadcast %cst_80 : f32 to vector<8x32xf32>
    %167 = arith.maximumf %165, %166 : vector<8x32xf32>
    %c0_81 = arith.constant 0 : index
    %c0_82 = arith.constant 0 : index
    %c0_83 = arith.constant 0 : index
    %168 = vector.load %arg7[%c0_81, %c0_82, %c0_83] : memref<2x32x32xbf16, #tpu.memory_space<vmem>>, vector<1x32x32xbf16>
    %169 = vector.shape_cast %168 : vector<1x32x32xbf16> to vector<32x32xbf16>
    %170 = arith.truncf %167 : vector<8x32xf32> to vector<8x32xbf16>
    %cst_84 = arith.constant dense<0.000000e+00> : vector<8x32xf32>
    %171 = tpu.matmul %170, %169, %cst_84 {dimension_numbers = #tpu.dot_dimension_numbers<[1], [0], [0], [1], [0, 0, 1, 1], [], []>} : vector<8x32xbf16>, vector<32x32xbf16>, vector<8x32xf32> -> vector<8x32xf32>
    %172 = vector.extract_strided_slice %42 {offsets = [5, 0], sizes = [1, 32], strides = [1, 1]} : vector<10x32xf32> to vector<1x32xf32>
    %173 = vector.broadcast %172 : vector<1x32xf32> to vector<8x32xf32>
    %174 = arith.addf %171, %173 : vector<8x32xf32>
    %175 = arith.addf %158, %174 : vector<8x32xf32>
    %176 = vector.extract_strided_slice %42 {offsets = [8, 0], sizes = [1, 32], strides = [1, 1]} : vector<10x32xf32> to vector<1x32xf32>
    %177 = vector.extract_strided_slice %42 {offsets = [9, 0], sizes = [1, 32], strides = [1, 1]} : vector<10x32xf32> to vector<1x32xf32>
    %cst_85 = arith.constant dense<0.000000e+00> : vector<8xf32>
    %178 = vector.multi_reduction <add>, %175, %cst_85 [1] : vector<8x32xf32> to vector<8xf32>
    %179 = vector.shape_cast %178 : vector<8xf32> to vector<8x1xf32>
    %cst_86 = arith.constant 3.200000e+01 : f32
    %180 = vector.broadcast %cst_86 : f32 to vector<8x1xf32>
    %181 = arith.divf %179, %180 : vector<8x1xf32>
    %182 = vector.broadcast %181 : vector<8x1xf32> to vector<8x32xf32>
    %183 = arith.subf %175, %182 : vector<8x32xf32>
    %184 = arith.mulf %183, %183 : vector<8x32xf32>
    %cst_87 = arith.constant dense<0.000000e+00> : vector<8xf32>
    %185 = vector.multi_reduction <add>, %184, %cst_87 [1] : vector<8x32xf32> to vector<8xf32>
    %186 = vector.shape_cast %185 : vector<8xf32> to vector<8x1xf32>
    %cst_88 = arith.constant 3.200000e+01 : f32
    %187 = vector.broadcast %cst_88 : f32 to vector<8x1xf32>
    %188 = arith.divf %186, %187 : vector<8x1xf32>
    %189 = vector.broadcast %181 : vector<8x1xf32> to vector<8x32xf32>
    %190 = arith.subf %175, %189 : vector<8x32xf32>
    %cst_89 = arith.constant 9.99999974E-6 : f32
    %191 = vector.broadcast %cst_89 : f32 to vector<8x1xf32>
    %192 = arith.addf %188, %191 : vector<8x1xf32>
    %193 = math.rsqrt %192 : vector<8x1xf32>
    %194 = vector.broadcast %193 : vector<8x1xf32> to vector<8x32xf32>
    %195 = arith.mulf %190, %194 : vector<8x32xf32>
    %196 = vector.broadcast %176 : vector<1x32xf32> to vector<8x32xf32>
    %197 = arith.mulf %196, %195 : vector<8x32xf32>
    %198 = vector.broadcast %177 : vector<1x32xf32> to vector<8x32xf32>
    %199 = arith.addf %197, %198 : vector<8x32xf32>
    %c1_90 = arith.constant 1 : index
    %c0_91 = arith.constant 0 : index
    %c0_92 = arith.constant 0 : index
    %200 = vector.load %arg8[%c1_90, %c0_91, %c0_92] : memref<2x10x32xf32, #tpu.memory_space<vmem>>, vector<1x10x32xf32>
    %201 = vector.shape_cast %200 : vector<1x10x32xf32> to vector<10x32xf32>
    %202 = arith.truncf %199 : vector<8x32xf32> to vector<8x32xbf16>
    %cst_93 = arith.constant 0.000000e+00 : f32
    %203 = vector.broadcast %cst_93 : f32 to vector<8x32xf32>
    %c1_94 = arith.constant 1 : index
    %c0_95 = arith.constant 0 : index
    %c0_96 = arith.constant 0 : index
    %c0_97 = arith.constant 0 : index
    %c0_98 = arith.constant 0 : index
    %204 = vector.load %arg4[%c1_94, %c0_95, %c0_96, %c0_97, %c0_98] : memref<2x3x2x32x16xbf16, #tpu.memory_space<vmem>>, vector<1x1x1x32x16xbf16>
    %205 = vector.shape_cast %204 : vector<1x1x1x32x16xbf16> to vector<32x16xbf16>
    %cst_99 = arith.constant dense<0.000000e+00> : vector<8x16xf32>
    %206 = tpu.matmul %202, %205, %cst_99 {dimension_numbers = #tpu.dot_dimension_numbers<[1], [0], [0], [1], [0, 0, 1, 1], [], []>} : vector<8x32xbf16>, vector<32x16xbf16>, vector<8x16xf32> -> vector<8x16xf32>
    %207 = vector.extract_strided_slice %201 {offsets = [0, 0], sizes = [1, 16], strides = [1, 1]} : vector<10x32xf32> to vector<1x16xf32>
    %208 = vector.broadcast %207 : vector<1x16xf32> to vector<8x16xf32>
    %209 = arith.addf %206, %208 : vector<8x16xf32>
    %c1_100 = arith.constant 1 : index
    %c1_101 = arith.constant 1 : index
    %c0_102 = arith.constant 0 : index
    %c0_103 = arith.constant 0 : index
    %c0_104 = arith.constant 0 : index
    %210 = vector.load %arg4[%c1_100, %c1_101, %c0_102, %c0_103, %c0_104] : memref<2x3x2x32x16xbf16, #tpu.memory_space<vmem>>, vector<1x1x1x32x16xbf16>
    %211 = vector.shape_cast %210 : vector<1x1x1x32x16xbf16> to vector<32x16xbf16>
    %cst_105 = arith.constant dense<0.000000e+00> : vector<8x16xf32>
    %212 = tpu.matmul %202, %211, %cst_105 {dimension_numbers = #tpu.dot_dimension_numbers<[1], [0], [0], [1], [0, 0, 1, 1], [], []>} : vector<8x32xbf16>, vector<32x16xbf16>, vector<8x16xf32> -> vector<8x16xf32>
    %213 = vector.extract_strided_slice %201 {offsets = [1, 0], sizes = [1, 16], strides = [1, 1]} : vector<10x32xf32> to vector<1x16xf32>
    %214 = vector.broadcast %213 : vector<1x16xf32> to vector<8x16xf32>
    %215 = arith.addf %212, %214 : vector<8x16xf32>
    %c1_106 = arith.constant 1 : index
    %c2_107 = arith.constant 2 : index
    %c0_108 = arith.constant 0 : index
    %c0_109 = arith.constant 0 : index
    %c0_110 = arith.constant 0 : index
    %216 = vector.load %arg4[%c1_106, %c2_107, %c0_108, %c0_109, %c0_110] : memref<2x3x2x32x16xbf16, #tpu.memory_space<vmem>>, vector<1x1x1x32x16xbf16>
    %217 = vector.shape_cast %216 : vector<1x1x1x32x16xbf16> to vector<32x16xbf16>
    %cst_111 = arith.constant dense<0.000000e+00> : vector<8x16xf32>
    %218 = tpu.matmul %202, %217, %cst_111 {dimension_numbers = #tpu.dot_dimension_numbers<[1], [0], [0], [1], [0, 0, 1, 1], [], []>} : vector<8x32xbf16>, vector<32x16xbf16>, vector<8x16xf32> -> vector<8x16xf32>
    %219 = vector.extract_strided_slice %201 {offsets = [2, 0], sizes = [1, 16], strides = [1, 1]} : vector<10x32xf32> to vector<1x16xf32>
    %220 = vector.broadcast %219 : vector<1x16xf32> to vector<8x16xf32>
    %221 = arith.addf %218, %220 : vector<8x16xf32>
    %222 = arith.truncf %209 : vector<8x16xf32> to vector<8x16xbf16>
    %223 = vector.shape_cast %222 : vector<8x16xbf16> to vector<1x8x16xbf16>
    %224 = arith.truncf %215 : vector<8x16xf32> to vector<8x16xbf16>
    %225 = vector.shape_cast %224 : vector<8x16xbf16> to vector<1x8x16xbf16>
    %226 = arith.truncf %221 : vector<8x16xf32> to vector<8x16xbf16>
    %227 = vector.shape_cast %226 : vector<8x16xbf16> to vector<1x8x16xbf16>
    "tpu.trace_start"() <{level = 10 : i32, message = "bqd,bkd->bqk"}> : () -> ()
    %cst_112 = arith.constant dense<0.000000e+00> : vector<1x8x8xf32>
    %228 = tpu.matmul %223, %225, %cst_112 {dimension_numbers = #tpu.dot_dimension_numbers<[2], [2], [1], [1], [0, 0, 0, 1, 1, 1], [0], [0]>} : vector<1x8x16xbf16>, vector<1x8x16xbf16>, vector<1x8x8xf32> -> vector<1x8x8xf32>
    "tpu.trace_stop"() : () -> ()
    %cst_113 = arith.constant dense<0xFF800000> : vector<1x8xf32>
    %229 = vector.multi_reduction <maximumf>, %228, %cst_113 [2] : vector<1x8x8xf32> to vector<1x8xf32>
    %230 = vector.shape_cast %229 : vector<1x8xf32> to vector<1x8x1xf32>
    %231 = vector.broadcast %230 : vector<1x8x1xf32> to vector<1x8x8xf32>
    %232 = arith.subf %228, %231 : vector<1x8x8xf32>
    %233 = math.exp %232 : vector<1x8x8xf32>
    %cst_114 = arith.constant dense<0.000000e+00> : vector<1x8xf32>
    %234 = vector.multi_reduction <add>, %233, %cst_114 [2] : vector<1x8x8xf32> to vector<1x8xf32>
    %235 = vector.shape_cast %234 : vector<1x8xf32> to vector<1x8x1xf32>
    %236 = tpu.reciprocal %235 {approx = true} : vector<1x8x1xf32> -> vector<1x8x1xf32>
    %237 = vector.broadcast %236 : vector<1x8x1xf32> to vector<1x8x8xf32>
    %238 = arith.mulf %233, %237 : vector<1x8x8xf32>
    %239 = arith.truncf %238 : vector<1x8x8xf32> to vector<1x8x8xbf16>
    "tpu.trace_start"() <{level = 10 : i32, message = "bqk,bkd->bqd"}> : () -> ()
    %cst_115 = arith.constant dense<0.000000e+00> : vector<1x8x16xf32>
    %240 = tpu.matmul %239, %227, %cst_115 {dimension_numbers = #tpu.dot_dimension_numbers<[2], [1], [1], [2], [0, 0, 0, 1, 1, 2], [0], [0]>} : vector<1x8x8xbf16>, vector<1x8x16xbf16>, vector<1x8x16xf32> -> vector<1x8x16xf32>
    "tpu.trace_stop"() : () -> ()
    %241 = vector.shape_cast %240 : vector<1x8x16xf32> to vector<8x16xf32>
    %242 = arith.truncf %241 : vector<8x16xf32> to vector<8x16xbf16>
    %c1_116 = arith.constant 1 : index
    %c0_117 = arith.constant 0 : index
    %c0_118 = arith.constant 0 : index
    %c0_119 = arith.constant 0 : index
    %243 = vector.load %arg5[%c1_116, %c0_117, %c0_118, %c0_119] : memref<2x2x16x32xbf16, #tpu.memory_space<vmem>>, vector<1x1x16x32xbf16>
    %244 = vector.shape_cast %243 : vector<1x1x16x32xbf16> to vector<16x32xbf16>
    %cst_120 = arith.constant dense<0.000000e+00> : vector<8x32xf32>
    %245 = tpu.matmul %242, %244, %cst_120 {dimension_numbers = #tpu.dot_dimension_numbers<[1], [0], [0], [1], [0, 0, 1, 1], [], []>} : vector<8x16xbf16>, vector<16x32xbf16>, vector<8x32xf32> -> vector<8x32xf32>
    %246 = arith.addf %203, %245 : vector<8x32xf32>
    %c1_121 = arith.constant 1 : index
    %c0_122 = arith.constant 0 : index
    %c1_123 = arith.constant 1 : index
    %c0_124 = arith.constant 0 : index
    %c0_125 = arith.constant 0 : index
    %247 = vector.load %arg4[%c1_121, %c0_122, %c1_123, %c0_124, %c0_125] : memref<2x3x2x32x16xbf16, #tpu.memory_space<vmem>>, vector<1x1x1x32x16xbf16>
    %248 = vector.shape_cast %247 : vector<1x1x1x32x16xbf16> to vector<32x16xbf16>
    %cst_126 = arith.constant dense<0.000000e+00> : vector<8x16xf32>
    %249 = tpu.matmul %202, %248, %cst_126 {dimension_numbers = #tpu.dot_dimension_numbers<[1], [0], [0], [1], [0, 0, 1, 1], [], []>} : vector<8x32xbf16>, vector<32x16xbf16>, vector<8x16xf32> -> vector<8x16xf32>
    %250 = vector.extract_strided_slice %201 {offsets = [0, 16], sizes = [1, 16], strides = [1, 1]} : vector<10x32xf32> to vector<1x16xf32>
    %251 = vector.broadcast %250 : vector<1x16xf32> to vector<8x16xf32>
    %252 = arith.addf %249, %251 : vector<8x16xf32>
    %c1_127 = arith.constant 1 : index
    %c1_128 = arith.constant 1 : index
    %c1_129 = arith.constant 1 : index
    %c0_130 = arith.constant 0 : index
    %c0_131 = arith.constant 0 : index
    %253 = vector.load %arg4[%c1_127, %c1_128, %c1_129, %c0_130, %c0_131] : memref<2x3x2x32x16xbf16, #tpu.memory_space<vmem>>, vector<1x1x1x32x16xbf16>
    %254 = vector.shape_cast %253 : vector<1x1x1x32x16xbf16> to vector<32x16xbf16>
    %cst_132 = arith.constant dense<0.000000e+00> : vector<8x16xf32>
    %255 = tpu.matmul %202, %254, %cst_132 {dimension_numbers = #tpu.dot_dimension_numbers<[1], [0], [0], [1], [0, 0, 1, 1], [], []>} : vector<8x32xbf16>, vector<32x16xbf16>, vector<8x16xf32> -> vector<8x16xf32>
    %256 = vector.extract_strided_slice %201 {offsets = [1, 16], sizes = [1, 16], strides = [1, 1]} : vector<10x32xf32> to vector<1x16xf32>
    %257 = vector.broadcast %256 : vector<1x16xf32> to vector<8x16xf32>
    %258 = arith.addf %255, %257 : vector<8x16xf32>
    %c1_133 = arith.constant 1 : index
    %c2_134 = arith.constant 2 : index
    %c1_135 = arith.constant 1 : index
    %c0_136 = arith.constant 0 : index
    %c0_137 = arith.constant 0 : index
    %259 = vector.load %arg4[%c1_133, %c2_134, %c1_135, %c0_136, %c0_137] : memref<2x3x2x32x16xbf16, #tpu.memory_space<vmem>>, vector<1x1x1x32x16xbf16>
    %260 = vector.shape_cast %259 : vector<1x1x1x32x16xbf16> to vector<32x16xbf16>
    %cst_138 = arith.constant dense<0.000000e+00> : vector<8x16xf32>
    %261 = tpu.matmul %202, %260, %cst_138 {dimension_numbers = #tpu.dot_dimension_numbers<[1], [0], [0], [1], [0, 0, 1, 1], [], []>} : vector<8x32xbf16>, vector<32x16xbf16>, vector<8x16xf32> -> vector<8x16xf32>
    %262 = vector.extract_strided_slice %201 {offsets = [2, 16], sizes = [1, 16], strides = [1, 1]} : vector<10x32xf32> to vector<1x16xf32>
    %263 = vector.broadcast %262 : vector<1x16xf32> to vector<8x16xf32>
    %264 = arith.addf %261, %263 : vector<8x16xf32>
    %265 = arith.truncf %252 : vector<8x16xf32> to vector<8x16xbf16>
    %266 = vector.shape_cast %265 : vector<8x16xbf16> to vector<1x8x16xbf16>
    %267 = arith.truncf %258 : vector<8x16xf32> to vector<8x16xbf16>
    %268 = vector.shape_cast %267 : vector<8x16xbf16> to vector<1x8x16xbf16>
    %269 = arith.truncf %264 : vector<8x16xf32> to vector<8x16xbf16>
    %270 = vector.shape_cast %269 : vector<8x16xbf16> to vector<1x8x16xbf16>
    "tpu.trace_start"() <{level = 10 : i32, message = "bqd,bkd->bqk"}> : () -> ()
    %cst_139 = arith.constant dense<0.000000e+00> : vector<1x8x8xf32>
    %271 = tpu.matmul %266, %268, %cst_139 {dimension_numbers = #tpu.dot_dimension_numbers<[2], [2], [1], [1], [0, 0, 0, 1, 1, 1], [0], [0]>} : vector<1x8x16xbf16>, vector<1x8x16xbf16>, vector<1x8x8xf32> -> vector<1x8x8xf32>
    "tpu.trace_stop"() : () -> ()
    %cst_140 = arith.constant dense<0xFF800000> : vector<1x8xf32>
    %272 = vector.multi_reduction <maximumf>, %271, %cst_140 [2] : vector<1x8x8xf32> to vector<1x8xf32>
    %273 = vector.shape_cast %272 : vector<1x8xf32> to vector<1x8x1xf32>
    %274 = vector.broadcast %273 : vector<1x8x1xf32> to vector<1x8x8xf32>
    %275 = arith.subf %271, %274 : vector<1x8x8xf32>
    %276 = math.exp %275 : vector<1x8x8xf32>
    %cst_141 = arith.constant dense<0.000000e+00> : vector<1x8xf32>
    %277 = vector.multi_reduction <add>, %276, %cst_141 [2] : vector<1x8x8xf32> to vector<1x8xf32>
    %278 = vector.shape_cast %277 : vector<1x8xf32> to vector<1x8x1xf32>
    %279 = tpu.reciprocal %278 {approx = true} : vector<1x8x1xf32> -> vector<1x8x1xf32>
    %280 = vector.broadcast %279 : vector<1x8x1xf32> to vector<1x8x8xf32>
    %281 = arith.mulf %276, %280 : vector<1x8x8xf32>
    %282 = arith.truncf %281 : vector<1x8x8xf32> to vector<1x8x8xbf16>
    "tpu.trace_start"() <{level = 10 : i32, message = "bqk,bkd->bqd"}> : () -> ()
    %cst_142 = arith.constant dense<0.000000e+00> : vector<1x8x16xf32>
    %283 = tpu.matmul %282, %270, %cst_142 {dimension_numbers = #tpu.dot_dimension_numbers<[2], [1], [1], [2], [0, 0, 0, 1, 1, 2], [0], [0]>} : vector<1x8x8xbf16>, vector<1x8x16xbf16>, vector<1x8x16xf32> -> vector<1x8x16xf32>
    "tpu.trace_stop"() : () -> ()
    %284 = vector.shape_cast %283 : vector<1x8x16xf32> to vector<8x16xf32>
    %285 = arith.truncf %284 : vector<8x16xf32> to vector<8x16xbf16>
    %c1_143 = arith.constant 1 : index
    %c1_144 = arith.constant 1 : index
    %c0_145 = arith.constant 0 : index
    %c0_146 = arith.constant 0 : index
    %286 = vector.load %arg5[%c1_143, %c1_144, %c0_145, %c0_146] : memref<2x2x16x32xbf16, #tpu.memory_space<vmem>>, vector<1x1x16x32xbf16>
    %287 = vector.shape_cast %286 : vector<1x1x16x32xbf16> to vector<16x32xbf16>
    %cst_147 = arith.constant dense<0.000000e+00> : vector<8x32xf32>
    %288 = tpu.matmul %285, %287, %cst_147 {dimension_numbers = #tpu.dot_dimension_numbers<[1], [0], [0], [1], [0, 0, 1, 1], [], []>} : vector<8x16xbf16>, vector<16x32xbf16>, vector<8x32xf32> -> vector<8x32xf32>
    %289 = arith.addf %246, %288 : vector<8x32xf32>
    %290 = vector.extract_strided_slice %201 {offsets = [3, 0], sizes = [1, 32], strides = [1, 1]} : vector<10x32xf32> to vector<1x32xf32>
    %291 = vector.broadcast %290 : vector<1x32xf32> to vector<8x32xf32>
    %292 = arith.addf %289, %291 : vector<8x32xf32>
    %293 = arith.addf %199, %292 : vector<8x32xf32>
    %294 = vector.extract_strided_slice %201 {offsets = [6, 0], sizes = [1, 32], strides = [1, 1]} : vector<10x32xf32> to vector<1x32xf32>
    %295 = vector.extract_strided_slice %201 {offsets = [7, 0], sizes = [1, 32], strides = [1, 1]} : vector<10x32xf32> to vector<1x32xf32>
    %cst_148 = arith.constant dense<0.000000e+00> : vector<8xf32>
    %296 = vector.multi_reduction <add>, %293, %cst_148 [1] : vector<8x32xf32> to vector<8xf32>
    %297 = vector.shape_cast %296 : vector<8xf32> to vector<8x1xf32>
    %cst_149 = arith.constant 3.200000e+01 : f32
    %298 = vector.broadcast %cst_149 : f32 to vector<8x1xf32>
    %299 = arith.divf %297, %298 : vector<8x1xf32>
    %300 = vector.broadcast %299 : vector<8x1xf32> to vector<8x32xf32>
    %301 = arith.subf %293, %300 : vector<8x32xf32>
    %302 = arith.mulf %301, %301 : vector<8x32xf32>
    %cst_150 = arith.constant dense<0.000000e+00> : vector<8xf32>
    %303 = vector.multi_reduction <add>, %302, %cst_150 [1] : vector<8x32xf32> to vector<8xf32>
    %304 = vector.shape_cast %303 : vector<8xf32> to vector<8x1xf32>
    %cst_151 = arith.constant 3.200000e+01 : f32
    %305 = vector.broadcast %cst_151 : f32 to vector<8x1xf32>
    %306 = arith.divf %304, %305 : vector<8x1xf32>
    %307 = vector.broadcast %299 : vector<8x1xf32> to vector<8x32xf32>
    %308 = arith.subf %293, %307 : vector<8x32xf32>
    %cst_152 = arith.constant 9.99999974E-6 : f32
    %309 = vector.broadcast %cst_152 : f32 to vector<8x1xf32>
    %310 = arith.addf %306, %309 : vector<8x1xf32>
    %311 = math.rsqrt %310 : vector<8x1xf32>
    %312 = vector.broadcast %311 : vector<8x1xf32> to vector<8x32xf32>
    %313 = arith.mulf %308, %312 : vector<8x32xf32>
    %314 = vector.broadcast %294 : vector<1x32xf32> to vector<8x32xf32>
    %315 = arith.mulf %314, %313 : vector<8x32xf32>
    %316 = vector.broadcast %295 : vector<1x32xf32> to vector<8x32xf32>
    %317 = arith.addf %315, %316 : vector<8x32xf32>
    %c1_153 = arith.constant 1 : index
    %c0_154 = arith.constant 0 : index
    %c0_155 = arith.constant 0 : index
    %318 = vector.load %arg6[%c1_153, %c0_154, %c0_155] : memref<2x32x32xbf16, #tpu.memory_space<vmem>>, vector<1x32x32xbf16>
    %319 = vector.shape_cast %318 : vector<1x32x32xbf16> to vector<32x32xbf16>
    %320 = arith.truncf %317 : vector<8x32xf32> to vector<8x32xbf16>
    %cst_156 = arith.constant dense<0.000000e+00> : vector<8x32xf32>
    %321 = tpu.matmul %320, %319, %cst_156 {dimension_numbers = #tpu.dot_dimension_numbers<[1], [0], [0], [1], [0, 0, 1, 1], [], []>} : vector<8x32xbf16>, vector<32x32xbf16>, vector<8x32xf32> -> vector<8x32xf32>
    %322 = vector.extract_strided_slice %201 {offsets = [4, 0], sizes = [1, 32], strides = [1, 1]} : vector<10x32xf32> to vector<1x32xf32>
    %323 = vector.broadcast %322 : vector<1x32xf32> to vector<8x32xf32>
    %324 = arith.addf %321, %323 : vector<8x32xf32>
    %cst_157 = arith.constant 0.000000e+00 : f32
    %325 = vector.broadcast %cst_157 : f32 to vector<8x32xf32>
    %326 = arith.maximumf %324, %325 : vector<8x32xf32>
    %c1_158 = arith.constant 1 : index
    %c0_159 = arith.constant 0 : index
    %c0_160 = arith.constant 0 : index
    %327 = vector.load %arg7[%c1_158, %c0_159, %c0_160] : memref<2x32x32xbf16, #tpu.memory_space<vmem>>, vector<1x32x32xbf16>
    %328 = vector.shape_cast %327 : vector<1x32x32xbf16> to vector<32x32xbf16>
    %329 = arith.truncf %326 : vector<8x32xf32> to vector<8x32xbf16>
    %cst_161 = arith.constant dense<0.000000e+00> : vector<8x32xf32>
    %330 = tpu.matmul %329, %328, %cst_161 {dimension_numbers = #tpu.dot_dimension_numbers<[1], [0], [0], [1], [0, 0, 1, 1], [], []>} : vector<8x32xbf16>, vector<32x32xbf16>, vector<8x32xf32> -> vector<8x32xf32>
    %331 = vector.extract_strided_slice %201 {offsets = [5, 0], sizes = [1, 32], strides = [1, 1]} : vector<10x32xf32> to vector<1x32xf32>
    %332 = vector.broadcast %331 : vector<1x32xf32> to vector<8x32xf32>
    %333 = arith.addf %330, %332 : vector<8x32xf32>
    %334 = arith.addf %317, %333 : vector<8x32xf32>
    %335 = vector.extract_strided_slice %201 {offsets = [8, 0], sizes = [1, 32], strides = [1, 1]} : vector<10x32xf32> to vector<1x32xf32>
    %336 = vector.extract_strided_slice %201 {offsets = [9, 0], sizes = [1, 32], strides = [1, 1]} : vector<10x32xf32> to vector<1x32xf32>
    %cst_162 = arith.constant dense<0.000000e+00> : vector<8xf32>
    %337 = vector.multi_reduction <add>, %334, %cst_162 [1] : vector<8x32xf32> to vector<8xf32>
    %338 = vector.shape_cast %337 : vector<8xf32> to vector<8x1xf32>
    %cst_163 = arith.constant 3.200000e+01 : f32
    %339 = vector.broadcast %cst_163 : f32 to vector<8x1xf32>
    %340 = arith.divf %338, %339 : vector<8x1xf32>
    %341 = vector.broadcast %340 : vector<8x1xf32> to vector<8x32xf32>
    %342 = arith.subf %334, %341 : vector<8x32xf32>
    %343 = arith.mulf %342, %342 : vector<8x32xf32>
    %cst_164 = arith.constant dense<0.000000e+00> : vector<8xf32>
    %344 = vector.multi_reduction <add>, %343, %cst_164 [1] : vector<8x32xf32> to vector<8xf32>
    %345 = vector.shape_cast %344 : vector<8xf32> to vector<8x1xf32>
    %cst_165 = arith.constant 3.200000e+01 : f32
    %346 = vector.broadcast %cst_165 : f32 to vector<8x1xf32>
    %347 = arith.divf %345, %346 : vector<8x1xf32>
    %348 = vector.broadcast %340 : vector<8x1xf32> to vector<8x32xf32>
    %349 = arith.subf %334, %348 : vector<8x32xf32>
    %cst_166 = arith.constant 9.99999974E-6 : f32
    %350 = vector.broadcast %cst_166 : f32 to vector<8x1xf32>
    %351 = arith.addf %347, %350 : vector<8x1xf32>
    %352 = math.rsqrt %351 : vector<8x1xf32>
    %353 = vector.broadcast %352 : vector<8x1xf32> to vector<8x32xf32>
    %354 = arith.mulf %349, %353 : vector<8x32xf32>
    %355 = vector.broadcast %335 : vector<1x32xf32> to vector<8x32xf32>
    %356 = arith.mulf %355, %354 : vector<8x32xf32>
    %357 = vector.broadcast %336 : vector<1x32xf32> to vector<8x32xf32>
    %358 = arith.addf %356, %357 : vector<8x32xf32>
    %359 = arith.addf %358, %40 : vector<8x32xf32>
    %360 = vector.shape_cast %359 : vector<8x32xf32> to vector<1x8x32xf32>
    %361 = tpu.transpose %360, [1, 0, 2] : vector<1x8x32xf32> -> vector<8x1x32xf32>
    %362 = vector.shape_cast %361 : vector<8x1x32xf32> to vector<8x32xf32>
    %c0_167 = arith.constant 0 : index
    %c0_168 = arith.constant 0 : index
    %363 = vector.load %arg10[%c0_167, %c0_168] : memref<32x128xbf16, #tpu.memory_space<vmem>>, vector<32x128xbf16>
    %364 = arith.truncf %362 : vector<8x32xf32> to vector<8x32xbf16>
    %cst_169 = arith.constant dense<0.000000e+00> : vector<8x128xf32>
    %365 = tpu.matmul %364, %363, %cst_169 {dimension_numbers = #tpu.dot_dimension_numbers<[1], [0], [0], [1], [0, 0, 1, 1], [], []>} : vector<8x32xbf16>, vector<32x128xbf16>, vector<8x128xf32> -> vector<8x128xf32>
    %c0_170 = arith.constant 0 : index
    %c0_171 = arith.constant 0 : index
    %366 = vector.load %arg12[%c0_170, %c0_171] : memref<1x128xf32, #tpu.memory_space<vmem>>, vector<1x128xf32>
    %367 = vector.broadcast %366 : vector<1x128xf32> to vector<8x128xf32>
    %368 = arith.addf %365, %367 : vector<8x128xf32>
    %c0_172 = arith.constant 0 : index
    %c0_173 = arith.constant 0 : index
    %369 = vector.load %arg11[%c0_172, %c0_173] : memref<32x128xbf16, #tpu.memory_space<vmem>>, vector<32x128xbf16>
    %cst_174 = arith.constant 0.000000e+00 : f32
    %370 = vector.broadcast %cst_174 : f32 to vector<1x32xf32>
    %cst_175 = arith.constant 0.000000e+00 : f32
    %371 = vector.broadcast %cst_175 : f32 to vector<1x32xf32>
    %372 = vector.extract_strided_slice %368 {offsets = [0, 0], sizes = [1, 128], strides = [1, 1]} : vector<8x128xf32> to vector<1x128xf32>
    %373 = arith.truncf %370 : vector<1x32xf32> to vector<1x32xbf16>
    %cst_176 = arith.constant dense<0.000000e+00> : vector<1x128xf32>
    %374 = tpu.matmul %373, %369, %cst_176 {dimension_numbers = #tpu.dot_dimension_numbers<[1], [0], [0], [1], [0, 0, 1, 1], [], []>} : vector<1x32xbf16>, vector<32x128xbf16>, vector<1x128xf32> -> vector<1x128xf32>
    %375 = arith.addf %372, %374 : vector<1x128xf32>
    %376 = vector.extract_strided_slice %375 {offsets = [0, 0], sizes = [1, 96], strides = [1, 1]} : vector<1x128xf32> to vector<1x96xf32>
    %377 = arith.negf %376 : vector<1x96xf32>
    %378 = math.exp %377 : vector<1x96xf32>
    %cst_177 = arith.constant 1.000000e+00 : f32
    %379 = vector.broadcast %cst_177 : f32 to vector<1x96xf32>
    %380 = arith.addf %379, %378 : vector<1x96xf32>
    %381 = arith.divf %379, %380 : vector<1x96xf32>
    %382 = vector.extract_strided_slice %381 {offsets = [0, 0], sizes = [1, 32], strides = [1, 1]} : vector<1x96xf32> to vector<1x32xf32>
    %383 = vector.extract_strided_slice %381 {offsets = [0, 32], sizes = [1, 32], strides = [1, 1]} : vector<1x96xf32> to vector<1x32xf32>
    %384 = vector.extract_strided_slice %381 {offsets = [0, 64], sizes = [1, 32], strides = [1, 1]} : vector<1x96xf32> to vector<1x32xf32>
    %385 = vector.extract_strided_slice %375 {offsets = [0, 96], sizes = [1, 32], strides = [1, 1]} : vector<1x128xf32> to vector<1x32xf32>
    %386 = math.tanh %385 : vector<1x32xf32>
    %387 = arith.mulf %383, %371 : vector<1x32xf32>
    %388 = arith.mulf %382, %386 : vector<1x32xf32>
    %389 = arith.addf %387, %388 : vector<1x32xf32>
    %390 = math.tanh %389 : vector<1x32xf32>
    %391 = arith.mulf %384, %390 : vector<1x32xf32>
    %392 = vector.extract_strided_slice %368 {offsets = [1, 0], sizes = [1, 128], strides = [1, 1]} : vector<8x128xf32> to vector<1x128xf32>
    %393 = arith.truncf %391 : vector<1x32xf32> to vector<1x32xbf16>
    %cst_178 = arith.constant dense<0.000000e+00> : vector<1x128xf32>
    %394 = tpu.matmul %393, %369, %cst_178 {dimension_numbers = #tpu.dot_dimension_numbers<[1], [0], [0], [1], [0, 0, 1, 1], [], []>} : vector<1x32xbf16>, vector<32x128xbf16>, vector<1x128xf32> -> vector<1x128xf32>
    %395 = arith.addf %392, %394 : vector<1x128xf32>
    %396 = vector.extract_strided_slice %395 {offsets = [0, 0], sizes = [1, 96], strides = [1, 1]} : vector<1x128xf32> to vector<1x96xf32>
    %397 = arith.negf %396 : vector<1x96xf32>
    %398 = math.exp %397 : vector<1x96xf32>
    %cst_179 = arith.constant 1.000000e+00 : f32
    %399 = vector.broadcast %cst_179 : f32 to vector<1x96xf32>
    %400 = arith.addf %399, %398 : vector<1x96xf32>
    %401 = arith.divf %399, %400 : vector<1x96xf32>
    %402 = vector.extract_strided_slice %401 {offsets = [0, 0], sizes = [1, 32], strides = [1, 1]} : vector<1x96xf32> to vector<1x32xf32>
    %403 = vector.extract_strided_slice %401 {offsets = [0, 32], sizes = [1, 32], strides = [1, 1]} : vector<1x96xf32> to vector<1x32xf32>
    %404 = vector.extract_strided_slice %401 {offsets = [0, 64], sizes = [1, 32], strides = [1, 1]} : vector<1x96xf32> to vector<1x32xf32>
    %405 = vector.extract_strided_slice %395 {offsets = [0, 96], sizes = [1, 32], strides = [1, 1]} : vector<1x128xf32> to vector<1x32xf32>
    %406 = math.tanh %405 : vector<1x32xf32>
    %407 = arith.mulf %403, %389 : vector<1x32xf32>
    %408 = arith.mulf %402, %406 : vector<1x32xf32>
    %409 = arith.addf %407, %408 : vector<1x32xf32>
    %410 = math.tanh %409 : vector<1x32xf32>
    %411 = arith.mulf %404, %410 : vector<1x32xf32>
    %412 = vector.extract_strided_slice %368 {offsets = [2, 0], sizes = [1, 128], strides = [1, 1]} : vector<8x128xf32> to vector<1x128xf32>
    %413 = arith.truncf %411 : vector<1x32xf32> to vector<1x32xbf16>
    %cst_180 = arith.constant dense<0.000000e+00> : vector<1x128xf32>
    %414 = tpu.matmul %413, %369, %cst_180 {dimension_numbers = #tpu.dot_dimension_numbers<[1], [0], [0], [1], [0, 0, 1, 1], [], []>} : vector<1x32xbf16>, vector<32x128xbf16>, vector<1x128xf32> -> vector<1x128xf32>
    %415 = arith.addf %412, %414 : vector<1x128xf32>
    %416 = vector.extract_strided_slice %415 {offsets = [0, 0], sizes = [1, 96], strides = [1, 1]} : vector<1x128xf32> to vector<1x96xf32>
    %417 = arith.negf %416 : vector<1x96xf32>
    %418 = math.exp %417 : vector<1x96xf32>
    %cst_181 = arith.constant 1.000000e+00 : f32
    %419 = vector.broadcast %cst_181 : f32 to vector<1x96xf32>
    %420 = arith.addf %419, %418 : vector<1x96xf32>
    %421 = arith.divf %419, %420 : vector<1x96xf32>
    %422 = vector.extract_strided_slice %421 {offsets = [0, 0], sizes = [1, 32], strides = [1, 1]} : vector<1x96xf32> to vector<1x32xf32>
    %423 = vector.extract_strided_slice %421 {offsets = [0, 32], sizes = [1, 32], strides = [1, 1]} : vector<1x96xf32> to vector<1x32xf32>
    %424 = vector.extract_strided_slice %421 {offsets = [0, 64], sizes = [1, 32], strides = [1, 1]} : vector<1x96xf32> to vector<1x32xf32>
    %425 = vector.extract_strided_slice %415 {offsets = [0, 96], sizes = [1, 32], strides = [1, 1]} : vector<1x128xf32> to vector<1x32xf32>
    %426 = math.tanh %425 : vector<1x32xf32>
    %427 = arith.mulf %423, %409 : vector<1x32xf32>
    %428 = arith.mulf %422, %426 : vector<1x32xf32>
    %429 = arith.addf %427, %428 : vector<1x32xf32>
    %430 = math.tanh %429 : vector<1x32xf32>
    %431 = arith.mulf %424, %430 : vector<1x32xf32>
    %432 = vector.extract_strided_slice %368 {offsets = [3, 0], sizes = [1, 128], strides = [1, 1]} : vector<8x128xf32> to vector<1x128xf32>
    %433 = arith.truncf %431 : vector<1x32xf32> to vector<1x32xbf16>
    %cst_182 = arith.constant dense<0.000000e+00> : vector<1x128xf32>
    %434 = tpu.matmul %433, %369, %cst_182 {dimension_numbers = #tpu.dot_dimension_numbers<[1], [0], [0], [1], [0, 0, 1, 1], [], []>} : vector<1x32xbf16>, vector<32x128xbf16>, vector<1x128xf32> -> vector<1x128xf32>
    %435 = arith.addf %432, %434 : vector<1x128xf32>
    %436 = vector.extract_strided_slice %435 {offsets = [0, 0], sizes = [1, 96], strides = [1, 1]} : vector<1x128xf32> to vector<1x96xf32>
    %437 = arith.negf %436 : vector<1x96xf32>
    %438 = math.exp %437 : vector<1x96xf32>
    %cst_183 = arith.constant 1.000000e+00 : f32
    %439 = vector.broadcast %cst_183 : f32 to vector<1x96xf32>
    %440 = arith.addf %439, %438 : vector<1x96xf32>
    %441 = arith.divf %439, %440 : vector<1x96xf32>
    %442 = vector.extract_strided_slice %441 {offsets = [0, 0], sizes = [1, 32], strides = [1, 1]} : vector<1x96xf32> to vector<1x32xf32>
    %443 = vector.extract_strided_slice %441 {offsets = [0, 32], sizes = [1, 32], strides = [1, 1]} : vector<1x96xf32> to vector<1x32xf32>
    %444 = vector.extract_strided_slice %441 {offsets = [0, 64], sizes = [1, 32], strides = [1, 1]} : vector<1x96xf32> to vector<1x32xf32>
    %445 = vector.extract_strided_slice %435 {offsets = [0, 96], sizes = [1, 32], strides = [1, 1]} : vector<1x128xf32> to vector<1x32xf32>
    %446 = math.tanh %445 : vector<1x32xf32>
    %447 = arith.mulf %443, %429 : vector<1x32xf32>
    %448 = arith.mulf %442, %446 : vector<1x32xf32>
    %449 = arith.addf %447, %448 : vector<1x32xf32>
    %450 = math.tanh %449 : vector<1x32xf32>
    %451 = arith.mulf %444, %450 : vector<1x32xf32>
    %452 = vector.extract_strided_slice %368 {offsets = [4, 0], sizes = [1, 128], strides = [1, 1]} : vector<8x128xf32> to vector<1x128xf32>
    %453 = arith.truncf %451 : vector<1x32xf32> to vector<1x32xbf16>
    %cst_184 = arith.constant dense<0.000000e+00> : vector<1x128xf32>
    %454 = tpu.matmul %453, %369, %cst_184 {dimension_numbers = #tpu.dot_dimension_numbers<[1], [0], [0], [1], [0, 0, 1, 1], [], []>} : vector<1x32xbf16>, vector<32x128xbf16>, vector<1x128xf32> -> vector<1x128xf32>
    %455 = arith.addf %452, %454 : vector<1x128xf32>
    %456 = vector.extract_strided_slice %455 {offsets = [0, 0], sizes = [1, 96], strides = [1, 1]} : vector<1x128xf32> to vector<1x96xf32>
    %457 = arith.negf %456 : vector<1x96xf32>
    %458 = math.exp %457 : vector<1x96xf32>
    %cst_185 = arith.constant 1.000000e+00 : f32
    %459 = vector.broadcast %cst_185 : f32 to vector<1x96xf32>
    %460 = arith.addf %459, %458 : vector<1x96xf32>
    %461 = arith.divf %459, %460 : vector<1x96xf32>
    %462 = vector.extract_strided_slice %461 {offsets = [0, 0], sizes = [1, 32], strides = [1, 1]} : vector<1x96xf32> to vector<1x32xf32>
    %463 = vector.extract_strided_slice %461 {offsets = [0, 32], sizes = [1, 32], strides = [1, 1]} : vector<1x96xf32> to vector<1x32xf32>
    %464 = vector.extract_strided_slice %461 {offsets = [0, 64], sizes = [1, 32], strides = [1, 1]} : vector<1x96xf32> to vector<1x32xf32>
    %465 = vector.extract_strided_slice %455 {offsets = [0, 96], sizes = [1, 32], strides = [1, 1]} : vector<1x128xf32> to vector<1x32xf32>
    %466 = math.tanh %465 : vector<1x32xf32>
    %467 = arith.mulf %463, %449 : vector<1x32xf32>
    %468 = arith.mulf %462, %466 : vector<1x32xf32>
    %469 = arith.addf %467, %468 : vector<1x32xf32>
    %470 = math.tanh %469 : vector<1x32xf32>
    %471 = arith.mulf %464, %470 : vector<1x32xf32>
    %472 = vector.extract_strided_slice %368 {offsets = [5, 0], sizes = [1, 128], strides = [1, 1]} : vector<8x128xf32> to vector<1x128xf32>
    %473 = arith.truncf %471 : vector<1x32xf32> to vector<1x32xbf16>
    %cst_186 = arith.constant dense<0.000000e+00> : vector<1x128xf32>
    %474 = tpu.matmul %473, %369, %cst_186 {dimension_numbers = #tpu.dot_dimension_numbers<[1], [0], [0], [1], [0, 0, 1, 1], [], []>} : vector<1x32xbf16>, vector<32x128xbf16>, vector<1x128xf32> -> vector<1x128xf32>
    %475 = arith.addf %472, %474 : vector<1x128xf32>
    %476 = vector.extract_strided_slice %475 {offsets = [0, 0], sizes = [1, 96], strides = [1, 1]} : vector<1x128xf32> to vector<1x96xf32>
    %477 = arith.negf %476 : vector<1x96xf32>
    %478 = math.exp %477 : vector<1x96xf32>
    %cst_187 = arith.constant 1.000000e+00 : f32
    %479 = vector.broadcast %cst_187 : f32 to vector<1x96xf32>
    %480 = arith.addf %479, %478 : vector<1x96xf32>
    %481 = arith.divf %479, %480 : vector<1x96xf32>
    %482 = vector.extract_strided_slice %481 {offsets = [0, 0], sizes = [1, 32], strides = [1, 1]} : vector<1x96xf32> to vector<1x32xf32>
    %483 = vector.extract_strided_slice %481 {offsets = [0, 32], sizes = [1, 32], strides = [1, 1]} : vector<1x96xf32> to vector<1x32xf32>
    %484 = vector.extract_strided_slice %481 {offsets = [0, 64], sizes = [1, 32], strides = [1, 1]} : vector<1x96xf32> to vector<1x32xf32>
    %485 = vector.extract_strided_slice %475 {offsets = [0, 96], sizes = [1, 32], strides = [1, 1]} : vector<1x128xf32> to vector<1x32xf32>
    %486 = math.tanh %485 : vector<1x32xf32>
    %487 = arith.mulf %483, %469 : vector<1x32xf32>
    %488 = arith.mulf %482, %486 : vector<1x32xf32>
    %489 = arith.addf %487, %488 : vector<1x32xf32>
    %490 = math.tanh %489 : vector<1x32xf32>
    %491 = arith.mulf %484, %490 : vector<1x32xf32>
    %492 = vector.extract_strided_slice %368 {offsets = [6, 0], sizes = [1, 128], strides = [1, 1]} : vector<8x128xf32> to vector<1x128xf32>
    %493 = arith.truncf %491 : vector<1x32xf32> to vector<1x32xbf16>
    %cst_188 = arith.constant dense<0.000000e+00> : vector<1x128xf32>
    %494 = tpu.matmul %493, %369, %cst_188 {dimension_numbers = #tpu.dot_dimension_numbers<[1], [0], [0], [1], [0, 0, 1, 1], [], []>} : vector<1x32xbf16>, vector<32x128xbf16>, vector<1x128xf32> -> vector<1x128xf32>
    %495 = arith.addf %492, %494 : vector<1x128xf32>
    %496 = vector.extract_strided_slice %495 {offsets = [0, 0], sizes = [1, 96], strides = [1, 1]} : vector<1x128xf32> to vector<1x96xf32>
    %497 = arith.negf %496 : vector<1x96xf32>
    %498 = math.exp %497 : vector<1x96xf32>
    %cst_189 = arith.constant 1.000000e+00 : f32
    %499 = vector.broadcast %cst_189 : f32 to vector<1x96xf32>
    %500 = arith.addf %499, %498 : vector<1x96xf32>
    %501 = arith.divf %499, %500 : vector<1x96xf32>
    %502 = vector.extract_strided_slice %501 {offsets = [0, 0], sizes = [1, 32], strides = [1, 1]} : vector<1x96xf32> to vector<1x32xf32>
    %503 = vector.extract_strided_slice %501 {offsets = [0, 32], sizes = [1, 32], strides = [1, 1]} : vector<1x96xf32> to vector<1x32xf32>
    %504 = vector.extract_strided_slice %501 {offsets = [0, 64], sizes = [1, 32], strides = [1, 1]} : vector<1x96xf32> to vector<1x32xf32>
    %505 = vector.extract_strided_slice %495 {offsets = [0, 96], sizes = [1, 32], strides = [1, 1]} : vector<1x128xf32> to vector<1x32xf32>
    %506 = math.tanh %505 : vector<1x32xf32>
    %507 = arith.mulf %503, %489 : vector<1x32xf32>
    %508 = arith.mulf %502, %506 : vector<1x32xf32>
    %509 = arith.addf %507, %508 : vector<1x32xf32>
    %510 = math.tanh %509 : vector<1x32xf32>
    %511 = arith.mulf %504, %510 : vector<1x32xf32>
    %512 = vector.extract_strided_slice %368 {offsets = [7, 0], sizes = [1, 128], strides = [1, 1]} : vector<8x128xf32> to vector<1x128xf32>
    %513 = arith.truncf %511 : vector<1x32xf32> to vector<1x32xbf16>
    %cst_190 = arith.constant dense<0.000000e+00> : vector<1x128xf32>
    %514 = tpu.matmul %513, %369, %cst_190 {dimension_numbers = #tpu.dot_dimension_numbers<[1], [0], [0], [1], [0, 0, 1, 1], [], []>} : vector<1x32xbf16>, vector<32x128xbf16>, vector<1x128xf32> -> vector<1x128xf32>
    %515 = arith.addf %512, %514 : vector<1x128xf32>
    %516 = vector.extract_strided_slice %515 {offsets = [0, 0], sizes = [1, 96], strides = [1, 1]} : vector<1x128xf32> to vector<1x96xf32>
    %517 = arith.negf %516 : vector<1x96xf32>
    %518 = math.exp %517 : vector<1x96xf32>
    %cst_191 = arith.constant 1.000000e+00 : f32
    %519 = vector.broadcast %cst_191 : f32 to vector<1x96xf32>
    %520 = arith.addf %519, %518 : vector<1x96xf32>
    %521 = arith.divf %519, %520 : vector<1x96xf32>
    %522 = vector.extract_strided_slice %521 {offsets = [0, 0], sizes = [1, 32], strides = [1, 1]} : vector<1x96xf32> to vector<1x32xf32>
    %523 = vector.extract_strided_slice %521 {offsets = [0, 32], sizes = [1, 32], strides = [1, 1]} : vector<1x96xf32> to vector<1x32xf32>
    %524 = vector.extract_strided_slice %521 {offsets = [0, 64], sizes = [1, 32], strides = [1, 1]} : vector<1x96xf32> to vector<1x32xf32>
    %525 = vector.extract_strided_slice %515 {offsets = [0, 96], sizes = [1, 32], strides = [1, 1]} : vector<1x128xf32> to vector<1x32xf32>
    %526 = math.tanh %525 : vector<1x32xf32>
    %527 = arith.mulf %523, %509 : vector<1x32xf32>
    %528 = arith.mulf %522, %526 : vector<1x32xf32>
    %529 = arith.addf %527, %528 : vector<1x32xf32>
    %530 = math.tanh %529 : vector<1x32xf32>
    %531 = arith.mulf %524, %530 : vector<1x32xf32>
    %c0_192 = arith.constant 0 : index
    %c0_193 = arith.constant 0 : index
    %532 = vector.load %arg13[%c0_192, %c0_193] : memref<32x32xbf16, #tpu.memory_space<vmem>>, vector<32x32xbf16>
    %533 = vector.extract_strided_slice %0 {offsets = [4, 0], sizes = [1, 32], strides = [1, 1]} : vector<7x32xf32> to vector<1x32xf32>
    %534 = vector.extract_strided_slice %0 {offsets = [5, 0], sizes = [1, 32], strides = [1, 1]} : vector<7x32xf32> to vector<1x32xf32>
    %535 = vector.extract_strided_slice %0 {offsets = [6, 0], sizes = [1, 32], strides = [1, 1]} : vector<7x32xf32> to vector<1x32xf32>
    %536 = arith.truncf %531 : vector<1x32xf32> to vector<1x32xbf16>
    %cst_194 = arith.constant dense<0.000000e+00> : vector<1x32xf32>
    %537 = tpu.matmul %536, %532, %cst_194 {dimension_numbers = #tpu.dot_dimension_numbers<[1], [0], [0], [1], [0, 0, 1, 1], [], []>} : vector<1x32xbf16>, vector<32x32xbf16>, vector<1x32xf32> -> vector<1x32xf32>
    %538 = arith.addf %537, %533 : vector<1x32xf32>
    %cst_195 = arith.constant dense<0.000000e+00> : vector<1xf32>
    %539 = vector.multi_reduction <add>, %538, %cst_195 [1] : vector<1x32xf32> to vector<1xf32>
    %540 = vector.shape_cast %539 : vector<1xf32> to vector<1x1xf32>
    %cst_196 = arith.constant 3.200000e+01 : f32
    %541 = vector.broadcast %cst_196 : f32 to vector<1x1xf32>
    %542 = arith.divf %540, %541 : vector<1x1xf32>
    %543 = vector.broadcast %542 : vector<1x1xf32> to vector<1x32xf32>
    %544 = arith.subf %538, %543 : vector<1x32xf32>
    %545 = arith.mulf %544, %544 : vector<1x32xf32>
    %cst_197 = arith.constant dense<0.000000e+00> : vector<1xf32>
    %546 = vector.multi_reduction <add>, %545, %cst_197 [1] : vector<1x32xf32> to vector<1xf32>
    %547 = vector.shape_cast %546 : vector<1xf32> to vector<1x1xf32>
    %cst_198 = arith.constant 3.200000e+01 : f32
    %548 = vector.broadcast %cst_198 : f32 to vector<1x1xf32>
    %549 = arith.divf %547, %548 : vector<1x1xf32>
    %550 = vector.broadcast %542 : vector<1x1xf32> to vector<1x32xf32>
    %551 = arith.subf %538, %550 : vector<1x32xf32>
    %cst_199 = arith.constant 9.99999974E-6 : f32
    %552 = vector.broadcast %cst_199 : f32 to vector<1x1xf32>
    %553 = arith.addf %549, %552 : vector<1x1xf32>
    %554 = math.rsqrt %553 : vector<1x1xf32>
    %555 = vector.broadcast %554 : vector<1x1xf32> to vector<1x32xf32>
    %556 = arith.mulf %551, %555 : vector<1x32xf32>
    %557 = arith.mulf %534, %556 : vector<1x32xf32>
    %558 = arith.addf %557, %535 : vector<1x32xf32>
    %cst_200 = arith.constant 0.000000e+00 : f32
    %559 = vector.broadcast %cst_200 : f32 to vector<1x32xf32>
    %560 = arith.maximumf %558, %559 : vector<1x32xf32>
    %561 = arith.addf %560, %531 : vector<1x32xf32>
    %cst_201 = arith.constant 0.000000e+00 : f32
    %562 = vector.broadcast %cst_201 : f32 to vector<1x32xf32>
    %563 = tpu.concatenate %561, %531, %529, %562 in 1 : vector<1x32xf32>, vector<1x32xf32>, vector<1x32xf32>, vector<1x32xf32> -> vector<1x128xf32>
    %c0_202 = arith.constant 0 : index
    %c0_203 = arith.constant 0 : index
    %c0_204 = arith.constant 0 : index
    %564 = vector.load %arg14[%c0_202, %c0_203, %c0_204] : memref<1x1x128xf32, #tpu.memory_space<vmem>>, vector<1x1x128xf32>
    %565 = vector.shape_cast %564 : vector<1x1x128xf32> to vector<1x128xf32>
    %566 = vector.shape_cast %563 : vector<1x128xf32> to vector<1x1x128xf32>
    tpu.vector_store %arg14[%c0_202, %c0_203, %c0_204], %566 {strides = array<i32>} : memref<1x1x128xf32, #tpu.memory_space<vmem>>, vector<1x1x128xf32>,
    return
  }
  func.func @transform_0(%arg0: i32) -> (i32, i32, i32) {
    %c0_i32 = arith.constant 0 : i32
    %c0_i32_0 = arith.constant 0 : i32
    %c0_i32_1 = arith.constant 0 : i32
    return %arg0, %c0_i32, %c0_i32_0 : i32, i32, i32
  }
  func.func @transform_1(%arg0: i32) -> (i32, i32) {
    %c0_i32 = arith.constant 0 : i32
    %c0_i32_0 = arith.constant 0 : i32
    %c0_i32_1 = arith.constant 0 : i32
    return %c0_i32, %c0_i32_0 : i32, i32
  }
  func.func @transform_2(%arg0: i32) -> (i32, i32) {
    %c0_i32 = arith.constant 0 : i32
    %c0_i32_0 = arith.constant 0 : i32
    %c0_i32_1 = arith.constant 0 : i32
    return %c0_i32, %c0_i32_0 : i32, i32
  }
  func.func @transform_3(%arg0: i32) -> (i32, i32, i32, i32, i32) {
    %c0_i32 = arith.constant 0 : i32
    %c0_i32_0 = arith.constant 0 : i32
    %c0_i32_1 = arith.constant 0 : i32
    %c0_i32_2 = arith.constant 0 : i32
    %c0_i32_3 = arith.constant 0 : i32
    %c0_i32_4 = arith.constant 0 : i32
    return %c0_i32, %c0_i32_0, %c0_i32_1, %c0_i32_2, %c0_i32_3 : i32, i32, i32, i32, i32
  }
  func.func @transform_4(%arg0: i32) -> (i32, i32, i32, i32) {
    %c0_i32 = arith.constant 0 : i32
    %c0_i32_0 = arith.constant 0 : i32
    %c0_i32_1 = arith.constant 0 : i32
    %c0_i32_2 = arith.constant 0 : i32
    %c0_i32_3 = arith.constant 0 : i32
    return %c0_i32, %c0_i32_0, %c0_i32_1, %c0_i32_2 : i32, i32, i32, i32
  }
  func.func @transform_5(%arg0: i32) -> (i32, i32, i32) {
    %c0_i32 = arith.constant 0 : i32
    %c0_i32_0 = arith.constant 0 : i32
    %c0_i32_1 = arith.constant 0 : i32
    %c0_i32_2 = arith.constant 0 : i32
    return %c0_i32, %c0_i32_0, %c0_i32_1 : i32, i32, i32
  }
  func.func @transform_6(%arg0: i32) -> (i32, i32, i32) {
    %c0_i32 = arith.constant 0 : i32
    %c0_i32_0 = arith.constant 0 : i32
    %c0_i32_1 = arith.constant 0 : i32
    %c0_i32_2 = arith.constant 0 : i32
    return %c0_i32, %c0_i32_0, %c0_i32_1 : i32, i32, i32
  }
  func.func @transform_7(%arg0: i32) -> (i32, i32, i32) {
    %c0_i32 = arith.constant 0 : i32
    %c0_i32_0 = arith.constant 0 : i32
    %c0_i32_1 = arith.constant 0 : i32
    %c0_i32_2 = arith.constant 0 : i32
    return %c0_i32, %c0_i32_0, %c0_i32_1 : i32, i32, i32
  }
  func.func @transform_8(%arg0: i32) -> (i32, i32) {
    %c0_i32 = arith.constant 0 : i32
    %c0_i32_0 = arith.constant 0 : i32
    %c0_i32_1 = arith.constant 0 : i32
    return %c0_i32, %c0_i32_0 : i32, i32
  }
  func.func @transform_9(%arg0: i32) -> (i32, i32) {
    %c0_i32 = arith.constant 0 : i32
    %c0_i32_0 = arith.constant 0 : i32
    %c0_i32_1 = arith.constant 0 : i32
    return %c0_i32, %c0_i32_0 : i32, i32
  }
  func.func @transform_10(%arg0: i32) -> (i32, i32) {
    %c0_i32 = arith.constant 0 : i32
    %c0_i32_0 = arith.constant 0 : i32
    %c0_i32_1 = arith.constant 0 : i32
    return %c0_i32, %c0_i32_0 : i32, i32
  }
  func.func @transform_11(%arg0: i32) -> (i32, i32) {
    %c0_i32 = arith.constant 0 : i32
    %c0_i32_0 = arith.constant 0 : i32
    %c0_i32_1 = arith.constant 0 : i32
    return %c0_i32, %c0_i32_0 : i32, i32
  }
  func.func @transform_12(%arg0: i32) -> (i32, i32) {
    %c0_i32 = arith.constant 0 : i32
    %c0_i32_0 = arith.constant 0 : i32
    %c0_i32_1 = arith.constant 0 : i32
    return %c0_i32, %c0_i32_0 : i32, i32
  }
  func.func @transform_13(%arg0: i32) -> (i32, i32, i32) {
    %c0_i32 = arith.constant 0 : i32
    %c0_i32_0 = arith.constant 0 : i32
    %c0_i32_1 = arith.constant 0 : i32
    return %arg0, %c0_i32, %c0_i32_0 : i32, i32, i32
  }
}

</mosaic_0001>

<llo_original>
// kernel: tpu_custom_call.1
$region0: #{tpu_custom_call.1}
  #allocation0 [shape = 'u32[]', space=smem, size = 0x4, offset = 0x4, fixed_abs, tag = 'smem constant byte address 0x4 - core index']
  #allocation1 [shape = 'u32[72,128]{1,0:T(1,128)}', space=vmem, size = 0x9000, scoped, tag = 'internal scratch']
  %s0 = inlined_call_operand.vmem [shape: bf16[2,8,8], index: 0, kind: input, shape index: {}]
  %s1 = inlined_call_operand.vmem [shape: bf16[8,32], index: 1, kind: input, shape index: {}]
  %s2 = inlined_call_operand.vmem [shape: bf16[32,32], index: 2, kind: input, shape index: {}]
  %s3 = inlined_call_operand.vmem [shape: bf16[2,3,2,32,16], index: 3, kind: input, shape index: {}]
  %s4 = inlined_call_operand.vmem [shape: bf16[2,2,16,32], index: 4, kind: input, shape index: {}]
  %s5 = inlined_call_operand.vmem [shape: bf16[2,32,32], index: 5, kind: input, shape index: {}]
  %s6 = inlined_call_operand.vmem [shape: bf16[2,32,32], index: 6, kind: input, shape index: {}]
  %s7 = inlined_call_operand.vmem [shape: f32[2,10,32], index: 7, kind: input, shape index: {}]
  %s8 = inlined_call_operand.vmem [shape: f32[7,32], index: 8, kind: input, shape index: {}]
  %s9 = inlined_call_operand.vmem [shape: bf16[32,128], index: 9, kind: input, shape index: {}]
  %s10 = inlined_call_operand.vmem [shape: bf16[32,128], index: 10, kind: input, shape index: {}]
  %s11 = inlined_call_operand.vmem [shape: f32[1,128], index: 11, kind: input, shape index: {}]
  %s12 = inlined_call_operand.vmem [shape: bf16[32,32], index: 12, kind: input, shape index: {}]
  %s13 = inlined_call_operand.hbm [shape: f32[2,1,128], index: 13, kind: output, shape index: {}]
  %s14 = sld [smem:[#allocation0]]
  $region85: #{tpu_custom_call.1} parent=0
    _
  %s16 = ssub.s32 1, %s14
  %s17 = scalar_select 0, %s16, %s14
  $region1: #{tpu_custom_call.1} parent=0
    #allocation2 [shape = 'u8[1024]{0}', space=vmem, size = 0x400, scoped, tag = 'output window, operand 0']
    #allocation3 [shape = 's32[2]{0}', space=sflag, size = 0x8, scoped, tag = 'scoped memory for tpu_custom_call.1']
    %18 = vsyncpa [#allocation3], 0
    %s19 = scalar_lea.sflag [#allocation3], 1
    %20 = vsyncpa %s19, 0
    loop: start=0, step=1, limit=4
    $region2: #{tpu_custom_call.1} parent=1 // loop_pre_header
      _
    $region3: #{tpu_custom_call.1} parent=1 // loop_header
      %s22 = sphi 0, %s26
      %p23 = scmp.ge.s32.totalorder %s22, 4
      %s32 = sphi 0, %s34
      %s35 = sphi 0, %s32
      %s36 = sphi 0, %s35
      %s52 = sphi 0, %s36
      %s56 = sphi 0, %s56
      %s58 = sphi 0, %s56
      %s59 = sphi 0, %s58
      %s73 = sphi 0, %s59
      %s77 = sphi 0, %s77
      %s79 = sphi 0, %s77
      %s80 = sphi 0, %s79
      %s94 = sphi 0, %s80
      %s98 = sphi 0, %s98
      %s100 = sphi 0, %s98
      %s101 = sphi 0, %s100
      %s115 = sphi 0, %s101
      %s119 = sphi 0, %s119
      %s121 = sphi 0, %s119
      %s122 = sphi 0, %s121
      %s136 = sphi 0, %s122
      %s140 = sphi 0, %s140
      %s142 = sphi 0, %s140
      %s143 = sphi 0, %s142
      %s157 = sphi 0, %s143
      %s161 = sphi 0, %s161
      %s163 = sphi 0, %s161
      %s164 = sphi 0, %s163
      %s178 = sphi 0, %s164
      %s182 = sphi 0, %s182
      %s184 = sphi 0, %s182
      %s185 = sphi 0, %s184
      %s199 = sphi 0, %s185
      %s203 = sphi 0, %s203
      %s205 = sphi 0, %s203
      %s206 = sphi 0, %s205
      %s220 = sphi 0, %s206
      %s224 = sphi 0, %s224
      %s226 = sphi 0, %s224
      %s227 = sphi 0, %s226
      %s241 = sphi 0, %s227
      %s245 = sphi 0, %s245
      %s247 = sphi 0, %s245
      %s248 = sphi 0, %s247
      %s262 = sphi 0, %s248
      %s266 = sphi 0, %s266
      %s268 = sphi 0, %s266
      %s269 = sphi 0, %s268
      %s283 = sphi 0, %s269
      %s287 = sphi 0, %s287
      %s289 = sphi 0, %s287
      %s290 = sphi 0, %s289
      %s304 = sphi 0, %s290
      %s310 = sphi 0, %s312
      %s313 = sphi 0, %s310
      %s314 = sphi 0, %s313
      %s330 = sphi 0, %s314
    $region4: #{tpu_custom_call.1} parent=1 // loop_header_branch
      %25 = sbr.rel (%p23) target = $region8
    $region5: #{tpu_custom_call.1} parent=1 // loop_body
      %s27 = ssub.s32 %s22, 1
      %s28 = ssub.s32 %s22, 2
      %s29 = sadd.s32 %s22, 1
      %s30 = ssub.s32 %s22, %s29
      %p31 = scmp.eq.s32.totalorder %s30, 0
      %s33 = sadd.s32 %s32, 1
      %s34 = scalar_select %p31, %s32, %s33
      %p37 = pneg %p31
      %p38 = scmp.eq.s32.totalorder %s22, 1
      %p39 = por %p37, %p38
      %p40 = scmp.ne.s32.totalorder %s32, %s35
      %p41 = scmp.eq.s32.totalorder %s22, 0
      %p42 = por %p40, %p41
      %p43 = scmp.ne.s32.totalorder %s32, %s35
      %p44 = scmp.eq.s32.totalorder %s27, 1
      %p45 = por %p43, %p44
      %p46 = scmp.ne.s32.totalorder %s35, %s36
      %p47 = scmp.eq.s32.totalorder %s27, 0
      %p48 = por %p46, %p47
      %p49 = scmp.ne.s32.totalorder %s35, %s36
      %p50 = scmp.eq.s32.totalorder %s28, 1
      %p51 = por %p49, %p50
      %p53 = scmp.ne.s32.totalorder %s36, %s52
      %p54 = scmp.eq.s32.totalorder %s28, 0
      %p55 = por %p53, %p54
      %s57 = sadd.s32 %s56, 1
      %p60 = scmp.eq.s32.totalorder %s22, 1
      %p61 = scmp.ne.s32.totalorder %s56, %s58
      %p62 = scmp.eq.s32.totalorder %s22, 0
      %p63 = por %p61, %p62
      %p64 = scmp.ne.s32.totalorder %s56, %s58
      %p65 = scmp.eq.s32.totalorder %s27, 1
      %p66 = por %p64, %p65
      %p67 = scmp.ne.s32.totalorder %s58, %s59
      %p68 = scmp.eq.s32.totalorder %s27, 0
      %p69 = por %p67, %p68
      %p70 = scmp.ne.s32.totalorder %s58, %s59
      %p71 = scmp.eq.s32.totalorder %s28, 1
      %p72 = por %p70, %p71
      %p74 = scmp.ne.s32.totalorder %s59, %s73
      %p75 = scmp.eq.s32.totalorder %s28, 0
      %p76 = por %p74, %p75
      %s78 = sadd.s32 %s77, 1
      %p81 = scmp.eq.s32.totalorder %s22, 1
      %p82 = scmp.ne.s32.totalorder %s77, %s79
      %p83 = scmp.eq.s32.totalorder %s22, 0
      %p84 = por %p82, %p83
      %p85 = scmp.ne.s32.totalorder %s77, %s79
      %p86 = scmp.eq.s32.totalorder %s27, 1
      %p87 = por %p85, %p86
      %p88 = scmp.ne.s32.totalorder %s79, %s80
      %p89 = scmp.eq.s32.totalorder %s27, 0
      %p90 = por %p88, %p89
      %p91 = scmp.ne.s32.totalorder %s79, %s80
      %p92 = scmp.eq.s32.totalorder %s28, 1
      %p93 = por %p91, %p92
      %p95 = scmp.ne.s32.totalorder %s80, %s94
      %p96 = scmp.eq.s32.totalorder %s28, 0
      %p97 = por %p95, %p96
      %s99 = sadd.s32 %s98, 1
      %p102 = scmp.eq.s32.totalorder %s22, 1
      %p103 = scmp.ne.s32.totalorder %s98, %s100
      %p104 = scmp.eq.s32.totalorder %s22, 0
      %p105 = por %p103, %p104
      %p106 = scmp.ne.s32.totalorder %s98, %s100
      %p107 = scmp.eq.s32.totalorder %s27, 1
      %p108 = por %p106, %p107
      %p109 = scmp.ne.s32.totalorder %s100, %s101
      %p110 = scmp.eq.s32.totalorder %s27, 0
      %p111 = por %p109, %p110
      %p112 = scmp.ne.s32.totalorder %s100, %s101
      %p113 = scmp.eq.s32.totalorder %s28, 1
      %p114 = por %p112, %p113
      %p116 = scmp.ne.s32.totalorder %s101, %s115
      %p117 = scmp.eq.s32.totalorder %s28, 0
      %p118 = por %p116, %p117
      %s120 = sadd.s32 %s119, 1
      %p123 = scmp.eq.s32.totalorder %s22, 1
      %p124 = scmp.ne.s32.totalorder %s119, %s121
      %p125 = scmp.eq.s32.totalorder %s22, 0
      %p126 = por %p124, %p125
      %p127 = scmp.ne.s32.totalorder %s119, %s121
      %p128 = scmp.eq.s32.totalorder %s27, 1
      %p129 = por %p127, %p128
      %p130 = scmp.ne.s32.totalorder %s121, %s122
      %p131 = scmp.eq.s32.totalorder %s27, 0
      %p132 = por %p130, %p131
      %p133 = scmp.ne.s32.totalorder %s121, %s122
      %p134 = scmp.eq.s32.totalorder %s28, 1
      %p135 = por %p133, %p134
      %p137 = scmp.ne.s32.totalorder %s122, %s136
      %p138 = scmp.eq.s32.totalorder %s28, 0
      %p139 = por %p137, %p138
      %s141 = sadd.s32 %s140, 1
      %p144 = scmp.eq.s32.totalorder %s22, 1
      %p145 = scmp.ne.s32.totalorder %s140, %s142
      %p146 = scmp.eq.s32.totalorder %s22, 0
      %p147 = por %p145, %p146
      %p148 = scmp.ne.s32.totalorder %s140, %s142
      %p149 = scmp.eq.s32.totalorder %s27, 1
      %p150 = por %p148, %p149
      %p151 = scmp.ne.s32.totalorder %s142, %s143
      %p152 = scmp.eq.s32.totalorder %s27, 0
      %p153 = por %p151, %p152
      %p154 = scmp.ne.s32.totalorder %s142, %s143
      %p155 = scmp.eq.s32.totalorder %s28, 1
      %p156 = por %p154, %p155
      %p158 = scmp.ne.s32.totalorder %s143, %s157
      %p159 = scmp.eq.s32.totalorder %s28, 0
      %p160 = por %p158, %p159
      %s162 = sadd.s32 %s161, 1
      %p165 = scmp.eq.s32.totalorder %s22, 1
      %p166 = scmp.ne.s32.totalorder %s161, %s163
      %p167 = scmp.eq.s32.totalorder %s22, 0
      %p168 = por %p166, %p167
      %p169 = scmp.ne.s32.totalorder %s161, %s163
      %p170 = scmp.eq.s32.totalorder %s27, 1
      %p171 = por %p169, %p170
      %p172 = scmp.ne.s32.totalorder %s163, %s164
      %p173 = scmp.eq.s32.totalorder %s27, 0
      %p174 = por %p172, %p173
      %p175 = scmp.ne.s32.totalorder %s163, %s164
      %p176 = scmp.eq.s32.totalorder %s28, 1
      %p177 = por %p175, %p176
      %p179 = scmp.ne.s32.totalorder %s164, %s178
      %p180 = scmp.eq.s32.totalorder %s28, 0
      %p181 = por %p179, %p180
      %s183 = sadd.s32 %s182, 1
      %p186 = scmp.eq.s32.totalorder %s22, 1
      %p187 = scmp.ne.s32.totalorder %s182, %s184
      %p188 = scmp.eq.s32.totalorder %s22, 0
      %p189 = por %p187, %p188
      %p190 = scmp.ne.s32.totalorder %s182, %s184
      %p191 = scmp.eq.s32.totalorder %s27, 1
      %p192 = por %p190, %p191
      %p193 = scmp.ne.s32.totalorder %s184, %s185
      %p194 = scmp.eq.s32.totalorder %s27, 0
      %p195 = por %p193, %p194
      %p196 = scmp.ne.s32.totalorder %s184, %s185
      %p197 = scmp.eq.s32.totalorder %s28, 1
      %p198 = por %p196, %p197
      %p200 = scmp.ne.s32.totalorder %s185, %s199
      %p201 = scmp.eq.s32.totalorder %s28, 0
      %p202 = por %p200, %p201
      %s204 = sadd.s32 %s203, 1
      %p207 = scmp.eq.s32.totalorder %s22, 1
      %p208 = scmp.ne.s32.totalorder %s203, %s205
      %p209 = scmp.eq.s32.totalorder %s22, 0
      %p210 = por %p208, %p209
      %p211 = scmp.ne.s32.totalorder %s203, %s205
      %p212 = scmp.eq.s32.totalorder %s27, 1
      %p213 = por %p211, %p212
      %p214 = scmp.ne.s32.totalorder %s205, %s206
      %p215 = scmp.eq.s32.totalorder %s27, 0
      %p216 = por %p214, %p215
      %p217 = scmp.ne.s32.totalorder %s205, %s206
      %p218 = scmp.eq.s32.totalorder %s28, 1
      %p219 = por %p217, %p218
      %p221 = scmp.ne.s32.totalorder %s206, %s220
      %p222 = scmp.eq.s32.totalorder %s28, 0
      %p223 = por %p221, %p222
      %s225 = sadd.s32 %s224, 1
      %p228 = scmp.eq.s32.totalorder %s22, 1
      %p229 = scmp.ne.s32.totalorder %s224, %s226
      %p230 = scmp.eq.s32.totalorder %s22, 0
      %p231 = por %p229, %p230
      %p232 = scmp.ne.s32.totalorder %s224, %s226
      %p233 = scmp.eq.s32.totalorder %s27, 1
      %p234 = por %p232, %p233
      %p235 = scmp.ne.s32.totalorder %s226, %s227
      %p236 = scmp.eq.s32.totalorder %s27, 0
      %p237 = por %p235, %p236
      %p238 = scmp.ne.s32.totalorder %s226, %s227
      %p239 = scmp.eq.s32.totalorder %s28, 1
      %p240 = por %p238, %p239
      %p242 = scmp.ne.s32.totalorder %s227, %s241
      %p243 = scmp.eq.s32.totalorder %s28, 0
      %p244 = por %p242, %p243
      %s246 = sadd.s32 %s245, 1
      %p249 = scmp.eq.s32.totalorder %s22, 1
      %p250 = scmp.ne.s32.totalorder %s245, %s247
      %p251 = scmp.eq.s32.totalorder %s22, 0
      %p252 = por %p250, %p251
      %p253 = scmp.ne.s32.totalorder %s245, %s247
      %p254 = scmp.eq.s32.totalorder %s27, 1
      %p255 = por %p253, %p254
      %p256 = scmp.ne.s32.totalorder %s247, %s248
      %p257 = scmp.eq.s32.totalorder %s27, 0
      %p258 = por %p256, %p257
      %p259 = scmp.ne.s32.totalorder %s247, %s248
      %p260 = scmp.eq.s32.totalorder %s28, 1
      %p261 = por %p259, %p260
      %p263 = scmp.ne.s32.totalorder %s248, %s262
      %p264 = scmp.eq.s32.totalorder %s28, 0
      %p265 = por %p263, %p264
      %s267 = sadd.s32 %s266, 1
      %p270 = scmp.eq.s32.totalorder %s22, 1
      %p271 = scmp.ne.s32.totalorder %s266, %s268
      %p272 = scmp.eq.s32.totalorder %s22, 0
      %p273 = por %p271, %p272
      %p274 = scmp.ne.s32.totalorder %s266, %s268
      %p275 = scmp.eq.s32.totalorder %s27, 1
      %p276 = por %p274, %p275
      %p277 = scmp.ne.s32.totalorder %s268, %s269
      %p278 = scmp.eq.s32.totalorder %s27, 0
      %p279 = por %p277, %p278
      %p280 = scmp.ne.s32.totalorder %s268, %s269
      %p281 = scmp.eq.s32.totalorder %s28, 1
      %p282 = por %p280, %p281
      %p284 = scmp.ne.s32.totalorder %s269, %s283
      %p285 = scmp.eq.s32.totalorder %s28, 0
      %p286 = por %p284, %p285
      %s288 = sadd.s32 %s287, 1
      %p291 = scmp.eq.s32.totalorder %s22, 1
      %p292 = scmp.ne.s32.totalorder %s287, %s289
      %p293 = scmp.eq.s32.totalorder %s22, 0
      %p294 = por %p292, %p293
      %p295 = scmp.ne.s32.totalorder %s287, %s289
      %p296 = scmp.eq.s32.totalorder %s27, 1
      %p297 = por %p295, %p296
      %p298 = scmp.ne.s32.totalorder %s289, %s290
      %p299 = scmp.eq.s32.totalorder %s27, 0
      %p300 = por %p298, %p299
      %p301 = scmp.ne.s32.totalorder %s289, %s290
      %p302 = scmp.eq.s32.totalorder %s28, 1
      %p303 = por %p301, %p302
      %p305 = scmp.ne.s32.totalorder %s290, %s304
      %p306 = scmp.eq.s32.totalorder %s28, 0
      %p307 = por %p305, %p306
      %s308 = ssub.s32 %s22, %s29
      %p309 = scmp.eq.s32.totalorder %s308, 0
      %s311 = sadd.s32 %s310, 1
      %s312 = scalar_select %p309, %s310, %s311
      %p315 = pneg %p309
      %p316 = scmp.eq.s32.totalorder %s22, 1
      %p317 = por %p315, %p316
      %p318 = scmp.ne.s32.totalorder %s310, %s313
      %p319 = scmp.eq.s32.totalorder %s22, 0
      %p320 = por %p318, %p319
      %p321 = scmp.ne.s32.totalorder %s310, %s313
      %p322 = scmp.eq.s32.totalorder %s27, 1
      %p323 = por %p321, %p322
      %p324 = scmp.ne.s32.totalorder %s313, %s314
      %p325 = scmp.eq.s32.totalorder %s27, 0
      %p326 = por %p324, %p325
      %p327 = scmp.ne.s32.totalorder %s313, %s314
      %p328 = scmp.eq.s32.totalorder %s28, 1
      %p329 = por %p327, %p328
      %p331 = scmp.ne.s32.totalorder %s314, %s330
      %p332 = scmp.eq.s32.totalorder %s28, 0
      %p333 = por %p331, %p332
      %p334 = scmp.le.s32.totalorder 1, %s22
      %p335 = scmp.lt.s32.totalorder %s22, 3
      %p336 = pnand %p334, %p335
      %p337 = pneg %p336
      // Predicated region
      $region9: #{tpu_custom_call.1} parent=5 // pred_check
        _
      $region10: #{tpu_custom_call.1} parent=5 // pred_check_branch
        %339 = sbr.rel (%p336) target = $region12
      $region11: #{tpu_custom_call.1} parent=5 // pred_region
        %s340 = ssub.s32 %s22, 1
        // Predicated region
        $region13: #{tpu_custom_call.1} parent=11 // pred_check
          %p341 = pneg %p69
        $region14: #{tpu_custom_call.1} parent=11 // pred_check_branch
          %343 = sbr.rel (%p341) target = $region16
        $region15: #{tpu_custom_call.1} parent=11 // pred_region
          _
        $region16: #{tpu_custom_call.1} parent=11 // pred_fallthru
          _
        // Predicated region
        $region17: #{tpu_custom_call.1} parent=11 // pred_check
          %p344 = pneg %p90
        $region18: #{tpu_custom_call.1} parent=11 // pred_check_branch
          %346 = sbr.rel (%p344) target = $region20
        $region19: #{tpu_custom_call.1} parent=11 // pred_region
          _
        $region20: #{tpu_custom_call.1} parent=11 // pred_fallthru
          _
        // Predicated region
        $region21: #{tpu_custom_call.1} parent=11 // pred_check
          %p347 = pneg %p111
        $region22: #{tpu_custom_call.1} parent=11 // pred_check_branch
          %349 = sbr.rel (%p347) target = $region24
        $region23: #{tpu_custom_call.1} parent=11 // pred_region
          _
        $region24: #{tpu_custom_call.1} parent=11 // pred_fallthru
          _
        // Predicated region
        $region25: #{tpu_custom_call.1} parent=11 // pred_check
          %p350 = pneg %p132
        $region26: #{tpu_custom_call.1} parent=11 // pred_check_branch
          %352 = sbr.rel (%p350) target = $region28
        $region27: #{tpu_custom_call.1} parent=11 // pred_region
          _
        $region28: #{tpu_custom_call.1} parent=11 // pred_fallthru
          _
        // Predicated region
        $region29: #{tpu_custom_call.1} parent=11 // pred_check
          %p353 = pneg %p153
        $region30: #{tpu_custom_call.1} parent=11 // pred_check_branch
          %355 = sbr.rel (%p353) target = $region32
        $region31: #{tpu_custom_call.1} parent=11 // pred_region
          _
        $region32: #{tpu_custom_call.1} parent=11 // pred_fallthru
          _
        // Predicated region
        $region33: #{tpu_custom_call.1} parent=11 // pred_check
          %p356 = pneg %p174
        $region34: #{tpu_custom_call.1} parent=11 // pred_check_branch
          %358 = sbr.rel (%p356) target = $region36
        $region35: #{tpu_custom_call.1} parent=11 // pred_region
          _
        $region36: #{tpu_custom_call.1} parent=11 // pred_fallthru
          _
        // Predicated region
        $region37: #{tpu_custom_call.1} parent=11 // pred_check
          %p359 = pneg %p195
        $region38: #{tpu_custom_call.1} parent=11 // pred_check_branch
          %361 = sbr.rel (%p359) target = $region40
        $region39: #{tpu_custom_call.1} parent=11 // pred_region
          _
        $region40: #{tpu_custom_call.1} parent=11 // pred_fallthru
          _
        // Predicated region
        $region41: #{tpu_custom_call.1} parent=11 // pred_check
          %p362 = pneg %p216
        $region42: #{tpu_custom_call.1} parent=11 // pred_check_branch
          %364 = sbr.rel (%p362) target = $region44
        $region43: #{tpu_custom_call.1} parent=11 // pred_region
          _
        $region44: #{tpu_custom_call.1} parent=11 // pred_fallthru
          _
        // Predicated region
        $region45: #{tpu_custom_call.1} parent=11 // pred_check
          %p365 = pneg %p237
        $region46: #{tpu_custom_call.1} parent=11 // pred_check_branch
          %367 = sbr.rel (%p365) target = $region48
        $region47: #{tpu_custom_call.1} parent=11 // pred_region
          _
        $region48: #{tpu_custom_call.1} parent=11 // pred_fallthru
          _
        // Predicated region
        $region49: #{tpu_custom_call.1} parent=11 // pred_check
          %p368 = pneg %p258
        $region50: #{tpu_custom_call.1} parent=11 // pred_check_branch
          %370 = sbr.rel (%p368) target = $region52
        $region51: #{tpu_custom_call.1} parent=11 // pred_region
          _
        $region52: #{tpu_custom_call.1} parent=11 // pred_fallthru
          _
        // Predicated region
        $region53: #{tpu_custom_call.1} parent=11 // pred_check
          %p371 = pneg %p279
        $region54: #{tpu_custom_call.1} parent=11 // pred_check_branch
          %373 = sbr.rel (%p371) target = $region56
        $region55: #{tpu_custom_call.1} parent=11 // pred_region
          _
        $region56: #{tpu_custom_call.1} parent=11 // pred_fallthru
          _
        // Predicated region
        $region57: #{tpu_custom_call.1} parent=11 // pred_check
          %p374 = pneg %p300
        $region58: #{tpu_custom_call.1} parent=11 // pred_check_branch
          %376 = sbr.rel (%p374) target = $region60
        $region59: #{tpu_custom_call.1} parent=11 // pred_region
          _
        $region60: #{tpu_custom_call.1} parent=11 // pred_fallthru
          _
      $region12: #{tpu_custom_call.1} parent=5 // pred_fallthru
        _
      %p377 = scmp.lt.s32.totalorder %s22, 2
      // Predicated region
      $region61: #{tpu_custom_call.1} parent=5 // pred_check
        %p378 = pneg %p377
      $region62: #{tpu_custom_call.1} parent=5 // pred_check_branch
        %380 = sbr.rel (%p378) target = $region64
      $region63: #{tpu_custom_call.1} parent=5 // pred_region
        // Predicated region
        $region65: #{tpu_custom_call.1} parent=63 // pred_check
          %p381 = pneg %p42
        $region66: #{tpu_custom_call.1} parent=63 // pred_check_branch
          %383 = sbr.rel (%p381) target = $region68
        $region67: #{tpu_custom_call.1} parent=63 // pred_region
          %p384 = scmp.lt.s32.totalorder %s22, 1
          %s385 = scalar_select %p384, %s22, 1
          %s386 = smul.addr %s385, 4
          %s387 = scalar_lea.vmem %s0, %s386
        $region68: #{tpu_custom_call.1} parent=63 // pred_fallthru
          _
      $region64: #{tpu_custom_call.1} parent=5 // pred_fallthru
        _
      %p388 = scmp.le.s32.totalorder 1, %s22
      %p389 = scmp.lt.s32.totalorder %s22, 3
      %p390 = pnand %p388, %p389
      %p391 = pneg %p390
      // Predicated region
      $region69: #{tpu_custom_call.1} parent=5 // pred_check
        _
      $region70: #{tpu_custom_call.1} parent=5 // pred_check_branch
        %393 = sbr.rel (%p390) target = $region72
      $region71: #{tpu_custom_call.1} parent=5 // pred_region
        %s394 = ssub.s32 %s22, 1
        %p395 = scmp.lt.s32.totalorder %s27, 1
        %s396 = scalar_select %p395, %s27, 1
        %s397 = smul.addr %s396, 4
        %s398 = scalar_lea.vmem %s0, %s397
        %p399 = pneg %p48
        %p400 = pneg %p45
        %p401 = pneg %p69
        %p402 = pneg %p66
        %p403 = pneg %p90
        %p404 = pneg %p87
        %p405 = pneg %p111
        %p406 = pneg %p108
        %p407 = pneg %p132
        %p408 = pneg %p129
        %p409 = pneg %p153
        %p410 = pneg %p150
        %p411 = pneg %p174
        %p412 = pneg %p171
        %p413 = pneg %p195
        %p414 = pneg %p192
        %p415 = pneg %p216
        %p416 = pneg %p213
        %p417 = pneg %p237
        %p418 = pneg %p234
        %p419 = pneg %p258
        %p420 = pneg %p255
        %p421 = pneg %p279
        %p422 = pneg %p276
        %p423 = pneg %p300
        %p424 = pneg %p297
        %p425 = pneg %p326
        %p426 = pneg %p323
        %s427 = sand.u32 %s313, 1
        %s428 = scalar_lea.sflag [#allocation3], %s427
        %s429 = sand.u32 %s313, 1
        %s430 = scalar_lea.vmem [#allocation2], %s429
        %p431 = scmp.lt.s32.totalorder %s27, 1
        %s432 = scalar_select %p431, %s27, 1
        %s433 = smul.addr %s432, 4
        %s434 = scalar_lea.vmem %s0, %s433
        %v436 = vld [vmem:[%s8] sm:$0x7f]
        %v437 = vld [vmem:[%s434] sm:$0xf]
        %v438 = vld [vmem:[%s1] sm:$0xf]
        %v439 = vperm.slane %v436, 0
        %vm440 = vcmask 64512
        %v442 = vsel %vm440, %v437, 0
        %vm444 = vcmask 1043456
        %v446 = vsel %vm444, %v438, 0
        %448 = vmatpush.bf16.msra.mxu0 0
        %449 = vmatpush.bf16.msra.mxu0 0
        %450 = vmatpush.bf16.msra.mxu0 0
        %451 = vmatpush.bf16.msra.mxu0 0
        %452 = vmatpush.bf16.msra.mxu0 0
        %453 = vmatpush.bf16.msra.mxu0 0
        %454 = vmatpush.bf16.msra.mxu0 0
        %455 = vmatpush.bf16.msra.mxu0 %v446
        %456 = vmatmul.bf16.gmra.mxu0 %v442
        %v457 = vpop.f32.mrf.mxu0
        %v458 = vadd.f32 %v439, %v457
        %v459 = vpop.f32.mrf.mxu0
        %460 = vdwg.mxu0
        %v461 = vld [vmem:[%s2] sm:$0xf]
        %v462 = vld [vmem:[%s2 + $0x4] sm:$0xf]
        %v463 = vld [vmem:[%s2 + $0x8] sm:$0xf]
        %v464 = vld [vmem:[%s2 + $0xc] sm:$0xf]
        %v465 = vpack.c.bf16 %v458, %v458
        %v466 = vperm.slane %v436, 1
        %v471 = vunpack.c.l.b16 %v461
        %v472 = vunpack.c.l.b16 %v462
        %v473 = vunpack.c.l.b16 %v463
        %v474 = vunpack.c.l.b16 %v464
        %v475 = vpack.c.b16 %v472, %v471
        %v476 = vpack.c.b16 %v474, %v473
        %vm479 = vcmask 261120
        %v481 = vsel %vm479, %v465, 0
        %483 = vmatpush.bf16.msra.mxu0 0
        %484 = vmatpush.bf16.msra.mxu0 0
        %485 = vmatpush.bf16.msra.mxu0 0
        %486 = vmatpush.bf16.msra.mxu0 0
        %487 = vmatpush.bf16.msra.mxu0 0
        %488 = vmatpush.bf16.msra.mxu0 0
        %489 = vmatpush.bf16.msra.mxu0 %v476
        %490 = vmatpush.bf16.msra.mxu0 %v475
        %491 = vmatmul.bf16.gmra.mxu0 %v481
        %v492 = vpop.f32.mrf.mxu0
        %v493 = vadd.f32 %v466, %v492
        %v494 = vpop.f32.mrf.mxu0
        %495 = vdwg.mxu0
        %v496 = vsel %vm479, %v493, 0.0
        %497 = vadd.xlane.f32.xlu0 %v496
        %v498 = vpop.xlane.xlu0 %497
        %v499 = vrcp.pop 32.0
        %v500 = vmul.f32 32.0, %v499
        %v501 = vsub.f32 1.0, %v500
        %v502 = vmul.f32 %v499, %v501
        %v503 = vadd.f32 %v499, %v502
        %vm504 = vweird.f32 %v499
        %v505 = vsel %vm504, %v499, %v503
        %v506 = vmul.f32 %v498, %v505
        %v507 = vsub.f32 %v493, %v506
        %v508 = vmul.f32 %v507, %v507
        %v509 = vsel %vm479, %v508, 0.0
        %510 = vadd.xlane.f32.xlu0 %v509
        %v511 = vpop.xlane.xlu0 %510
        %v512 = vmul.f32 %v511, %v505
        %v513 = vadd.f32 %v512, 1e-05
        %v514 = vrsqrt.pop %v513
        %v515 = vmul.f32 %v514, %v513
        %v516 = vmul.f32 %v515, %v514
        %v517 = vmul.f32 0.5, %v516
        %v518 = vsub.f32 1.5, %v517
        %v519 = vmul.f32 %v514, %v518
        %vm520 = vweird.f32 %v513
        %vm521 = vweird.f32 %v514
        %vm522 = vmor %vm520, %vm521
        %v523 = vsel %vm522, %v514, %v519
        %v524 = vmul.f32 %v507, %v523
        %v525 = vperm.slane %v436, 2
        %v526 = vmul.f32 %v525, %v524
        %v527 = vperm.slane %v436, 3
        %v528 = vadd.f32 %v526, %v527
        %v529 = vmax.f32 %v528, 0.0
        %v530 = vadd.f32 %v529, %v458
        %v531 = vld [vmem:[%s7] sm:$0xff]
        %v532 = vld [vmem:[%s7 + $0x8] sm:$0x3]
        %v533 = vpack.c.bf16 %v530, %v530
        %v534 = vld [vmem:[%s3] sm:$0xf]
        %v535 = vld [vmem:[%s3 + $0x4] sm:$0xf]
        %v536 = vld [vmem:[%s3 + $0x8] sm:$0xf]
        %v537 = vld [vmem:[%s3 + $0xc] sm:$0xf]
        %v538 = vperm.slane %v531, 0
        %v543 = vunpack.c.l.b16 %v534
        %v544 = vunpack.c.l.b16 %v535
        %v545 = vunpack.c.l.b16 %v536
        %v546 = vunpack.c.l.b16 %v537
        %v547 = vpack.c.b16 %v544, %v543
        %v548 = vpack.c.b16 %v546, %v545
        %v552 = vsel %vm479, %v533, 0
        %554 = vmatpush.bf16.msra.mxu0 0
        %555 = vmatpush.bf16.msra.mxu0 0
        %556 = vmatpush.bf16.msra.mxu0 0
        %557 = vmatpush.bf16.msra.mxu0 0
        %558 = vmatpush.bf16.msra.mxu0 0
        %559 = vmatpush.bf16.msra.mxu0 0
        %560 = vmatpush.bf16.msra.mxu0 %v548
        %561 = vmatpush.bf16.msra.mxu0 %v547
        %562 = vmatmul.bf16.gmra.mxu0 %v552
        %v563 = vpop.f32.mrf.mxu0
        %v564 = vadd.f32 %v538, %v563
        %v565 = vpop.f32.mrf.mxu0
        %566 = vdwg.mxu0
        %s567 = scalar_lea.vmem %s3, 32
        %v568 = vld [vmem:[%s567] sm:$0xf]
        %v569 = vld [vmem:[%s567 + $0x4] sm:$0xf]
        %v570 = vld [vmem:[%s567 + $0x8] sm:$0xf]
        %v571 = vld [vmem:[%s567 + $0xc] sm:$0xf]
        %v572 = vperm.slane %v531, 1
        %v577 = vunpack.c.l.b16 %v568
        %v578 = vunpack.c.l.b16 %v569
        %v579 = vunpack.c.l.b16 %v570
        %v580 = vunpack.c.l.b16 %v571
        %v581 = vpack.c.b16 %v578, %v577
        %v582 = vpack.c.b16 %v580, %v579
        %585 = vmatpush.bf16.msra.mxu0 0
        %586 = vmatpush.bf16.msra.mxu0 0
        %587 = vmatpush.bf16.msra.mxu0 0
        %588 = vmatpush.bf16.msra.mxu0 0
        %589 = vmatpush.bf16.msra.mxu0 0
        %590 = vmatpush.bf16.msra.mxu0 0
        %591 = vmatpush.bf16.msra.mxu0 %v582
        %592 = vmatpush.bf16.msra.mxu0 %v581
        %593 = vmatmul.bf16.gmra.mxu0 %v552
        %v594 = vpop.f32.mrf.mxu0
        %v595 = vadd.f32 %v572, %v594
        %v596 = vpop.f32.mrf.mxu0
        %597 = vdwg.mxu0
        %s598 = scalar_lea.vmem %s3, 64
        %v599 = vld [vmem:[%s598] sm:$0xf]
        %v600 = vld [vmem:[%s598 + $0x4] sm:$0xf]
        %v601 = vld [vmem:[%s598 + $0x8] sm:$0xf]
        %v602 = vld [vmem:[%s598 + $0xc] sm:$0xf]
        %v603 = vperm.slane %v531, 2
        %v608 = vunpack.c.l.b16 %v599
        %v609 = vunpack.c.l.b16 %v600
        %v610 = vunpack.c.l.b16 %v601
        %v611 = vunpack.c.l.b16 %v602
        %v612 = vpack.c.b16 %v609, %v608
        %v613 = vpack.c.b16 %v611, %v610
        %616 = vmatpush.bf16.msra.mxu0 0
        %617 = vmatpush.bf16.msra.mxu0 0
        %618 = vmatpush.bf16.msra.mxu0 0
        %619 = vmatpush.bf16.msra.mxu0 0
        %620 = vmatpush.bf16.msra.mxu0 0
        %621 = vmatpush.bf16.msra.mxu0 0
        %622 = vmatpush.bf16.msra.mxu0 %v613
        %623 = vmatpush.bf16.msra.mxu0 %v612
        %624 = vmatmul.bf16.gmra.mxu0 %v552
        %v625 = vpop.f32.mrf.mxu0
        %v626 = vadd.f32 %v603, %v625
        %v627 = vpop.f32.mrf.mxu0
        %628 = vdwg.mxu0
        %v629 = vpack.c.bf16 %v564, %v564
        %v630 = vpack.c.bf16 %v595, %v595
        %v631 = vpack.c.bf16 %v626, %v626
        %vm632 = vcmask 130048
        %v634 = vsel %vm632, %v629, 0
        %v637 = vsel %vm632, %v630, 0
        %639 = vmatpush.bf16.xpose.msra.mxu0 0
        %640 = vmatpush.bf16.xpose.msra.mxu0 0
        %641 = vmatpush.bf16.xpose.msra.mxu0 0
        %642 = vmatpush.bf16.xpose.msra.mxu0 0
        %643 = vmatpush.bf16.xpose.msra.mxu0 0
        %644 = vmatpush.bf16.xpose.msra.mxu0 0
        %645 = vmatpush.bf16.xpose.msra.mxu0 0
        %646 = vmatpush.bf16.xpose.msra.mxu0 %v637
        %647 = vmatmul.bf16.gmra.mxu0 %v634
        %v648 = vpop.f32.mrf.mxu0
        %v649 = vadd.f32 0.0, %v648
        %v650 = vpop.f32.mrf.mxu0
        %651 = vdwg.mxu0
        %v652 = vsel %vm440, %v649, -inf
        %653 = vmax.xlane.f32.xlu0 %v652
        %v654 = vpop.xlane.xlu0 %653
        %v655 = vsub.f32 %v649, %v654
        %v656 = vmul.f32 %v655, 1.442695
        %v657 = vpow.pop %v656
        %v658 = vsel %vm440, %v657, 0.0
        %659 = vadd.xlane.f32.xlu0 %v658
        %v660 = vpop.xlane.xlu0 %659
        %v661 = vrcp.pop %v660
        %v662 = vmul.f32 %v657, %v661
        %v663 = vpack.c.bf16 %v662, %v662
        %v665 = vsel %vm440, %v663, 0
        %v668 = vsel %vm444, %v631, 0
        %670 = vmatpush.bf16.msra.mxu0 0
        %671 = vmatpush.bf16.msra.mxu0 0
        %672 = vmatpush.bf16.msra.mxu0 0
        %673 = vmatpush.bf16.msra.mxu0 0
        %674 = vmatpush.bf16.msra.mxu0 0
        %675 = vmatpush.bf16.msra.mxu0 0
        %676 = vmatpush.bf16.msra.mxu0 0
        %677 = vmatpush.bf16.msra.mxu0 %v668
        %678 = vmatmul.bf16.gmra.mxu0 %v665
        %v679 = vpop.f32.mrf.mxu0
        %v680 = vadd.f32 0.0, %v679
        %v681 = vpop.f32.mrf.mxu0
        %682 = vdwg.mxu0
        %v683 = vpack.c.bf16 %v680, %v680
        %v684 = vld [vmem:[%s4] sm:$0xf]
        %v685 = vld [vmem:[%s4 + $0x4] sm:$0xf]
        %s686 = scalar_lea.vmem %s3, 16
        %v687 = vld [vmem:[%s686] sm:$0xf]
        %v688 = vld [vmem:[%s686 + $0x4] sm:$0xf]
        %v689 = vld [vmem:[%s686 + $0x8] sm:$0xf]
        %v690 = vld [vmem:[%s686 + $0xc] sm:$0xf]
        %v695 = vunpack.c.l.b16 %v687
        %v696 = vunpack.c.l.b16 %v688
        %v697 = vunpack.c.l.b16 %v689
        %v698 = vunpack.c.l.b16 %v690
        %v699 = vpack.c.b16 %v696, %v695
        %v700 = vpack.c.b16 %v698, %v697
        %704 = vrot.lane.b32.xlu0 %v538, 112
        %v705 = vpop.permute.xlu0 %704
        %707 = vmatpush.bf16.msra.mxu0 0
        %708 = vmatpush.bf16.msra.mxu0 0
        %709 = vmatpush.bf16.msra.mxu0 0
        %710 = vmatpush.bf16.msra.mxu0 0
        %711 = vmatpush.bf16.msra.mxu0 0
        %712 = vmatpush.bf16.msra.mxu0 0
        %713 = vmatpush.bf16.msra.mxu0 %v700
        %714 = vmatpush.bf16.msra.mxu0 %v699
        %715 = vmatmul.bf16.gmra.mxu0 %v552
        %v716 = vpop.f32.mrf.mxu0
        %v717 = vadd.f32 %v705, %v716
        %v718 = vpop.f32.mrf.mxu0
        %719 = vdwg.mxu0
        %s720 = scalar_lea.vmem %s3, 48
        %v721 = vld [vmem:[%s720] sm:$0xf]
        %v722 = vld [vmem:[%s720 + $0x4] sm:$0xf]
        %v723 = vld [vmem:[%s720 + $0x8] sm:$0xf]
        %v724 = vld [vmem:[%s720 + $0xc] sm:$0xf]
        %v729 = vunpack.c.l.b16 %v721
        %v730 = vunpack.c.l.b16 %v722
        %v731 = vunpack.c.l.b16 %v723
        %v732 = vunpack.c.l.b16 %v724
        %v733 = vpack.c.b16 %v730, %v729
        %v734 = vpack.c.b16 %v732, %v731
        %738 = vrot.lane.b32.xlu0 %v572, 112
        %v739 = vpop.permute.xlu0 %738
        %741 = vmatpush.bf16.msra.mxu0 0
        %742 = vmatpush.bf16.msra.mxu0 0
        %743 = vmatpush.bf16.msra.mxu0 0
        %744 = vmatpush.bf16.msra.mxu0 0
        %745 = vmatpush.bf16.msra.mxu0 0
        %746 = vmatpush.bf16.msra.mxu0 0
        %747 = vmatpush.bf16.msra.mxu0 %v734
        %748 = vmatpush.bf16.msra.mxu0 %v733
        %749 = vmatmul.bf16.gmra.mxu0 %v552
        %v750 = vpop.f32.mrf.mxu0
        %v751 = vadd.f32 %v739, %v750
        %v752 = vpop.f32.mrf.mxu0
        %753 = vdwg.mxu0
        %s754 = scalar_lea.vmem %s3, 80
        %v755 = vld [vmem:[%s754] sm:$0xf]
        %v756 = vld [vmem:[%s754 + $0x4] sm:$0xf]
        %v757 = vld [vmem:[%s754 + $0x8] sm:$0xf]
        %v758 = vld [vmem:[%s754 + $0xc] sm:$0xf]
        %v763 = vunpack.c.l.b16 %v755
        %v764 = vunpack.c.l.b16 %v756
        %v765 = vunpack.c.l.b16 %v757
        %v766 = vunpack.c.l.b16 %v758
        %v767 = vpack.c.b16 %v764, %v763
        %v768 = vpack.c.b16 %v766, %v765
        %772 = vrot.lane.b32.xlu0 %v603, 112
        %v773 = vpop.permute.xlu0 %772
        %775 = vmatpush.bf16.msra.mxu0 0
        %776 = vmatpush.bf16.msra.mxu0 0
        %777 = vmatpush.bf16.msra.mxu0 0
        %778 = vmatpush.bf16.msra.mxu0 0
        %779 = vmatpush.bf16.msra.mxu0 0
        %780 = vmatpush.bf16.msra.mxu0 0
        %781 = vmatpush.bf16.msra.mxu0 %v768
        %782 = vmatpush.bf16.msra.mxu0 %v767
        %783 = vmatmul.bf16.gmra.mxu0 %v552
        %v784 = vpop.f32.mrf.mxu0
        %v785 = vadd.f32 %v773, %v784
        %v786 = vpop.f32.mrf.mxu0
        %787 = vdwg.mxu0
        %v788 = vpack.c.bf16 %v717, %v717
        %v789 = vpack.c.bf16 %v751, %v751
        %v790 = vpack.c.bf16 %v785, %v785
        %v792 = vsel %vm632, %v788, 0
        %v795 = vsel %vm632, %v789, 0
        %797 = vmatpush.bf16.xpose.msra.mxu0 0
        %798 = vmatpush.bf16.xpose.msra.mxu0 0
        %799 = vmatpush.bf16.xpose.msra.mxu0 0
        %800 = vmatpush.bf16.xpose.msra.mxu0 0
        %801 = vmatpush.bf16.xpose.msra.mxu0 0
        %802 = vmatpush.bf16.xpose.msra.mxu0 0
        %803 = vmatpush.bf16.xpose.msra.mxu0 0
        %804 = vmatpush.bf16.xpose.msra.mxu0 %v795
        %805 = vmatmul.bf16.gmra.mxu0 %v792
        %v806 = vpop.f32.mrf.mxu0
        %v807 = vadd.f32 0.0, %v806
        %v808 = vpop.f32.mrf.mxu0
        %809 = vdwg.mxu0
        %v810 = vsel %vm440, %v807, -inf
        %811 = vmax.xlane.f32.xlu0 %v810
        %v812 = vpop.xlane.xlu0 %811
        %v813 = vsub.f32 %v807, %v812
        %v814 = vmul.f32 %v813, 1.442695
        %v815 = vpow.pop %v814
        %v816 = vsel %vm440, %v815, 0.0
        %817 = vadd.xlane.f32.xlu0 %v816
        %v818 = vpop.xlane.xlu0 %817
        %v819 = vrcp.pop %v818
        %v820 = vmul.f32 %v815, %v819
        %v821 = vpack.c.bf16 %v820, %v820
        %v823 = vsel %vm440, %v821, 0
        %v826 = vsel %vm444, %v790, 0
        %828 = vmatpush.bf16.msra.mxu0 0
        %829 = vmatpush.bf16.msra.mxu0 0
        %830 = vmatpush.bf16.msra.mxu0 0
        %831 = vmatpush.bf16.msra.mxu0 0
        %832 = vmatpush.bf16.msra.mxu0 0
        %833 = vmatpush.bf16.msra.mxu0 0
        %834 = vmatpush.bf16.msra.mxu0 0
        %835 = vmatpush.bf16.msra.mxu0 %v826
        %836 = vmatmul.bf16.gmra.mxu0 %v823
        %v837 = vpop.f32.mrf.mxu0
        %v838 = vadd.f32 0.0, %v837
        %v839 = vpop.f32.mrf.mxu0
        %840 = vdwg.mxu0
        %v841 = vpack.c.bf16 %v838, %v838
        %s842 = scalar_lea.vmem %s4, 8
        %v843 = vld [vmem:[%s842] sm:$0xf]
        %v844 = vld [vmem:[%s842 + $0x4] sm:$0xf]
        %v847 = vunpack.c.l.b16 %v843
        %v848 = vunpack.c.l.b16 %v844
        %v849 = vpack.c.b16 %v848, %v847
        %v852 = vsel %vm632, %v841, 0
        %854 = vmatpush.bf16.msra.mxu0 0
        %855 = vmatpush.bf16.msra.mxu0 0
        %856 = vmatpush.bf16.msra.mxu0 0
        %857 = vmatpush.bf16.msra.mxu0 0
        %858 = vmatpush.bf16.msra.mxu0 0
        %859 = vmatpush.bf16.msra.mxu0 0
        %860 = vmatpush.bf16.msra.mxu0 0
        %861 = vmatpush.bf16.msra.mxu0 %v849
        %862 = vmatmul.bf16.gmra.mxu0 %v852
        %v863 = vpop.f32.mrf.mxu0
        %v864 = vadd.f32 0.0, %v863
        %v865 = vpop.f32.mrf.mxu0
        %866 = vdwg.mxu0
        %v869 = vunpack.c.l.b16 %v684
        %v870 = vunpack.c.l.b16 %v685
        %v871 = vpack.c.b16 %v870, %v869
        %v874 = vsel %vm632, %v683, 0
        %876 = vmatpush.bf16.msra.mxu0 0
        %877 = vmatpush.bf16.msra.mxu0 0
        %878 = vmatpush.bf16.msra.mxu0 0
        %879 = vmatpush.bf16.msra.mxu0 0
        %880 = vmatpush.bf16.msra.mxu0 0
        %881 = vmatpush.bf16.msra.mxu0 0
        %882 = vmatpush.bf16.msra.mxu0 0
        %883 = vmatpush.bf16.msra.mxu0 %v871
        %884 = vmatmul.bf16.gmra.mxu0 %v874
        %v885 = vpop.f32.mrf.mxu0
        %v886 = vadd.f32 %v864, %v885
        %v887 = vpop.f32.mrf.mxu0
        %888 = vdwg.mxu0
        %v889 = vperm.slane %v531, 3
        %v890 = vadd.f32 %v886, %v889
        %v891 = vadd.f32 %v530, %v890
        %v892 = vsel %vm479, %v891, 0.0
        %893 = vadd.xlane.f32.xlu0 %v892
        %v894 = vpop.xlane.xlu0 %893
        %v895 = vmul.f32 %v894, %v505
        %v896 = vsub.f32 %v891, %v895
        %v897 = vmul.f32 %v896, %v896
        %v898 = vsel %vm479, %v897, 0.0
        %899 = vadd.xlane.f32.xlu0 %v898
        %v900 = vpop.xlane.xlu0 %899
        %v901 = vmul.f32 %v900, %v505
        %v902 = vadd.f32 %v901, 1e-05
        %v903 = vrsqrt.pop %v902
        %v904 = vmul.f32 %v903, %v902
        %v905 = vmul.f32 %v904, %v903
        %v906 = vmul.f32 0.5, %v905
        %v907 = vsub.f32 1.5, %v906
        %v908 = vmul.f32 %v903, %v907
        %vm909 = vweird.f32 %v902
        %vm910 = vweird.f32 %v903
        %vm911 = vmor %vm909, %vm910
        %v912 = vsel %vm911, %v903, %v908
        %v913 = vmul.f32 %v896, %v912
        %v914 = vperm.slane %v531, 6
        %v915 = vmul.f32 %v914, %v913
        %v916 = vperm.slane %v531, 7
        %v917 = vadd.f32 %v915, %v916
        %v918 = vld [vmem:[%s5] sm:$0xf]
        %v919 = vld [vmem:[%s5 + $0x4] sm:$0xf]
        %v920 = vld [vmem:[%s5 + $0x8] sm:$0xf]
        %v921 = vld [vmem:[%s5 + $0xc] sm:$0xf]
        %v922 = vpack.c.bf16 %v917, %v917
        %v923 = vperm.slane %v531, 4
        %v928 = vunpack.c.l.b16 %v918
        %v929 = vunpack.c.l.b16 %v919
        %v930 = vunpack.c.l.b16 %v920
        %v931 = vunpack.c.l.b16 %v921
        %v932 = vpack.c.b16 %v929, %v928
        %v933 = vpack.c.b16 %v931, %v930
        %v937 = vsel %vm479, %v922, 0
        %939 = vmatpush.bf16.msra.mxu0 0
        %940 = vmatpush.bf16.msra.mxu0 0
        %941 = vmatpush.bf16.msra.mxu0 0
        %942 = vmatpush.bf16.msra.mxu0 0
        %943 = vmatpush.bf16.msra.mxu0 0
        %944 = vmatpush.bf16.msra.mxu0 0
        %945 = vmatpush.bf16.msra.mxu0 %v933
        %946 = vmatpush.bf16.msra.mxu0 %v932
        %947 = vmatmul.bf16.gmra.mxu0 %v937
        %v948 = vpop.f32.mrf.mxu0
        %v949 = vadd.f32 %v923, %v948
        %v950 = vpop.f32.mrf.mxu0
        %951 = vdwg.mxu0
        %v952 = vmax.f32 %v949, 0.0
        %v953 = vld [vmem:[%s6] sm:$0xf]
        %v954 = vld [vmem:[%s6 + $0x4] sm:$0xf]
        %v955 = vld [vmem:[%s6 + $0x8] sm:$0xf]
        %v956 = vld [vmem:[%s6 + $0xc] sm:$0xf]
        %v957 = vpack.c.bf16 %v952, %v952
        %v958 = vperm.slane %v531, 5
        %v963 = vunpack.c.l.b16 %v953
        %v964 = vunpack.c.l.b16 %v954
        %v965 = vunpack.c.l.b16 %v955
        %v966 = vunpack.c.l.b16 %v956
        %v967 = vpack.c.b16 %v964, %v963
        %v968 = vpack.c.b16 %v966, %v965
        %v972 = vsel %vm479, %v957, 0
        %974 = vmatpush.bf16.msra.mxu0 0
        %975 = vmatpush.bf16.msra.mxu0 0
        %976 = vmatpush.bf16.msra.mxu0 0
        %977 = vmatpush.bf16.msra.mxu0 0
        %978 = vmatpush.bf16.msra.mxu0 0
        %979 = vmatpush.bf16.msra.mxu0 0
        %980 = vmatpush.bf16.msra.mxu0 %v968
        %981 = vmatpush.bf16.msra.mxu0 %v967
        %982 = vmatmul.bf16.gmra.mxu0 %v972
        %v983 = vpop.f32.mrf.mxu0
        %v984 = vadd.f32 %v958, %v983
        %v985 = vpop.f32.mrf.mxu0
        %986 = vdwg.mxu0
        %v987 = vadd.f32 %v917, %v984
        %v988 = vsel %vm479, %v987, 0.0
        %989 = vadd.xlane.f32.xlu0 %v988
        %v990 = vpop.xlane.xlu0 %989
        %v991 = vmul.f32 %v990, %v505
        %v992 = vsub.f32 %v987, %v991
        %v993 = vmul.f32 %v992, %v992
        %v994 = vsel %vm479, %v993, 0.0
        %995 = vadd.xlane.f32.xlu0 %v994
        %v996 = vpop.xlane.xlu0 %995
        %v997 = vmul.f32 %v996, %v505
        %v998 = vadd.f32 %v997, 1e-05
        %v999 = vrsqrt.pop %v998
        %v1000 = vmul.f32 %v999, %v998
        %v1001 = vmul.f32 %v1000, %v999
        %v1002 = vmul.f32 0.5, %v1001
        %v1003 = vsub.f32 1.5, %v1002
        %v1004 = vmul.f32 %v999, %v1003
        %vm1005 = vweird.f32 %v998
        %vm1006 = vweird.f32 %v999
        %vm1007 = vmor %vm1005, %vm1006
        %v1008 = vsel %vm1007, %v999, %v1004
        %v1009 = vmul.f32 %v992, %v1008
        %v1010 = vperm.slane %v532, 0
        %v1011 = vmul.f32 %v1010, %v1009
        %v1012 = vperm.slane %v532, 1
        %v1013 = vadd.f32 %v1011, %v1012
        %s1014 = scalar_lea.vmem %s7, 16
        %v1015 = vld [vmem:[%s1014] sm:$0xff]
        %v1016 = vld [vmem:[%s1014 + $0x8] sm:$0x3]
        %v1017 = vpack.c.bf16 %v1013, %v1013
        %s1018 = scalar_lea.vmem %s3, 96
        %v1019 = vld [vmem:[%s1018] sm:$0xf]
        %v1020 = vld [vmem:[%s1018 + $0x4] sm:$0xf]
        %v1021 = vld [vmem:[%s1018 + $0x8] sm:$0xf]
        %v1022 = vld [vmem:[%s1018 + $0xc] sm:$0xf]
        %v1023 = vperm.slane %v1015, 0
        %v1028 = vunpack.c.l.b16 %v1019
        %v1029 = vunpack.c.l.b16 %v1020
        %v1030 = vunpack.c.l.b16 %v1021
        %v1031 = vunpack.c.l.b16 %v1022
        %v1032 = vpack.c.b16 %v1029, %v1028
        %v1033 = vpack.c.b16 %v1031, %v1030
        %v1037 = vsel %vm479, %v1017, 0
        %1039 = vmatpush.bf16.msra.mxu0 0
        %1040 = vmatpush.bf16.msra.mxu0 0
        %1041 = vmatpush.bf16.msra.mxu0 0
        %1042 = vmatpush.bf16.msra.mxu0 0
        %1043 = vmatpush.bf16.msra.mxu0 0
        %1044 = vmatpush.bf16.msra.mxu0 0
        %1045 = vmatpush.bf16.msra.mxu0 %v1033
        %1046 = vmatpush.bf16.msra.mxu0 %v1032
        %1047 = vmatmul.bf16.gmra.mxu0 %v1037
        %v1048 = vpop.f32.mrf.mxu0
        %v1049 = vadd.f32 %v1023, %v1048
        %v1050 = vpop.f32.mrf.mxu0
        %1051 = vdwg.mxu0
        %s1052 = scalar_lea.vmem %s3, 128
        %v1053 = vld [vmem:[%s1052] sm:$0xf]
        %v1054 = vld [vmem:[%s1052 + $0x4] sm:$0xf]
        %v1055 = vld [vmem:[%s1052 + $0x8] sm:$0xf]
        %v1056 = vld [vmem:[%s1052 + $0xc] sm:$0xf]
        %v1057 = vperm.slane %v1015, 1
        %v1062 = vunpack.c.l.b16 %v1053
        %v1063 = vunpack.c.l.b16 %v1054
        %v1064 = vunpack.c.l.b16 %v1055
        %v1065 = vunpack.c.l.b16 %v1056
        %v1066 = vpack.c.b16 %v1063, %v1062
        %v1067 = vpack.c.b16 %v1065, %v1064
        %1070 = vmatpush.bf16.msra.mxu0 0
        %1071 = vmatpush.bf16.msra.mxu0 0
        %1072 = vmatpush.bf16.msra.mxu0 0
        %1073 = vmatpush.bf16.msra.mxu0 0
        %1074 = vmatpush.bf16.msra.mxu0 0
        %1075 = vmatpush.bf16.msra.mxu0 0
        %1076 = vmatpush.bf16.msra.mxu0 %v1067
        %1077 = vmatpush.bf16.msra.mxu0 %v1066
        %1078 = vmatmul.bf16.gmra.mxu0 %v1037
        %v1079 = vpop.f32.mrf.mxu0
        %v1080 = vadd.f32 %v1057, %v1079
        %v1081 = vpop.f32.mrf.mxu0
        %1082 = vdwg.mxu0
        %s1083 = scalar_lea.vmem %s3, 160
        %v1084 = vld [vmem:[%s1083] sm:$0xf]
        %v1085 = vld [vmem:[%s1083 + $0x4] sm:$0xf]
        %v1086 = vld [vmem:[%s1083 + $0x8] sm:$0xf]
        %v1087 = vld [vmem:[%s1083 + $0xc] sm:$0xf]
        %v1088 = vperm.slane %v1015, 2
        %v1093 = vunpack.c.l.b16 %v1084
        %v1094 = vunpack.c.l.b16 %v1085
        %v1095 = vunpack.c.l.b16 %v1086
        %v1096 = vunpack.c.l.b16 %v1087
        %v1097 = vpack.c.b16 %v1094, %v1093
        %v1098 = vpack.c.b16 %v1096, %v1095
        %1101 = vmatpush.bf16.msra.mxu0 0
        %1102 = vmatpush.bf16.msra.mxu0 0
        %1103 = vmatpush.bf16.msra.mxu0 0
        %1104 = vmatpush.bf16.msra.mxu0 0
        %1105 = vmatpush.bf16.msra.mxu0 0
        %1106 = vmatpush.bf16.msra.mxu0 0
        %1107 = vmatpush.bf16.msra.mxu0 %v1098
        %1108 = vmatpush.bf16.msra.mxu0 %v1097
        %1109 = vmatmul.bf16.gmra.mxu0 %v1037
        %v1110 = vpop.f32.mrf.mxu0
        %v1111 = vadd.f32 %v1088, %v1110
        %v1112 = vpop.f32.mrf.mxu0
        %1113 = vdwg.mxu0
        %v1114 = vpack.c.bf16 %v1049, %v1049
        %v1115 = vpack.c.bf16 %v1080, %v1080
        %v1116 = vpack.c.bf16 %v1111, %v1111
        %v1118 = vsel %vm632, %v1114, 0
        %v1121 = vsel %vm632, %v1115, 0
        %1123 = vmatpush.bf16.xpose.msra.mxu0 0
        %1124 = vmatpush.bf16.xpose.msra.mxu0 0
        %1125 = vmatpush.bf16.xpose.msra.mxu0 0
        %1126 = vmatpush.bf16.xpose.msra.mxu0 0
        %1127 = vmatpush.bf16.xpose.msra.mxu0 0
        %1128 = vmatpush.bf16.xpose.msra.mxu0 0
        %1129 = vmatpush.bf16.xpose.msra.mxu0 0
        %1130 = vmatpush.bf16.xpose.msra.mxu0 %v1121
        %1131 = vmatmul.bf16.gmra.mxu0 %v1118
        %v1132 = vpop.f32.mrf.mxu0
        %v1133 = vadd.f32 0.0, %v1132
        %v1134 = vpop.f32.mrf.mxu0
        %1135 = vdwg.mxu0
        %v1136 = vsel %vm440, %v1133, -inf
        %1137 = vmax.xlane.f32.xlu0 %v1136
        %v1138 = vpop.xlane.xlu0 %1137
        %v1139 = vsub.f32 %v1133, %v1138
        %v1140 = vmul.f32 %v1139, 1.442695
        %v1141 = vpow.pop %v1140
        %v1142 = vsel %vm440, %v1141, 0.0
        %1143 = vadd.xlane.f32.xlu0 %v1142
        %v1144 = vpop.xlane.xlu0 %1143
        %v1145 = vrcp.pop %v1144
        %v1146 = vmul.f32 %v1141, %v1145
        %v1147 = vpack.c.bf16 %v1146, %v1146
        %v1149 = vsel %vm440, %v1147, 0
        %v1152 = vsel %vm444, %v1116, 0
        %1154 = vmatpush.bf16.msra.mxu0 0
        %1155 = vmatpush.bf16.msra.mxu0 0
        %1156 = vmatpush.bf16.msra.mxu0 0
        %1157 = vmatpush.bf16.msra.mxu0 0
        %1158 = vmatpush.bf16.msra.mxu0 0
        %1159 = vmatpush.bf16.msra.mxu0 0
        %1160 = vmatpush.bf16.msra.mxu0 0
        %1161 = vmatpush.bf16.msra.mxu0 %v1152
        %1162 = vmatmul.bf16.gmra.mxu0 %v1149
        %v1163 = vpop.f32.mrf.mxu0
        %v1164 = vadd.f32 0.0, %v1163
        %v1165 = vpop.f32.mrf.mxu0
        %1166 = vdwg.mxu0
        %v1167 = vpack.c.bf16 %v1164, %v1164
        %s1168 = scalar_lea.vmem %s4, 16
        %v1169 = vld [vmem:[%s1168] sm:$0xf]
        %v1170 = vld [vmem:[%s1168 + $0x4] sm:$0xf]
        %s1171 = scalar_lea.vmem %s3, 112
        %v1172 = vld [vmem:[%s1171] sm:$0xf]
        %v1173 = vld [vmem:[%s1171 + $0x4] sm:$0xf]
        %v1174 = vld [vmem:[%s1171 + $0x8] sm:$0xf]
        %v1175 = vld [vmem:[%s1171 + $0xc] sm:$0xf]
        %v1180 = vunpack.c.l.b16 %v1172
        %v1181 = vunpack.c.l.b16 %v1173
        %v1182 = vunpack.c.l.b16 %v1174
        %v1183 = vunpack.c.l.b16 %v1175
        %v1184 = vpack.c.b16 %v1181, %v1180
        %v1185 = vpack.c.b16 %v1183, %v1182
        %1189 = vrot.lane.b32.xlu0 %v1023, 112
        %v1190 = vpop.permute.xlu0 %1189
        %1192 = vmatpush.bf16.msra.mxu0 0
        %1193 = vmatpush.bf16.msra.mxu0 0
        %1194 = vmatpush.bf16.msra.mxu0 0
        %1195 = vmatpush.bf16.msra.mxu0 0
        %1196 = vmatpush.bf16.msra.mxu0 0
        %1197 = vmatpush.bf16.msra.mxu0 0
        %1198 = vmatpush.bf16.msra.mxu0 %v1185
        %1199 = vmatpush.bf16.msra.mxu0 %v1184
        %1200 = vmatmul.bf16.gmra.mxu0 %v1037
        %v1201 = vpop.f32.mrf.mxu0
        %v1202 = vadd.f32 %v1190, %v1201
        %v1203 = vpop.f32.mrf.mxu0
        %1204 = vdwg.mxu0
        %s1205 = scalar_lea.vmem %s3, 144
        %v1206 = vld [vmem:[%s1205] sm:$0xf]
        %v1207 = vld [vmem:[%s1205 + $0x4] sm:$0xf]
        %v1208 = vld [vmem:[%s1205 + $0x8] sm:$0xf]
        %v1209 = vld [vmem:[%s1205 + $0xc] sm:$0xf]
        %v1214 = vunpack.c.l.b16 %v1206
        %v1215 = vunpack.c.l.b16 %v1207
        %v1216 = vunpack.c.l.b16 %v1208
        %v1217 = vunpack.c.l.b16 %v1209
        %v1218 = vpack.c.b16 %v1215, %v1214
        %v1219 = vpack.c.b16 %v1217, %v1216
        %1223 = vrot.lane.b32.xlu0 %v1057, 112
        %v1224 = vpop.permute.xlu0 %1223
        %1226 = vmatpush.bf16.msra.mxu0 0
        %1227 = vmatpush.bf16.msra.mxu0 0
        %1228 = vmatpush.bf16.msra.mxu0 0
        %1229 = vmatpush.bf16.msra.mxu0 0
        %1230 = vmatpush.bf16.msra.mxu0 0
        %1231 = vmatpush.bf16.msra.mxu0 0
        %1232 = vmatpush.bf16.msra.mxu0 %v1219
        %1233 = vmatpush.bf16.msra.mxu0 %v1218
        %1234 = vmatmul.bf16.gmra.mxu0 %v1037
        %v1235 = vpop.f32.mrf.mxu0
        %v1236 = vadd.f32 %v1224, %v1235
        %v1237 = vpop.f32.mrf.mxu0
        %1238 = vdwg.mxu0
        %s1239 = scalar_lea.vmem %s3, 176
        %v1240 = vld [vmem:[%s1239] sm:$0xf]
        %v1241 = vld [vmem:[%s1239 + $0x4] sm:$0xf]
        %v1242 = vld [vmem:[%s1239 + $0x8] sm:$0xf]
        %v1243 = vld [vmem:[%s1239 + $0xc] sm:$0xf]
        %v1248 = vunpack.c.l.b16 %v1240
        %v1249 = vunpack.c.l.b16 %v1241
        %v1250 = vunpack.c.l.b16 %v1242
        %v1251 = vunpack.c.l.b16 %v1243
        %v1252 = vpack.c.b16 %v1249, %v1248
        %v1253 = vpack.c.b16 %v1251, %v1250
        %1257 = vrot.lane.b32.xlu0 %v1088, 112
        %v1258 = vpop.permute.xlu0 %1257
        %1260 = vmatpush.bf16.msra.mxu0 0
        %1261 = vmatpush.bf16.msra.mxu0 0
        %1262 = vmatpush.bf16.msra.mxu0 0
        %1263 = vmatpush.bf16.msra.mxu0 0
        %1264 = vmatpush.bf16.msra.mxu0 0
        %1265 = vmatpush.bf16.msra.mxu0 0
        %1266 = vmatpush.bf16.msra.mxu0 %v1253
        %1267 = vmatpush.bf16.msra.mxu0 %v1252
        %1268 = vmatmul.bf16.gmra.mxu0 %v1037
        %v1269 = vpop.f32.mrf.mxu0
        %v1270 = vadd.f32 %v1258, %v1269
        %v1271 = vpop.f32.mrf.mxu0
        %1272 = vdwg.mxu0
        %v1273 = vpack.c.bf16 %v1202, %v1202
        %v1274 = vpack.c.bf16 %v1236, %v1236
        %v1275 = vpack.c.bf16 %v1270, %v1270
        %v1277 = vsel %vm632, %v1273, 0
        %v1280 = vsel %vm632, %v1274, 0
        %1282 = vmatpush.bf16.xpose.msra.mxu0 0
        %1283 = vmatpush.bf16.xpose.msra.mxu0 0
        %1284 = vmatpush.bf16.xpose.msra.mxu0 0
        %1285 = vmatpush.bf16.xpose.msra.mxu0 0
        %1286 = vmatpush.bf16.xpose.msra.mxu0 0
        %1287 = vmatpush.bf16.xpose.msra.mxu0 0
        %1288 = vmatpush.bf16.xpose.msra.mxu0 0
        %1289 = vmatpush.bf16.xpose.msra.mxu0 %v1280
        %1290 = vmatmul.bf16.gmra.mxu0 %v1277
        %v1291 = vpop.f32.mrf.mxu0
        %v1292 = vadd.f32 0.0, %v1291
        %v1293 = vpop.f32.mrf.mxu0
        %1294 = vdwg.mxu0
        %v1295 = vsel %vm440, %v1292, -inf
        %1296 = vmax.xlane.f32.xlu0 %v1295
        %v1297 = vpop.xlane.xlu0 %1296
        %v1298 = vsub.f32 %v1292, %v1297
        %v1299 = vmul.f32 %v1298, 1.442695
        %v1300 = vpow.pop %v1299
        %v1301 = vsel %vm440, %v1300, 0.0
        %1302 = vadd.xlane.f32.xlu0 %v1301
        %v1303 = vpop.xlane.xlu0 %1302
        %v1304 = vrcp.pop %v1303
        %v1305 = vmul.f32 %v1300, %v1304
        %v1306 = vpack.c.bf16 %v1305, %v1305
        %v1308 = vsel %vm440, %v1306, 0
        %v1311 = vsel %vm444, %v1275, 0
        %1313 = vmatpush.bf16.msra.mxu0 0
        %1314 = vmatpush.bf16.msra.mxu0 0
        %1315 = vmatpush.bf16.msra.mxu0 0
        %1316 = vmatpush.bf16.msra.mxu0 0
        %1317 = vmatpush.bf16.msra.mxu0 0
        %1318 = vmatpush.bf16.msra.mxu0 0
        %1319 = vmatpush.bf16.msra.mxu0 0
        %1320 = vmatpush.bf16.msra.mxu0 %v1311
        %1321 = vmatmul.bf16.gmra.mxu0 %v1308
        %v1322 = vpop.f32.mrf.mxu0
        %v1323 = vadd.f32 0.0, %v1322
        %v1324 = vpop.f32.mrf.mxu0
        %1325 = vdwg.mxu0
        %v1326 = vpack.c.bf16 %v1323, %v1323
        %s1327 = scalar_lea.vmem %s4, 24
        %v1328 = vld [vmem:[%s1327] sm:$0xf]
        %v1329 = vld [vmem:[%s1327 + $0x4] sm:$0xf]
        %v1332 = vunpack.c.l.b16 %v1328
        %v1333 = vunpack.c.l.b16 %v1329
        %v1334 = vpack.c.b16 %v1333, %v1332
        %v1337 = vsel %vm632, %v1326, 0
        %1339 = vmatpush.bf16.msra.mxu0 0
        %1340 = vmatpush.bf16.msra.mxu0 0
        %1341 = vmatpush.bf16.msra.mxu0 0
        %1342 = vmatpush.bf16.msra.mxu0 0
        %1343 = vmatpush.bf16.msra.mxu0 0
        %1344 = vmatpush.bf16.msra.mxu0 0
        %1345 = vmatpush.bf16.msra.mxu0 0
        %1346 = vmatpush.bf16.msra.mxu0 %v1334
        %1347 = vmatmul.bf16.gmra.mxu0 %v1337
        %v1348 = vpop.f32.mrf.mxu0
        %v1349 = vadd.f32 0.0, %v1348
        %v1350 = vpop.f32.mrf.mxu0
        %1351 = vdwg.mxu0
        %v1354 = vunpack.c.l.b16 %v1169
        %v1355 = vunpack.c.l.b16 %v1170
        %v1356 = vpack.c.b16 %v1355, %v1354
        %v1359 = vsel %vm632, %v1167, 0
        %1361 = vmatpush.bf16.msra.mxu0 0
        %1362 = vmatpush.bf16.msra.mxu0 0
        %1363 = vmatpush.bf16.msra.mxu0 0
        %1364 = vmatpush.bf16.msra.mxu0 0
        %1365 = vmatpush.bf16.msra.mxu0 0
        %1366 = vmatpush.bf16.msra.mxu0 0
        %1367 = vmatpush.bf16.msra.mxu0 0
        %1368 = vmatpush.bf16.msra.mxu0 %v1356
        %1369 = vmatmul.bf16.gmra.mxu0 %v1359
        %v1370 = vpop.f32.mrf.mxu0
        %v1371 = vadd.f32 %v1349, %v1370
        %v1372 = vpop.f32.mrf.mxu0
        %1373 = vdwg.mxu0
        %v1374 = vperm.slane %v1015, 3
        %v1375 = vadd.f32 %v1371, %v1374
        %v1376 = vadd.f32 %v1013, %v1375
        %v1377 = vsel %vm479, %v1376, 0.0
        %1378 = vadd.xlane.f32.xlu0 %v1377
        %v1379 = vpop.xlane.xlu0 %1378
        %v1380 = vmul.f32 %v1379, %v505
        %v1381 = vsub.f32 %v1376, %v1380
        %v1382 = vmul.f32 %v1381, %v1381
        %v1383 = vsel %vm479, %v1382, 0.0
        %1384 = vadd.xlane.f32.xlu0 %v1383
        %v1385 = vpop.xlane.xlu0 %1384
        %v1386 = vmul.f32 %v1385, %v505
        %v1387 = vadd.f32 %v1386, 1e-05
        %v1388 = vrsqrt.pop %v1387
        %v1389 = vmul.f32 %v1388, %v1387
        %v1390 = vmul.f32 %v1389, %v1388
        %v1391 = vmul.f32 0.5, %v1390
        %v1392 = vsub.f32 1.5, %v1391
        %v1393 = vmul.f32 %v1388, %v1392
        %vm1394 = vweird.f32 %v1387
        %vm1395 = vweird.f32 %v1388
        %vm1396 = vmor %vm1394, %vm1395
        %v1397 = vsel %vm1396, %v1388, %v1393
        %v1398 = vmul.f32 %v1381, %v1397
        %v1399 = vperm.slane %v1015, 6
        %v1400 = vmul.f32 %v1399, %v1398
        %v1401 = vperm.slane %v1015, 7
        %v1402 = vadd.f32 %v1400, %v1401
        %s1403 = scalar_lea.vmem %s5, 16
        %v1404 = vld [vmem:[%s1403] sm:$0xf]
        %v1405 = vld [vmem:[%s1403 + $0x4] sm:$0xf]
        %v1406 = vld [vmem:[%s1403 + $0x8] sm:$0xf]
        %v1407 = vld [vmem:[%s1403 + $0xc] sm:$0xf]
        %v1408 = vpack.c.bf16 %v1402, %v1402
        %v1409 = vperm.slane %v1015, 4
        %v1414 = vunpack.c.l.b16 %v1404
        %v1415 = vunpack.c.l.b16 %v1405
        %v1416 = vunpack.c.l.b16 %v1406
        %v1417 = vunpack.c.l.b16 %v1407
        %v1418 = vpack.c.b16 %v1415, %v1414
        %v1419 = vpack.c.b16 %v1417, %v1416
        %v1423 = vsel %vm479, %v1408, 0
        %1425 = vmatpush.bf16.msra.mxu0 0
        %1426 = vmatpush.bf16.msra.mxu0 0
        %1427 = vmatpush.bf16.msra.mxu0 0
        %1428 = vmatpush.bf16.msra.mxu0 0
        %1429 = vmatpush.bf16.msra.mxu0 0
        %1430 = vmatpush.bf16.msra.mxu0 0
        %1431 = vmatpush.bf16.msra.mxu0 %v1419
        %1432 = vmatpush.bf16.msra.mxu0 %v1418
        %1433 = vmatmul.bf16.gmra.mxu0 %v1423
        %v1434 = vpop.f32.mrf.mxu0
        %v1435 = vadd.f32 %v1409, %v1434
        %v1436 = vpop.f32.mrf.mxu0
        %1437 = vdwg.mxu0
        %v1438 = vmax.f32 %v1435, 0.0
        %s1439 = scalar_lea.vmem %s6, 16
        %v1440 = vld [vmem:[%s1439] sm:$0xf]
        %v1441 = vld [vmem:[%s1439 + $0x4] sm:$0xf]
        %v1442 = vld [vmem:[%s1439 + $0x8] sm:$0xf]
        %v1443 = vld [vmem:[%s1439 + $0xc] sm:$0xf]
        %v1444 = vpack.c.bf16 %v1438, %v1438
        %v1445 = vperm.slane %v1015, 5
        %v1450 = vunpack.c.l.b16 %v1440
        %v1451 = vunpack.c.l.b16 %v1441
        %v1452 = vunpack.c.l.b16 %v1442
        %v1453 = vunpack.c.l.b16 %v1443
        %v1454 = vpack.c.b16 %v1451, %v1450
        %v1455 = vpack.c.b16 %v1453, %v1452
        %v1459 = vsel %vm479, %v1444, 0
        %1461 = vmatpush.bf16.msra.mxu0 0
        %1462 = vmatpush.bf16.msra.mxu0 0
        %1463 = vmatpush.bf16.msra.mxu0 0
        %1464 = vmatpush.bf16.msra.mxu0 0
        %1465 = vmatpush.bf16.msra.mxu0 0
        %1466 = vmatpush.bf16.msra.mxu0 0
        %1467 = vmatpush.bf16.msra.mxu0 %v1455
        %1468 = vmatpush.bf16.msra.mxu0 %v1454
        %1469 = vmatmul.bf16.gmra.mxu0 %v1459
        %v1470 = vpop.f32.mrf.mxu0
        %v1471 = vadd.f32 %v1445, %v1470
        %v1472 = vpop.f32.mrf.mxu0
        %1473 = vdwg.mxu0
        %v1474 = vadd.f32 %v1402, %v1471
        %v1475 = vsel %vm479, %v1474, 0.0
        %1476 = vadd.xlane.f32.xlu0 %v1475
        %v1477 = vpop.xlane.xlu0 %1476
        %v1478 = vmul.f32 %v1477, %v505
        %v1479 = vsub.f32 %v1474, %v1478
        %v1480 = vmul.f32 %v1479, %v1479
        %v1481 = vsel %vm479, %v1480, 0.0
        %1482 = vadd.xlane.f32.xlu0 %v1481
        %v1483 = vpop.xlane.xlu0 %1482
        %v1484 = vmul.f32 %v1483, %v505
        %v1485 = vadd.f32 %v1484, 1e-05
        %v1486 = vrsqrt.pop %v1485
        %v1487 = vmul.f32 %v1486, %v1485
        %v1488 = vmul.f32 %v1487, %v1486
        %v1489 = vmul.f32 0.5, %v1488
        %v1490 = vsub.f32 1.5, %v1489
        %v1491 = vmul.f32 %v1486, %v1490
        %vm1492 = vweird.f32 %v1485
        %vm1493 = vweird.f32 %v1486
        %vm1494 = vmor %vm1492, %vm1493
        %v1495 = vsel %vm1494, %v1486, %v1491
        %v1496 = vmul.f32 %v1479, %v1495
        %v1497 = vperm.slane %v1016, 0
        %v1498 = vmul.f32 %v1497, %v1496
        %v1499 = vperm.slane %v1016, 1
        %v1500 = vadd.f32 %v1498, %v1499
        %v1501 = vadd.f32 %v1500, %v530
        %v1502 = vrot.slane %v1501, 4
        %vm1503 = vcmask 1047556
        %v1504 = vsel %vm1503, 0.0, %v1502
        %v1506 = vunpack.c.l.s4 1983009808
        %v1507 = vunpack.c.0.s8 %v1506
        %v1508 = vperm.slane %v1501, %v1507
        %v1510 = vunpack.c.l.s4 1983009808
        %v1511 = vunpack.c.0.s8 %v1510
        %v1512 = vperm.slane %v1504, %v1511
        %v1513 = vrot.slane %v1508, 4
        %v1514 = vsel %vm1503, 0.0, %v1513
        %v1516 = vunpack.c.l.s4 1934713408
        %v1517 = vunpack.c.0.s8 %v1516
        %v1518 = vperm.slane %v1508, %v1517
        %v1520 = vunpack.c.l.s4 1934713408
        %v1521 = vunpack.c.0.s8 %v1520
        %v1522 = vperm.slane %v1514, %v1521
        %v1523 = vrot.slane %v1512, 4
        %v1524 = vsel %vm1503, 0.0, %v1523
        %v1526 = vunpack.c.l.s4 1934713408
        %v1527 = vunpack.c.0.s8 %v1526
        %v1528 = vperm.slane %v1512, %v1527
        %v1530 = vunpack.c.l.s4 1934713408
        %v1531 = vunpack.c.0.s8 %v1530
        %v1532 = vperm.slane %v1524, %v1531
        %v1533 = vrot.slane %v1518, 4
        %v1534 = vsel %vm1503, 0.0, %v1533
        %v1535 = vrot.slane %v1522, 4
        %v1536 = vsel %vm1503, 0.0, %v1535
        %v1537 = vrot.slane %v1528, 4
        %v1538 = vsel %vm1503, 0.0, %v1537
        %v1539 = vrot.slane %v1532, 4
        %v1540 = vsel %vm1503, 0.0, %v1539
        %v1541 = vld [vmem:[%s9] sm:$0xf]
        %v1542 = vld [vmem:[%s9 + $0x4] sm:$0xf]
        %v1543 = vld [vmem:[%s9 + $0x8] sm:$0xf]
        %v1544 = vld [vmem:[%s9 + $0xc] sm:$0xf]
        %v1545 = vpack.c.bf16 %v1518, %v1518
        %v1546 = vpack.c.bf16 %v1534, %v1534
        %v1547 = vpack.c.bf16 %v1522, %v1522
        %v1548 = vpack.c.bf16 %v1536, %v1536
        %v1549 = vpack.c.bf16 %v1528, %v1528
        %v1550 = vpack.c.bf16 %v1538, %v1538
        %v1551 = vpack.c.bf16 %v1532, %v1532
        %v1552 = vpack.c.bf16 %v1540, %v1540
        %v1553 = vld [vmem:[%s11] sm:$0x1]
        %v1555 = vperm.slane %v1553, 0
        %v1565 = vunpack.c.l.b16 %v1545
        %v1566 = vunpack.c.l.b16 %v1546
        %v1567 = vunpack.c.l.b16 %v1547
        %v1568 = vunpack.c.l.b16 %v1548
        %v1569 = vunpack.c.l.b16 %v1549
        %v1570 = vunpack.c.l.b16 %v1550
        %v1571 = vunpack.c.l.b16 %v1551
        %v1572 = vunpack.c.l.b16 %v1552
        %v1573 = vrot.slane %v1566, 7
        %vm1574 = vcmask 1041409
        %v1575 = vsel %vm1574, %v1573, %v1565
        %v1576 = vrot.slane %v1567, 6
        %vm1577 = vcmask 1042434
        %v1578 = vsel %vm1577, %v1576, %v1575
        %v1579 = vrot.slane %v1568, 5
        %vm1580 = vcmask 1043459
        %v1581 = vsel %vm1580, %v1579, %v1578
        %v1582 = vrot.slane %v1569, 4
        %vm1583 = vcmask 1044484
        %v1584 = vsel %vm1583, %v1582, %v1581
        %v1585 = vrot.slane %v1570, 3
        %vm1586 = vcmask 1045509
        %v1587 = vsel %vm1586, %v1585, %v1584
        %v1588 = vrot.slane %v1571, 2
        %vm1589 = vcmask 1046534
        %v1590 = vsel %vm1589, %v1588, %v1587
        %v1591 = vrot.slane %v1572, 1
        %vm1592 = vcmask 1047559
        %v1593 = vsel %vm1592, %v1591, %v1590
        %v1594 = vpack.c.b16 %v1593, %v1593
        %v1599 = vunpack.c.l.b16 %v1541
        %v1600 = vunpack.c.l.b16 %v1542
        %v1601 = vunpack.c.l.b16 %v1543
        %v1602 = vunpack.c.l.b16 %v1544
        %v1603 = vpack.c.b16 %v1600, %v1599
        %v1604 = vpack.c.b16 %v1602, %v1601
        %v1608 = vsel %vm479, %v1594, 0
        %1610 = vmatpush.bf16.msra.mxu0 0
        %1611 = vmatpush.bf16.msra.mxu0 0
        %1612 = vmatpush.bf16.msra.mxu0 0
        %1613 = vmatpush.bf16.msra.mxu0 0
        %1614 = vmatpush.bf16.msra.mxu0 0
        %1615 = vmatpush.bf16.msra.mxu0 0
        %1616 = vmatpush.bf16.msra.mxu0 %v1604
        %1617 = vmatpush.bf16.msra.mxu0 %v1603
        %1618 = vmatmul.bf16.gmra.mxu0 %v1608
        %v1619 = vpop.f32.mrf.mxu0
        %v1620 = vadd.f32 %v1555, %v1619
        %v1621 = vpop.f32.mrf.mxu0
        %1622 = vdwg.mxu0
        %v1623 = vld [vmem:[%s10] sm:$0xf]
        %v1624 = vld [vmem:[%s10 + $0x4] sm:$0xf]
        %v1625 = vld [vmem:[%s10 + $0x8] sm:$0xf]
        %v1626 = vld [vmem:[%s10 + $0xc] sm:$0xf]
        %v1631 = vunpack.c.l.b16 %v1623
        %v1632 = vunpack.c.l.b16 %v1624
        %v1633 = vunpack.c.l.b16 %v1625
        %v1634 = vunpack.c.l.b16 %v1626
        %v1635 = vpack.c.b16 %v1632, %v1631
        %v1636 = vpack.c.b16 %v1634, %v1633
        %v1640 = vsel %vm479, 0, 0
        %1642 = vmatpush.bf16.msra.mxu0 0
        %1643 = vmatpush.bf16.msra.mxu0 0
        %1644 = vmatpush.bf16.msra.mxu0 0
        %1645 = vmatpush.bf16.msra.mxu0 0
        %1646 = vmatpush.bf16.msra.mxu0 0
        %1647 = vmatpush.bf16.msra.mxu0 0
        %1648 = vmatpush.bf16.msra.mxu0 %v1636
        %1649 = vmatpush.bf16.msra.mxu0 %v1635
        %1650 = vmatmul.bf16.gmra.mxu0 %v1640
        %v1651 = vpop.f32.mrf.mxu0
        %v1652 = vadd.f32 0.0, %v1651
        %v1653 = vpop.f32.mrf.mxu0
        %1654 = vdwg.mxu0
        %v1655 = vadd.f32 %v1620, %v1652
        %v1656 = vxor.u32 %v1655, 2147483648
        %v1657 = vmul.f32 %v1656, 1.442695
        %v1658 = vpow.pop %v1657
        %v1659 = vadd.f32 %v1658, 1.0
        %v1660 = vrcp.pop %v1659
        %v1661 = vmul.f32 %v1659, %v1660
        %v1662 = vsub.f32 1.0, %v1661
        %v1663 = vmul.f32 %v1660, %v1662
        %v1664 = vadd.f32 %v1660, %v1663
        %vm1665 = vweird.f32 %v1659
        %vm1666 = vweird.f32 %v1660
        %vm1667 = vmor %vm1665, %vm1666
        %v1668 = vsel %vm1667, %v1660, %v1664
        %v1669 = vand.u32 2147483647, %v1659
        %vm1670 = vcmp.eq.f32.partialorder %v1669, 8.507059e+37
        %v1671 = vand.u32 %v1659, 2147483648
        %v1672 = vor.u32 1.1754944e-38, %v1671
        %v1673 = vsel %vm1670, %v1672, %v1668
        %v1674 = vmul.f32 1.0, %v1673
        %v1675 = vtanh.pop %v1655
        %v1676 = vmul.f32 %v1674, 0.0
        %1678 = vrot.lane.b32.xlu0 %v1675, 32
        %v1679 = vpop.permute.xlu0 %1678
        %v1681 = vmul.f32 %v1674, %v1679
        %1683 = vrot.lane.b32.xlu0 %v1681, 32
        %v1684 = vpop.permute.xlu0 %1683
        %v1686 = vadd.f32 %v1676, %v1684
        %v1687 = vtanh.pop %v1686
        %1689 = vrot.lane.b32.xlu0 %v1687, 32
        %v1690 = vpop.permute.xlu0 %1689
        %v1692 = vmul.f32 %v1674, %v1690
        %v1693 = vpack.c.bf16 %v1692, %v1692
        %1695 = vrot.lane.b32.xlu0 %v1693, 64
        %v1696 = vpop.permute.xlu0 %1695
        %v1698 = vsel %vm479, %v1696, 0
        %1700 = vmatpush.bf16.msra.mxu0 0
        %1701 = vmatpush.bf16.msra.mxu0 0
        %1702 = vmatpush.bf16.msra.mxu0 0
        %1703 = vmatpush.bf16.msra.mxu0 0
        %1704 = vmatpush.bf16.msra.mxu0 0
        %1705 = vmatpush.bf16.msra.mxu0 0
        %1706 = vmatpush.bf16.msra.mxu0 %v1636
        %1707 = vmatpush.bf16.msra.mxu0 %v1635
        %1708 = vmatmul.bf16.gmra.mxu0 %v1698
        %v1709 = vpop.f32.mrf.mxu0
        %v1710 = vadd.f32 0.0, %v1709
        %v1711 = vpop.f32.mrf.mxu0
        %1712 = vdwg.mxu0
        %v1714 = vrot.slane %v1710, 7
        %v1716 = vadd.f32 %v1620, %v1714
        %v1717 = vxor.u32 %v1716, 2147483648
        %v1718 = vmul.f32 %v1717, 1.442695
        %v1719 = vpow.pop %v1718
        %v1720 = vadd.f32 %v1719, 1.0
        %v1721 = vrcp.pop %v1720
        %v1722 = vmul.f32 %v1720, %v1721
        %v1723 = vsub.f32 1.0, %v1722
        %v1724 = vmul.f32 %v1721, %v1723
        %v1725 = vadd.f32 %v1721, %v1724
        %vm1726 = vweird.f32 %v1720
        %vm1727 = vweird.f32 %v1721
        %vm1728 = vmor %vm1726, %vm1727
        %v1729 = vsel %vm1728, %v1721, %v1725
        %v1730 = vand.u32 2147483647, %v1720
        %vm1731 = vcmp.eq.f32.partialorder %v1730, 8.507059e+37
        %v1732 = vand.u32 %v1720, 2147483648
        %v1733 = vor.u32 1.1754944e-38, %v1732
        %v1734 = vsel %vm1731, %v1733, %v1729
        %v1735 = vmul.f32 1.0, %v1734
        %v1736 = vtanh.pop %v1716
        %v1738 = vrot.slane %v1686, 7
        %v1740 = vmul.f32 %v1735, %v1738
        %1742 = vrot.lane.b32.xlu0 %v1736, 32
        %v1743 = vpop.permute.xlu0 %1742
        %v1745 = vmul.f32 %v1735, %v1743
        %1747 = vrot.lane.b32.xlu0 %v1745, 32
        %v1748 = vpop.permute.xlu0 %1747
        %v1750 = vadd.f32 %v1740, %v1748
        %v1751 = vtanh.pop %v1750
        %1753 = vrot.lane.b32.xlu0 %v1751, 32
        %v1754 = vpop.permute.xlu0 %1753
        %v1756 = vmul.f32 %v1735, %v1754
        %v1757 = vpack.c.bf16 %v1756, %v1756
        %v1759 = vshrl.u32 %v1757, 16
        %1761 = vrot.lane.b32.xlu0 %v1759, 64
        %v1762 = vpop.permute.xlu0 %1761
        %v1764 = vsel %vm479, %v1762, 0
        %1766 = vmatpush.bf16.msra.mxu0 0
        %1767 = vmatpush.bf16.msra.mxu0 0
        %1768 = vmatpush.bf16.msra.mxu0 0
        %1769 = vmatpush.bf16.msra.mxu0 0
        %1770 = vmatpush.bf16.msra.mxu0 0
        %1771 = vmatpush.bf16.msra.mxu0 0
        %1772 = vmatpush.bf16.msra.mxu0 %v1636
        %1773 = vmatpush.bf16.msra.mxu0 %v1635
        %1774 = vmatmul.bf16.gmra.mxu0 %v1764
        %v1775 = vpop.f32.mrf.mxu0
        %v1776 = vadd.f32 0.0, %v1775
        %v1777 = vpop.f32.mrf.mxu0
        %1778 = vdwg.mxu0
        %v1780 = vrot.slane %v1776, 6
        %v1782 = vadd.f32 %v1620, %v1780
        %v1783 = vxor.u32 %v1782, 2147483648
        %v1784 = vmul.f32 %v1783, 1.442695
        %v1785 = vpow.pop %v1784
        %v1786 = vadd.f32 %v1785, 1.0
        %v1787 = vrcp.pop %v1786
        %v1788 = vmul.f32 %v1786, %v1787
        %v1789 = vsub.f32 1.0, %v1788
        %v1790 = vmul.f32 %v1787, %v1789
        %v1791 = vadd.f32 %v1787, %v1790
        %vm1792 = vweird.f32 %v1786
        %vm1793 = vweird.f32 %v1787
        %vm1794 = vmor %vm1792, %vm1793
        %v1795 = vsel %vm1794, %v1787, %v1791
        %v1796 = vand.u32 2147483647, %v1786
        %vm1797 = vcmp.eq.f32.partialorder %v1796, 8.507059e+37
        %v1798 = vand.u32 %v1786, 2147483648
        %v1799 = vor.u32 1.1754944e-38, %v1798
        %v1800 = vsel %vm1797, %v1799, %v1795
        %v1801 = vmul.f32 1.0, %v1800
        %v1802 = vtanh.pop %v1782
        %v1804 = vrot.slane %v1750, 7
        %v1806 = vmul.f32 %v1801, %v1804
        %1808 = vrot.lane.b32.xlu0 %v1802, 32
        %v1809 = vpop.permute.xlu0 %1808
        %v1811 = vmul.f32 %v1801, %v1809
        %1813 = vrot.lane.b32.xlu0 %v1811, 32
        %v1814 = vpop.permute.xlu0 %1813
        %v1816 = vadd.f32 %v1806, %v1814
        %v1817 = vtanh.pop %v1816
        %1819 = vrot.lane.b32.xlu0 %v1817, 32
        %v1820 = vpop.permute.xlu0 %1819
        %v1822 = vmul.f32 %v1801, %v1820
        %v1823 = vpack.c.bf16 %v1822, %v1822
        %v1825 = vrot.slane %v1823, 1
        %1826 = vrot.lane.b32.xlu0 %v1825, 64
        %v1827 = vpop.permute.xlu0 %1826
        %v1829 = vsel %vm479, %v1827, 0
        %1831 = vmatpush.bf16.msra.mxu0 0
        %1832 = vmatpush.bf16.msra.mxu0 0
        %1833 = vmatpush.bf16.msra.mxu0 0
        %1834 = vmatpush.bf16.msra.mxu0 0
        %1835 = vmatpush.bf16.msra.mxu0 0
        %1836 = vmatpush.bf16.msra.mxu0 0
        %1837 = vmatpush.bf16.msra.mxu0 %v1636
        %1838 = vmatpush.bf16.msra.mxu0 %v1635
        %1839 = vmatmul.bf16.gmra.mxu0 %v1829
        %v1840 = vpop.f32.mrf.mxu0
        %v1841 = vadd.f32 0.0, %v1840
        %v1842 = vpop.f32.mrf.mxu0
        %1843 = vdwg.mxu0
        %v1845 = vrot.slane %v1841, 5
        %v1847 = vadd.f32 %v1620, %v1845
        %v1848 = vxor.u32 %v1847, 2147483648
        %v1849 = vmul.f32 %v1848, 1.442695
        %v1850 = vpow.pop %v1849
        %v1851 = vadd.f32 %v1850, 1.0
        %v1852 = vrcp.pop %v1851
        %v1853 = vmul.f32 %v1851, %v1852
        %v1854 = vsub.f32 1.0, %v1853
        %v1855 = vmul.f32 %v1852, %v1854
        %v1856 = vadd.f32 %v1852, %v1855
        %vm1857 = vweird.f32 %v1851
        %vm1858 = vweird.f32 %v1852
        %vm1859 = vmor %vm1857, %vm1858
        %v1860 = vsel %vm1859, %v1852, %v1856
        %v1861 = vand.u32 2147483647, %v1851
        %vm1862 = vcmp.eq.f32.partialorder %v1861, 8.507059e+37
        %v1863 = vand.u32 %v1851, 2147483648
        %v1864 = vor.u32 1.1754944e-38, %v1863
        %v1865 = vsel %vm1862, %v1864, %v1860
        %v1866 = vmul.f32 1.0, %v1865
        %v1867 = vtanh.pop %v1847
        %v1869 = vrot.slane %v1816, 7
        %v1871 = vmul.f32 %v1866, %v1869
        %1873 = vrot.lane.b32.xlu0 %v1867, 32
        %v1874 = vpop.permute.xlu0 %1873
        %v1876 = vmul.f32 %v1866, %v1874
        %1878 = vrot.lane.b32.xlu0 %v1876, 32
        %v1879 = vpop.permute.xlu0 %1878
        %v1881 = vadd.f32 %v1871, %v1879
        %v1882 = vtanh.pop %v1881
        %1884 = vrot.lane.b32.xlu0 %v1882, 32
        %v1885 = vpop.permute.xlu0 %1884
        %v1887 = vmul.f32 %v1866, %v1885
        %v1888 = vpack.c.bf16 %v1887, %v1887
        %v1890 = vshrl.u32 %v1888, 16
        %v1892 = vrot.slane %v1890, 1
        %1893 = vrot.lane.b32.xlu0 %v1892, 64
        %v1894 = vpop.permute.xlu0 %1893
        %v1896 = vsel %vm479, %v1894, 0
        %1898 = vmatpush.bf16.msra.mxu0 0
        %1899 = vmatpush.bf16.msra.mxu0 0
        %1900 = vmatpush.bf16.msra.mxu0 0
        %1901 = vmatpush.bf16.msra.mxu0 0
        %1902 = vmatpush.bf16.msra.mxu0 0
        %1903 = vmatpush.bf16.msra.mxu0 0
        %1904 = vmatpush.bf16.msra.mxu0 %v1636
        %1905 = vmatpush.bf16.msra.mxu0 %v1635
        %1906 = vmatmul.bf16.gmra.mxu0 %v1896
        %v1907 = vpop.f32.mrf.mxu0
        %v1908 = vadd.f32 0.0, %v1907
        %v1909 = vpop.f32.mrf.mxu0
        %1910 = vdwg.mxu0
        %v1912 = vrot.slane %v1908, 4
        %v1914 = vadd.f32 %v1620, %v1912
        %v1915 = vxor.u32 %v1914, 2147483648
        %v1916 = vmul.f32 %v1915, 1.442695
        %v1917 = vpow.pop %v1916
        %v1918 = vadd.f32 %v1917, 1.0
        %v1919 = vrcp.pop %v1918
        %v1920 = vmul.f32 %v1918, %v1919
        %v1921 = vsub.f32 1.0, %v1920
        %v1922 = vmul.f32 %v1919, %v1921
        %v1923 = vadd.f32 %v1919, %v1922
        %vm1924 = vweird.f32 %v1918
        %vm1925 = vweird.f32 %v1919
        %vm1926 = vmor %vm1924, %vm1925
        %v1927 = vsel %vm1926, %v1919, %v1923
        %v1928 = vand.u32 2147483647, %v1918
        %vm1929 = vcmp.eq.f32.partialorder %v1928, 8.507059e+37
        %v1930 = vand.u32 %v1918, 2147483648
        %v1931 = vor.u32 1.1754944e-38, %v1930
        %v1932 = vsel %vm1929, %v1931, %v1927
        %v1933 = vmul.f32 1.0, %v1932
        %v1934 = vtanh.pop %v1914
        %v1936 = vrot.slane %v1881, 7
        %v1938 = vmul.f32 %v1933, %v1936
        %1940 = vrot.lane.b32.xlu0 %v1934, 32
        %v1941 = vpop.permute.xlu0 %1940
        %v1943 = vmul.f32 %v1933, %v1941
        %1945 = vrot.lane.b32.xlu0 %v1943, 32
        %v1946 = vpop.permute.xlu0 %1945
        %v1948 = vadd.f32 %v1938, %v1946
        %v1949 = vtanh.pop %v1948
        %1951 = vrot.lane.b32.xlu0 %v1949, 32
        %v1952 = vpop.permute.xlu0 %1951
        %v1954 = vmul.f32 %v1933, %v1952
        %v1955 = vpack.c.bf16 %v1954, %v1954
        %v1957 = vrot.slane %v1955, 2
        %1958 = vrot.lane.b32.xlu0 %v1957, 64
        %v1959 = vpop.permute.xlu0 %1958
        %v1961 = vsel %vm479, %v1959, 0
        %1963 = vmatpush.bf16.msra.mxu0 0
        %1964 = vmatpush.bf16.msra.mxu0 0
        %1965 = vmatpush.bf16.msra.mxu0 0
        %1966 = vmatpush.bf16.msra.mxu0 0
        %1967 = vmatpush.bf16.msra.mxu0 0
        %1968 = vmatpush.bf16.msra.mxu0 0
        %1969 = vmatpush.bf16.msra.mxu0 %v1636
        %1970 = vmatpush.bf16.msra.mxu0 %v1635
        %1971 = vmatmul.bf16.gmra.mxu0 %v1961
        %v1972 = vpop.f32.mrf.mxu0
        %v1973 = vadd.f32 0.0, %v1972
        %v1974 = vpop.f32.mrf.mxu0
        %1975 = vdwg.mxu0
        %v1977 = vrot.slane %v1973, 3
        %v1979 = vadd.f32 %v1620, %v1977
        %v1980 = vxor.u32 %v1979, 2147483648
        %v1981 = vmul.f32 %v1980, 1.442695
        %v1982 = vpow.pop %v1981
        %v1983 = vadd.f32 %v1982, 1.0
        %v1984 = vrcp.pop %v1983
        %v1985 = vmul.f32 %v1983, %v1984
        %v1986 = vsub.f32 1.0, %v1985
        %v1987 = vmul.f32 %v1984, %v1986
        %v1988 = vadd.f32 %v1984, %v1987
        %vm1989 = vweird.f32 %v1983
        %vm1990 = vweird.f32 %v1984
        %vm1991 = vmor %vm1989, %vm1990
        %v1992 = vsel %vm1991, %v1984, %v1988
        %v1993 = vand.u32 2147483647, %v1983
        %vm1994 = vcmp.eq.f32.partialorder %v1993, 8.507059e+37
        %v1995 = vand.u32 %v1983, 2147483648
        %v1996 = vor.u32 1.1754944e-38, %v1995
        %v1997 = vsel %vm1994, %v1996, %v1992
        %v1998 = vmul.f32 1.0, %v1997
        %v1999 = vtanh.pop %v1979
        %v2001 = vrot.slane %v1948, 7
        %v2003 = vmul.f32 %v1998, %v2001
        %2005 = vrot.lane.b32.xlu0 %v1999, 32
        %v2006 = vpop.permute.xlu0 %2005
        %v2008 = vmul.f32 %v1998, %v2006
        %2010 = vrot.lane.b32.xlu0 %v2008, 32
        %v2011 = vpop.permute.xlu0 %2010
        %v2013 = vadd.f32 %v2003, %v2011
        %v2014 = vtanh.pop %v2013
        %2016 = vrot.lane.b32.xlu0 %v2014, 32
        %v2017 = vpop.permute.xlu0 %2016
        %v2019 = vmul.f32 %v1998, %v2017
        %v2020 = vpack.c.bf16 %v2019, %v2019
        %v2022 = vshrl.u32 %v2020, 16
        %v2024 = vrot.slane %v2022, 2
        %2025 = vrot.lane.b32.xlu0 %v2024, 64
        %v2026 = vpop.permute.xlu0 %2025
        %v2028 = vsel %vm479, %v2026, 0
        %2030 = vmatpush.bf16.msra.mxu0 0
        %2031 = vmatpush.bf16.msra.mxu0 0
        %2032 = vmatpush.bf16.msra.mxu0 0
        %2033 = vmatpush.bf16.msra.mxu0 0
        %2034 = vmatpush.bf16.msra.mxu0 0
        %2035 = vmatpush.bf16.msra.mxu0 0
        %2036 = vmatpush.bf16.msra.mxu0 %v1636
        %2037 = vmatpush.bf16.msra.mxu0 %v1635
        %2038 = vmatmul.bf16.gmra.mxu0 %v2028
        %v2039 = vpop.f32.mrf.mxu0
        %v2040 = vadd.f32 0.0, %v2039
        %v2041 = vpop.f32.mrf.mxu0
        %2042 = vdwg.mxu0
        %v2044 = vrot.slane %v2040, 2
        %v2046 = vadd.f32 %v1620, %v2044
        %v2047 = vxor.u32 %v2046, 2147483648
        %v2048 = vmul.f32 %v2047, 1.442695
        %v2049 = vpow.pop %v2048
        %v2050 = vadd.f32 %v2049, 1.0
        %v2051 = vrcp.pop %v2050
        %v2052 = vmul.f32 %v2050, %v2051
        %v2053 = vsub.f32 1.0, %v2052
        %v2054 = vmul.f32 %v2051, %v2053
        %v2055 = vadd.f32 %v2051, %v2054
        %vm2056 = vweird.f32 %v2050
        %vm2057 = vweird.f32 %v2051
        %vm2058 = vmor %vm2056, %vm2057
        %v2059 = vsel %vm2058, %v2051, %v2055
        %v2060 = vand.u32 2147483647, %v2050
        %vm2061 = vcmp.eq.f32.partialorder %v2060, 8.507059e+37
        %v2062 = vand.u32 %v2050, 2147483648
        %v2063 = vor.u32 1.1754944e-38, %v2062
        %v2064 = vsel %vm2061, %v2063, %v2059
        %v2065 = vmul.f32 1.0, %v2064
        %v2066 = vtanh.pop %v2046
        %v2068 = vrot.slane %v2013, 7
        %v2070 = vmul.f32 %v2065, %v2068
        %2072 = vrot.lane.b32.xlu0 %v2066, 32
        %v2073 = vpop.permute.xlu0 %2072
        %v2075 = vmul.f32 %v2065, %v2073
        %2077 = vrot.lane.b32.xlu0 %v2075, 32
        %v2078 = vpop.permute.xlu0 %2077
        %v2080 = vadd.f32 %v2070, %v2078
        %v2081 = vtanh.pop %v2080
        %2083 = vrot.lane.b32.xlu0 %v2081, 32
        %v2084 = vpop.permute.xlu0 %2083
        %v2086 = vmul.f32 %v2065, %v2084
        %v2087 = vpack.c.bf16 %v2086, %v2086
        %v2089 = vrot.slane %v2087, 3
        %2090 = vrot.lane.b32.xlu0 %v2089, 64
        %v2091 = vpop.permute.xlu0 %2090
        %v2093 = vsel %vm479, %v2091, 0
        %2095 = vmatpush.bf16.msra.mxu0 0
        %2096 = vmatpush.bf16.msra.mxu0 0
        %2097 = vmatpush.bf16.msra.mxu0 0
        %2098 = vmatpush.bf16.msra.mxu0 0
        %2099 = vmatpush.bf16.msra.mxu0 0
        %2100 = vmatpush.bf16.msra.mxu0 0
        %2101 = vmatpush.bf16.msra.mxu0 %v1636
        %2102 = vmatpush.bf16.msra.mxu0 %v1635
        %2103 = vmatmul.bf16.gmra.mxu0 %v2093
        %v2104 = vpop.f32.mrf.mxu0
        %v2105 = vadd.f32 0.0, %v2104
        %v2106 = vpop.f32.mrf.mxu0
        %2107 = vdwg.mxu0
        %v2109 = vrot.slane %v2105, 1
        %v2111 = vadd.f32 %v1620, %v2109
        %v2112 = vxor.u32 %v2111, 2147483648
        %v2113 = vmul.f32 %v2112, 1.442695
        %v2114 = vpow.pop %v2113
        %v2115 = vadd.f32 %v2114, 1.0
        %v2116 = vrcp.pop %v2115
        %v2117 = vmul.f32 %v2115, %v2116
        %v2118 = vsub.f32 1.0, %v2117
        %v2119 = vmul.f32 %v2116, %v2118
        %v2120 = vadd.f32 %v2116, %v2119
        %vm2121 = vweird.f32 %v2115
        %vm2122 = vweird.f32 %v2116
        %vm2123 = vmor %vm2121, %vm2122
        %v2124 = vsel %vm2123, %v2116, %v2120
        %v2125 = vand.u32 2147483647, %v2115
        %vm2126 = vcmp.eq.f32.partialorder %v2125, 8.507059e+37
        %v2127 = vand.u32 %v2115, 2147483648
        %v2128 = vor.u32 1.1754944e-38, %v2127
        %v2129 = vsel %vm2126, %v2128, %v2124
        %v2130 = vmul.f32 1.0, %v2129
        %v2131 = vtanh.pop %v2111
        %v2133 = vrot.slane %v2080, 7
        %v2135 = vmul.f32 %v2130, %v2133
        %2137 = vrot.lane.b32.xlu0 %v2131, 32
        %v2138 = vpop.permute.xlu0 %2137
        %v2140 = vmul.f32 %v2130, %v2138
        %2142 = vrot.lane.b32.xlu0 %v2140, 32
        %v2143 = vpop.permute.xlu0 %2142
        %v2145 = vadd.f32 %v2135, %v2143
        %v2146 = vtanh.pop %v2145
        %2148 = vrot.lane.b32.xlu0 %v2146, 32
        %v2149 = vpop.permute.xlu0 %2148
        %v2151 = vmul.f32 %v2130, %v2149
        %v2152 = vld [vmem:[%s12] sm:$0xf]
        %v2153 = vld [vmem:[%s12 + $0x4] sm:$0xf]
        %v2154 = vld [vmem:[%s12 + $0x8] sm:$0xf]
        %v2155 = vld [vmem:[%s12 + $0xc] sm:$0xf]
        %v2156 = vpack.c.bf16 %v2151, %v2151
        %v2158 = vshrl.u32 %v2156, 16
        %v2160 = vrot.slane %v2158, 3
        %2161 = vrot.lane.b32.xlu0 %v2160, 64
        %v2162 = vpop.permute.xlu0 %2161
        %v2167 = vunpack.c.l.b16 %v2152
        %v2168 = vunpack.c.l.b16 %v2153
        %v2169 = vunpack.c.l.b16 %v2154
        %v2170 = vunpack.c.l.b16 %v2155
        %v2171 = vpack.c.b16 %v2168, %v2167
        %v2172 = vpack.c.b16 %v2170, %v2169
        %v2176 = vrot.slane %v436, 4
        %v2179 = vsel %vm479, %v2162, 0
        %2181 = vmatpush.bf16.msra.mxu0 0
        %2182 = vmatpush.bf16.msra.mxu0 0
        %2183 = vmatpush.bf16.msra.mxu0 0
        %2184 = vmatpush.bf16.msra.mxu0 0
        %2185 = vmatpush.bf16.msra.mxu0 0
        %2186 = vmatpush.bf16.msra.mxu0 0
        %2187 = vmatpush.bf16.msra.mxu0 %v2172
        %2188 = vmatpush.bf16.msra.mxu0 %v2171
        %2189 = vmatmul.bf16.gmra.mxu0 %v2179
        %v2190 = vpop.f32.mrf.mxu0
        %v2191 = vadd.f32 %v2176, %v2190
        %v2192 = vpop.f32.mrf.mxu0
        %2193 = vdwg.mxu0
        %vm2194 = vcmask 253952
        %v2195 = vsel %vm2194, %v2191, 0.0
        %2196 = vadd.xlane.f32.xlu0 %v2195
        %v2197 = vpop.xlane.xlu0 %2196
        %v2198 = vmul.f32 %v2197, %v505
        %v2199 = vsub.f32 %v2191, %v2198
        %v2200 = vmul.f32 %v2199, %v2199
        %v2201 = vsel %vm2194, %v2200, 0.0
        %2202 = vadd.xlane.f32.xlu0 %v2201
        %v2203 = vpop.xlane.xlu0 %2202
        %v2204 = vmul.f32 %v2203, %v505
        %v2205 = vadd.f32 %v2204, 1e-05
        %v2206 = vrsqrt.pop %v2205
        %v2207 = vmul.f32 %v2206, %v2205
        %v2208 = vmul.f32 %v2207, %v2206
        %v2209 = vmul.f32 0.5, %v2208
        %v2210 = vsub.f32 1.5, %v2209
        %v2211 = vmul.f32 %v2206, %v2210
        %vm2212 = vweird.f32 %v2205
        %vm2213 = vweird.f32 %v2206
        %vm2214 = vmor %vm2212, %vm2213
        %v2215 = vsel %vm2214, %v2206, %v2211
        %v2216 = vmul.f32 %v2199, %v2215
        %v2218 = vrot.slane %v2216, 3
        %v2220 = vmul.f32 %v436, %v2218
        %v2221 = vrot.slane %v436, 1
        %v2223 = vadd.f32 %v2220, %v2221
        %v2224 = vmax.f32 %v2223, 0.0
        %v2226 = vrot.slane %v2151, 2
        %2227 = vrot.lane.b32.xlu0 %v2226, 64
        %v2228 = vpop.permute.xlu0 %2227
        %v2230 = vadd.f32 %v2224, %v2228
        %2231 = vrot.lane.b32.xlu0 %v2226, 96
        %v2232 = vpop.permute.xlu0 %2231
        %v2235 = vrot.slane %v2145, 2
        %2236 = vrot.lane.b32.xlu0 %v2235, 32
        %v2237 = vpop.permute.xlu0 %2236
        %v2239 = vsel %vm479, %v2230, %v2232
        %vm2240 = vcmask 523264
        %v2241 = vsel %vm2240, %v2239, %v2237
        %vm2242 = vcmask 785408
        %v2243 = vsel %vm2242, %v2241, 0.0
        %2244 = vst [vmem:[%s430 - $0x5] sm:$0x20] %v2243
        %s2245 = sand.u32 %s313, 1
        %s2246 = scalar_lea.sflag [#allocation3], %s2245
        %s2247 = sand.u32 %s313, 1
        %s2248 = scalar_lea.vmem [#allocation2], %s2247
        // Predicated region
        $region73: #{tpu_custom_call.1} parent=71 // pred_check
          %p2249 = pneg %p323
        $region74: #{tpu_custom_call.1} parent=71 // pred_check_branch
          %2251 = sbr.rel (%p2249) target = $region76
        $region75: #{tpu_custom_call.1} parent=71 // pred_region
          %2253 = vsyncadd %s2246, 0
          %s2254 = scalar_lea.hbm %s13, %s27
          %s2256 = sshll.u32 %s2248, 4
          %s2257 = int_to_ptr.vmem [resolvable:$true] %s2256
          %s2258 = sshll.u32 %s2254, 4
          %s2259 = int_to_ptr.hbm [resolvable:$true] %s2258
          %2261 = dma.vmem_to_hbm [thread:$0]  %s2257, 16, %s2259, %s2246
        $region76: #{tpu_custom_call.1} parent=71 // pred_fallthru
          _
      $region72: #{tpu_custom_call.1} parent=5 // pred_fallthru
        _
      %p2262 = scmp.le.s32.totalorder 2, %s22
      // Predicated region
      $region77: #{tpu_custom_call.1} parent=5 // pred_check
        %p2263 = pneg %p2262
      $region78: #{tpu_custom_call.1} parent=5 // pred_check_branch
        %2265 = sbr.rel (%p2263) target = $region80
      $region79: #{tpu_custom_call.1} parent=5 // pred_region
        %s2266 = ssub.s32 %s22, 2
        // Predicated region
        $region81: #{tpu_custom_call.1} parent=79 // pred_check
          %p2267 = pneg %p329
        $region82: #{tpu_custom_call.1} parent=79 // pred_check_branch
          %2269 = sbr.rel (%p2267) target = $region84
        $region83: #{tpu_custom_call.1} parent=79 // pred_region
          %s2270 = sand.u32 %s314, 1
          %s2271 = scalar_lea.sflag [#allocation3], %s2270
          %s2272 = sand.u32 %s314, 1
          %s2273 = scalar_lea.vmem [#allocation2], %s2272
          %2275 = dma.done %s2271, 16
        $region84: #{tpu_custom_call.1} parent=79 // pred_fallthru
          _
      $region80: #{tpu_custom_call.1} parent=5 // pred_fallthru
        _
    $region6: #{tpu_custom_call.1} parent=1 // loop_footer
      %s26 = sadd.s32 1, %s22
    $region7: #{tpu_custom_call.1} parent=1 // loop_footer_branch
      %21 = sbr.rel target = $region3
    $region8: #{tpu_custom_call.1} parent=1 // loop_exit
      _
    %2276 = vsyncpa [#allocation3], 1
    %s2277 = scalar_lea.sflag [#allocation3], 1
    %2278 = vsyncpa %s2277, 1

</llo_original>
